<compile_context>
chip_gen: v5e
topology: v5e:2x2
jax: 0.10.0
libtpu: 0.0.40
codegen_flags: <defaults>
</compile_context>

<pallas_src>
import functools

import jax
import jax.numpy as jnp
import numpy as np
from jax import lax
from jax.experimental import pallas as pl
from jax.experimental.pallas import tpu as pltpu

BN_EPS = 1e-5


# --------------------------------------------------------------------------
# Shared: im2col over a zero-haloed (TH+2, W+2, C) scratch, dy-split matmul
# --------------------------------------------------------------------------
def _conv3x3_from_padded(pad_ref, w_ref, patch_ref, TH, W, Cin):
    """3 accumulating MXU matmuls (K = 3*Cin) reusing one (TH*W, 3*Cin) patch.

    pad_ref : (TH+2, W+2, Cin)  zero-haloed row tile
    w_ref   : (3, 3*Cin, Cout)  weights, taps folded into K, split by dy
    Returns the f32 (TH*W, Cout) conv accumulator.
    """
    acc = None
    for dy in range(3):
        for dx in range(3):
            tap = pad_ref[dy:dy + TH, dx:dx + W, :]
            patch_ref[:, dx * Cin:(dx + 1) * Cin] = tap.reshape(TH * W, Cin)
        part = jnp.dot(patch_ref[...], w_ref[dy],
                       preferred_element_type=jnp.float32)
        acc = part if acc is None else acc + part
    return acc


# --------------------------------------------------------------------------
# Kernel 1: conv1 (halo built in-kernel) + partial BN stats (sum, sumsq)
# --------------------------------------------------------------------------
def conv1_stats_kernel(x_ref, w_ref, y_ref, stats_ref, xp_ref, patch_ref):
    # x_ref    : (1, H, W, Cin)    full unpadded image (resident across h)
    # w_ref    : (3, 3*Cin, Cout)
    # y_ref    : (1, TH, W, Cout)  conv output row tile
    # stats_ref: (1, 1, 2, Cout) f32
    # xp_ref   : (TH+2, W+2, Cin)  VMEM scratch, zero halo + interior
    # patch_ref: (TH*W, 3*Cin)     VMEM scratch (im2col, one dy at a time)
    TH, W, Cout = y_ref.shape[1], y_ref.shape[2], y_ref.shape[3]
    Cin = x_ref.shape[3]
    h = pl.program_id(1)
    nH = pl.num_programs(1)
    row0 = h * TH

    # Left/right halo columns (incl. corners): thin zero stores every step.
    xp_ref[:, 0:1, :] = jnp.zeros((TH + 2, 1, Cin), xp_ref.dtype)
    xp_ref[:, W + 1:W + 2, :] = jnp.zeros((TH + 2, 1, Cin), xp_ref.dtype)
    # Interior rows: one dense store from the resident full-H block.
    xp_ref[1:TH + 1, 1:W + 1, :] = x_ref[0, pl.ds(row0, TH), :, :]

    # Top / bottom halo rows: neighbour row inside the image, zeros at edges.
    @pl.when(h == 0)
    def _():
        xp_ref[0:1, 1:W + 1, :] = jnp.zeros((1, W, Cin), xp_ref.dtype)

    @pl.when(h > 0)
    def _():
        xp_ref[0:1, 1:W + 1, :] = x_ref[0, pl.ds(row0 - 1, 1), :, :]

    @pl.when(h == nH - 1)
    def _():
        xp_ref[TH + 1:TH + 2, 1:W + 1, :] = jnp.zeros((1, W, Cin), xp_ref.dtype)

    @pl.when(h < nH - 1)
    def _():
        xp_ref[TH + 1:TH + 2, 1:W + 1, :] = x_ref[0, pl.ds(row0 + TH, 1), :, :]

    acc = _conv3x3_from_padded(xp_ref, w_ref, patch_ref, TH, W, Cin)

    # BN statistics piggyback on the f32 accumulator; two direct row writes.
    stats_ref[0, 0, 0:1, :] = jnp.sum(acc, axis=0, keepdims=True)
    stats_ref[0, 0, 1:2, :] = jnp.sum(acc * acc, axis=0, keepdims=True)

    y_ref[0] = acc.reshape(TH, W, Cout).astype(y_ref.dtype)


# --------------------------------------------------------------------------
# Kernel 2: BN1(scale,shift) + ReLU + conv2 + partial BN stats
# --------------------------------------------------------------------------
def bn_relu_conv_stats_kernel(y_ref, scale_ref, shift_ref, w_ref,
                              z_ref, stats_ref, rp_ref, patch_ref):
    # y_ref    : (1, H, W, C)      full conv1 output (resident across h)
    # scale_ref: (1, C) f32        gamma / sqrt(var+eps)
    # shift_ref: (1, C) f32        beta - mean*scale
    # w_ref    : (3, 3*C, Cout)
    # z_ref    : (1, TH, W, Cout)
    # stats_ref: (1, 1, 2, Cout) f32
    # rp_ref   : (TH+2, W+2, C)    VMEM scratch, zero halo + BN/ReLU interior
    # patch_ref: (TH*W, 3*C)       VMEM scratch
    TH, W, Cout = z_ref.shape[1], z_ref.shape[2], z_ref.shape[3]
    C = y_ref.shape[3]
    h = pl.program_id(1)
    nH = pl.num_programs(1)
    row0 = h * TH

    def bn_relu(rows):
        v = rows.astype(jnp.float32)
        return jnp.maximum(v * scale_ref[...] + shift_ref[...], 0.0
                           ).astype(rp_ref.dtype)

    rp_ref[:, 0:1, :] = jnp.zeros((TH + 2, 1, C), rp_ref.dtype)
    rp_ref[:, W + 1:W + 2, :] = jnp.zeros((TH + 2, 1, C), rp_ref.dtype)
    rp_ref[1:TH + 1, 1:W + 1, :] = bn_relu(y_ref[0, pl.ds(row0, TH), :, :])

    @pl.when(h == 0)
    def _():
        rp_ref[0:1, 1:W + 1, :] = jnp.zeros((1, W, C), rp_ref.dtype)

    @pl.when(h > 0)
    def _():
        rp_ref[0:1, 1:W + 1, :] = bn_relu(y_ref[0, pl.ds(row0 - 1, 1), :, :])

    @pl.when(h == nH - 1)
    def _():
        rp_ref[TH + 1:TH + 2, 1:W + 1, :] = jnp.zeros((1, W, C), rp_ref.dtype)

    @pl.when(h < nH - 1)
    def _():
        rp_ref[TH + 1:TH + 2, 1:W + 1, :] = bn_relu(
            y_ref[0, pl.ds(row0 + TH, 1), :, :])

    acc = _conv3x3_from_padded(rp_ref, w_ref, patch_ref, TH, W, C)

    stats_ref[0, 0, 0:1, :] = jnp.sum(acc, axis=0, keepdims=True)
    stats_ref[0, 0, 1:2, :] = jnp.sum(acc * acc, axis=0, keepdims=True)

    z_ref[0] = acc.reshape(TH, W, Cout).astype(z_ref.dtype)


# --------------------------------------------------------------------------
# Kernel 3: BN2 + ReLU, output written directly in NCHW-flat layout
# --------------------------------------------------------------------------
def bn_relu_nchw_kernel(y_ref, scale_ref, shift_ref, out_ref):
    # y_ref  : (1, TH, W, C)     conv2 output row tile (NHWC)
    # out_ref: (1, C, TH*W) f32  NCHW with spatial dims flattened (contiguous)
    TH, W, C = y_ref.shape[1], y_ref.shape[2], y_ref.shape[3]
    y = y_ref[0].astype(jnp.float32)
    r = jnp.maximum(y * scale_ref[...] + shift_ref[...], 0.0)   # (TH, W, C)
    out_ref[0] = r.reshape(TH * W, C).T.astype(out_ref.dtype)   # one 2-D xpose


# --------------------------------------------------------------------------
# Host-side glue
# --------------------------------------------------------------------------
def _pick_tile_h(H, W):
    """Row tile that divides H and keeps the NCHW-flat output lane dim a
    multiple of 128 (unmasked stores); falls back to the full image."""
    for th in (64, 32, 16, 8):
        if H % th == 0 and H > th and (th * W) % 128 == 0:
            return th
    return H


def _vmem_limit_bytes():
    """~2/3 of physical VMEM: ~42 MiB on v7x (64 MiB), ~85 MiB on v5e/v6e."""
    try:
        cap = int(pltpu.get_tpu_info().vmem_capacity_bytes)
    except Exception:
        cap = 64 * 1024 * 1024
    return (cap * 2) // 3


def _bn_scale_shift(stats, gamma, beta, count):
    """Reduce per-tile (sum, sumsq) -> fused BN (scale, shift), training mode."""
    s = jnp.sum(stats[:, :, 0, :], axis=(0, 1))
    ss = jnp.sum(stats[:, :, 1, :], axis=(0, 1))
    mean = s / count
    var = jnp.maximum(ss / count - mean * mean, 0.0)   # biased (training mode)
    inv_std = lax.rsqrt(var + BN_EPS)
    scale = gamma.astype(jnp.float32) * inv_std
    shift = beta.astype(jnp.float32) - mean * scale
    return scale.reshape(1, -1), shift.reshape(1, -1)


def _double_conv_impl(x_nchw, w1_oihw, w2_oihw, g1, b1, g2, b2,
                      *, compute_dtype=jnp.bfloat16):
    """x_nchw: (N, Cin, H, W) f32.  Returns (N, Cout, H, W) f32."""
    N, Cin, H, W = x_nchw.shape
    Cout = w1_oihw.shape[0]
    cdt = compute_dtype
    TH = _pick_tile_h(H, W)
    nH = H // TH
    count = float(N * H * W)
    isz = np.dtype(cdt).itemsize

    # NCHW -> NHWC (channel on lanes); bf16 MXU operands by default with f32
    # accumulation and f32 BN stats in-kernel.  No jnp.pad: the halo is built
    # inside kernel 1.
    x = jnp.transpose(x_nchw, (0, 2, 3, 1)).astype(cdt)

    # (Cout, Cin, 3, 3) -> (3, 3*Cin, Cout): taps folded into the contraction
    # dim, split by dy so each conv is 3 accumulating MXU matmuls.
    w1 = jnp.transpose(w1_oihw, (2, 3, 1, 0)).reshape(3, 3 * Cin, Cout).astype(cdt)
    w2 = jnp.transpose(w2_oihw, (2, 3, 1, 0)).reshape(3, 3 * Cout, Cout).astype(cdt)

    cparams = pltpu.CompilerParams(
        dimension_semantics=("parallel", "parallel"),
        vmem_limit_bytes=_vmem_limit_bytes(),
    )

    ce1 = pl.CostEstimate(
        flops=2 * N * H * W * 9 * Cin * Cout,
        transcendentals=0,
        bytes_accessed=(N * H * W * (Cin + Cout) + 9 * Cin * Cout) * isz
                       + N * nH * 2 * Cout * 4)
    ce2 = pl.CostEstimate(
        flops=2 * N * H * W * 9 * Cout * Cout,
        transcendentals=0,
        bytes_accessed=(N * H * W * 2 * Cout + 9 * Cout * Cout) * isz
                       + N * nH * 2 * Cout * 4)

    # ---- pass 1: conv1 (halo in-kernel) + partial BN stats ----
    y1, st1 = pl.pallas_call(
        conv1_stats_kernel,
        grid=(N, nH),
        in_specs=[
            pl.BlockSpec((1, H, W, Cin), lambda n, h: (n, 0, 0, 0)),
            pl.BlockSpec((3, 3 * Cin, Cout), lambda n, h: (0, 0, 0)),
        ],
        out_specs=[
            pl.BlockSpec((1, TH, W, Cout), lambda n, h: (n, h, 0, 0)),
            pl.BlockSpec((1, 1, 2, Cout), lambda n, h: (n, h, 0, 0)),
        ],
        out_shape=[
            jax.ShapeDtypeStruct((N, H, W, Cout), cdt),
            jax.ShapeDtypeStruct((N, nH, 2, Cout), jnp.float32),
        ],
        scratch_shapes=[
            pltpu.VMEM((TH + 2, W + 2, Cin), cdt),
            pltpu.VMEM((TH * W, 3 * Cin), cdt),
        ],
        compiler_params=cparams,
        cost_estimate=ce1,
    )(x, w1)

    scale1, shift1 = _bn_scale_shift(st1, g1, b1, count)

    # ---- pass 2: BN1 + ReLU + conv2 + partial BN stats ----
    y2, st2 = pl.pallas_call(
        bn_relu_conv_stats_kernel,
        grid=(N, nH),
        in_specs=[
            pl.BlockSpec((1, H, W, Cout), lambda n, h: (n, 0, 0, 0)),
            pl.BlockSpec((1, Cout), lambda n, h: (0, 0)),
            pl.BlockSpec((1, Cout), lambda n, h: (0, 0)),
            pl.BlockSpec((3, 3 * Cout, Cout), lambda n, h: (0, 0, 0)),
        ],
        out_specs=[
            pl.BlockSpec((1, TH, W, Cout), lambda n, h: (n, h, 0, 0)),
            pl.BlockSpec((1, 1, 2, Cout), lambda n, h: (n, h, 0, 0)),
        ],
        out_shape=[
            jax.ShapeDtypeStruct((N, H, W, Cout), cdt),
            jax.ShapeDtypeStruct((N, nH, 2, Cout), jnp.float32),
        ],
        scratch_shapes=[
            pltpu.VMEM((TH + 2, W + 2, Cout), cdt),
            pltpu.VMEM((TH * W, 3 * Cout), cdt),
        ],
        compiler_params=cparams,
        cost_estimate=ce2,
    )(y1, scale1, shift1, w2)

    scale2, shift2 = _bn_scale_shift(st2, g2, b2, count)

    # ---- pass 3: BN2 + ReLU, written directly in NCHW-flat layout ----
    out_flat = pl.pallas_call(
        bn_relu_nchw_kernel,
        grid=(N, nH),
        in_specs=[
            pl.BlockSpec((1, TH, W, Cout), lambda n, h: (n, h, 0, 0)),
            pl.BlockSpec((1, Cout), lambda n, h: (0, 0)),
            pl.BlockSpec((1, Cout), lambda n, h: (0, 0)),
        ],
        out_specs=pl.BlockSpec((1, Cout, TH * W), lambda n, h: (n, 0, h)),
        out_shape=jax.ShapeDtypeStruct((N, Cout, H * W), jnp.float32),
        compiler_params=cparams,
    )(y2, scale2, shift2)

    # (N, Cout, H*W) -> (N, Cout, H, W) is a free contiguous reshape.
    return out_flat.reshape(N, Cout, H, W)


double_conv = jax.jit(_double_conv_impl, static_argnames=("compute_dtype",))


def double_conv_reference(x, w1, w2, g1, b1, g2, b2):
    """Pure-JAX NCHW reference (matches PyTorch training-mode forward)."""
    def conv(x, w):
        return lax.conv_general_dilated(
            x, w, window_strides=(1, 1), padding=((1, 1), (1, 1)),
            dimension_numbers=("NCHW", "OIHW", "NCHW"))

    def bn_relu(x, g, b):
        mean = jnp.mean(x, axis=(0, 2, 3), keepdims=True)
        var = jnp.mean((x - mean) ** 2, axis=(0, 2, 3), keepdims=True)
        y = (x - mean) / jnp.sqrt(var + BN_EPS)
        y = y * g.reshape(1, -1, 1, 1) + b.reshape(1, -1, 1, 1)
        return jnp.maximum(y, 0.0)

    y = bn_relu(conv(x, w1), g1, b1)
    return bn_relu(conv(y, w2), g2, b2)


if __name__ == "__main__":
    N, Cin, Cout, H, W = 2, 4, 8, 16, 16

    key = jax.random.PRNGKey(0)
    kx, kw1, kw2, kg1, kb1, kg2, kb2 = jax.random.split(key, 7)

    x = jax.random.normal(kx, (N, Cin, H, W), jnp.float32)
    w1 = jax.random.normal(kw1, (Cout, Cin, 3, 3), jnp.float32) * 0.2
    w2 = jax.random.normal(kw2, (Cout, Cout, 3, 3), jnp.float32) * 0.2
    g1 = 1.0 + 0.1 * jax.random.normal(kg1, (Cout,), jnp.float32)
    b1 = 0.1 * jax.random.normal(kb1, (Cout,), jnp.float32)
    g2 = 1.0 + 0.1 * jax.random.normal(kg2, (Cout,), jnp.float32)
    b2 = 0.1 * jax.random.normal(kb2, (Cout,), jnp.float32)

    ref = jax.block_until_ready(double_conv_reference(x, w1, w2, g1, b1, g2, b2))

    # f32 operand path: strict check of training-mode Conv->BN->ReLU semantics.
    out_f32 = jax.block_until_ready(
        double_conv(x, w1, w2, g1, b1, g2, b2, compute_dtype=jnp.float32))
    assert out_f32.shape == (N, Cout, H, W)
    assert np.allclose(np.asarray(out_f32), np.asarray(ref), atol=1e-3, rtol=1e-3)

    # bf16 MXU-operand path (default): f32 accumulation + f32 BN stats keep it
    # close; tolerance reflects bf16 operand rounding.
    out_bf16 = jax.block_until_ready(double_conv(x, w1, w2, g1, b1, g2, b2))
    assert out_bf16.shape == (N, Cout, H, W)
    assert np.allclose(np.asarray(out_bf16), np.asarray(ref), atol=5e-2, rtol=5e-2)

    print("KERNEL_OK")
</pallas_src>

<mosaic_0001>
module attributes {stable_mosaic.version = 11 : i64} {
  func.func @conv1_stats_kernel(%arg0: i32, %arg1: i32, %arg2: memref<1x16x16x4xf32, #tpu.memory_space<vmem>>, %arg3: memref<3x12x8xf32, #tpu.memory_space<vmem>>, %arg4: memref<1x8x16x8xf32, #tpu.memory_space<vmem>>, %arg5: memref<1x1x2x8xf32, #tpu.memory_space<vmem>>, %arg6: memref<10x18x4xf32, #tpu.memory_space<vmem>>, %arg7: memref<128x12xf32, #tpu.memory_space<vmem>>) attributes {dimension_semantics = [#tpu.dimension_semantics<parallel>, #tpu.dimension_semantics<parallel>], iteration_bounds = array<i64: 2, 2>, scalar_prefetch = 0 : i64, scratch_operands = 2 : i64, tpu.core_type = #tpu.core_type<tc>, window_params = [{transform_indices = @transform_0, window_bounds = array<i64: 1, 16, 16, 4>}, {pipeline_mode = #tpu.pipeline_mode<synchronous>, transform_indices = @transform_1, window_bounds = array<i64: 3, 12, 8>}, {transform_indices = @transform_2, window_bounds = array<i64: 1, 8, 16, 8>}, {transform_indices = @transform_3, window_bounds = array<i64: 1, 1, 2, 8>}]} {
    %c8_i32 = arith.constant 8 : i32
    %0 = arith.muli %arg1, %c8_i32 : i32
    %cst = arith.constant 0.000000e+00 : f32
    %1 = vector.broadcast %cst : f32 to vector<10x1x4xf32>
    %c0 = arith.constant 0 : index
    %c0_0 = arith.constant 0 : index
    %c0_1 = arith.constant 0 : index
    %2 = vector.load %arg6[%c0, %c0_0, %c0_1] : memref<10x18x4xf32, #tpu.memory_space<vmem>>, vector<10x1x4xf32>
    tpu.vector_store %arg6[%c0, %c0_0, %c0_1], %1 {strides = array<i32>} : memref<10x18x4xf32, #tpu.memory_space<vmem>>, vector<10x1x4xf32>,
    %cst_2 = arith.constant 0.000000e+00 : f32
    %3 = vector.broadcast %cst_2 : f32 to vector<10x1x4xf32>
    %c0_3 = arith.constant 0 : index
    %c17 = arith.constant 17 : index
    %c0_4 = arith.constant 0 : index
    %4 = vector.load %arg6[%c0_3, %c17, %c0_4] : memref<10x18x4xf32, #tpu.memory_space<vmem>>, vector<10x1x4xf32>
    tpu.vector_store %arg6[%c0_3, %c17, %c0_4], %3 {strides = array<i32>} : memref<10x18x4xf32, #tpu.memory_space<vmem>>, vector<10x1x4xf32>,
    %c0_5 = arith.constant 0 : index
    %5 = arith.index_cast %0 : i32 to index
    %c0_6 = arith.constant 0 : index
    %c0_7 = arith.constant 0 : index
    %6 = vector.load %arg2[%c0_5, %5, %c0_6, %c0_7] : memref<1x16x16x4xf32, #tpu.memory_space<vmem>>, vector<1x8x16x4xf32>
    %7 = vector.shape_cast %6 : vector<1x8x16x4xf32> to vector<8x16x4xf32>
    %c1 = arith.constant 1 : index
    %c1_8 = arith.constant 1 : index
    %c0_9 = arith.constant 0 : index
    %8 = vector.load %arg6[%c1, %c1_8, %c0_9] : memref<10x18x4xf32, #tpu.memory_space<vmem>>, vector<8x16x4xf32>
    tpu.vector_store %arg6[%c1, %c1_8, %c0_9], %7 {strides = array<i32>} : memref<10x18x4xf32, #tpu.memory_space<vmem>>, vector<8x16x4xf32>,
    %c0_i32 = arith.constant 0 : i32
    %9 = arith.cmpi eq, %arg1, %c0_i32 : i32
    %10 = arith.extui %9 : i1 to i32
    %c0_i32_10 = arith.constant 0 : i32
    %11 = arith.cmpi ne, %10, %c0_i32_10 : i32
    scf.if %11 {
      %cst_90 = arith.constant 0.000000e+00 : f32
      %77 = vector.broadcast %cst_90 : f32 to vector<1x16x4xf32>
      %c0_91 = arith.constant 0 : index
      %c1_92 = arith.constant 1 : index
      %c0_93 = arith.constant 0 : index
      %78 = vector.load %arg6[%c0_91, %c1_92, %c0_93] : memref<10x18x4xf32, #tpu.memory_space<vmem>>, vector<1x16x4xf32>
      tpu.vector_store %arg6[%c0_91, %c1_92, %c0_93], %77 {strides = array<i32>} : memref<10x18x4xf32, #tpu.memory_space<vmem>>, vector<1x16x4xf32>,
    } else {
    }
    %c0_i32_11 = arith.constant 0 : i32
    %12 = arith.cmpi sgt, %arg1, %c0_i32_11 : i32
    %13 = arith.extui %12 : i1 to i32
    %c0_i32_12 = arith.constant 0 : i32
    %14 = arith.cmpi ne, %13, %c0_i32_12 : i32
    scf.if %14 {
      %c1_i32_90 = arith.constant 1 : i32
      %77 = arith.subi %0, %c1_i32_90 : i32
      %c0_91 = arith.constant 0 : index
      %78 = arith.index_cast %77 : i32 to index
      %c0_92 = arith.constant 0 : index
      %c0_93 = arith.constant 0 : index
      %79 = vector.load %arg2[%c0_91, %78, %c0_92, %c0_93] : memref<1x16x16x4xf32, #tpu.memory_space<vmem>>, vector<1x1x16x4xf32>
      %80 = vector.shape_cast %79 : vector<1x1x16x4xf32> to vector<1x16x4xf32>
      %c0_94 = arith.constant 0 : index
      %c1_95 = arith.constant 1 : index
      %c0_96 = arith.constant 0 : index
      %81 = vector.load %arg6[%c0_94, %c1_95, %c0_96] : memref<10x18x4xf32, #tpu.memory_space<vmem>>, vector<1x16x4xf32>
      tpu.vector_store %arg6[%c0_94, %c1_95, %c0_96], %80 {strides = array<i32>} : memref<10x18x4xf32, #tpu.memory_space<vmem>>, vector<1x16x4xf32>,
    } else {
    }
    %c1_i32 = arith.constant 1 : i32
    %15 = arith.cmpi eq, %arg1, %c1_i32 : i32
    %16 = arith.extui %15 : i1 to i32
    %c0_i32_13 = arith.constant 0 : i32
    %17 = arith.cmpi ne, %16, %c0_i32_13 : i32
    scf.if %17 {
      %cst_90 = arith.constant 0.000000e+00 : f32
      %77 = vector.broadcast %cst_90 : f32 to vector<1x16x4xf32>
      %c9 = arith.constant 9 : index
      %c1_91 = arith.constant 1 : index
      %c0_92 = arith.constant 0 : index
      %78 = vector.load %arg6[%c9, %c1_91, %c0_92] : memref<10x18x4xf32, #tpu.memory_space<vmem>>, vector<1x16x4xf32>
      tpu.vector_store %arg6[%c9, %c1_91, %c0_92], %77 {strides = array<i32>} : memref<10x18x4xf32, #tpu.memory_space<vmem>>, vector<1x16x4xf32>,
    } else {
    }
    %c1_i32_14 = arith.constant 1 : i32
    %18 = arith.cmpi slt, %arg1, %c1_i32_14 : i32
    %19 = arith.extui %18 : i1 to i32
    %c0_i32_15 = arith.constant 0 : i32
    %20 = arith.cmpi ne, %19, %c0_i32_15 : i32
    scf.if %20 {
      %c8_i32_90 = arith.constant 8 : i32
      %77 = arith.addi %0, %c8_i32_90 : i32
      %c0_91 = arith.constant 0 : index
      %78 = arith.index_cast %77 : i32 to index
      %c0_92 = arith.constant 0 : index
      %c0_93 = arith.constant 0 : index
      %79 = vector.load %arg2[%c0_91, %78, %c0_92, %c0_93] : memref<1x16x16x4xf32, #tpu.memory_space<vmem>>, vector<1x1x16x4xf32>
      %80 = vector.shape_cast %79 : vector<1x1x16x4xf32> to vector<1x16x4xf32>
      %c9 = arith.constant 9 : index
      %c1_94 = arith.constant 1 : index
      %c0_95 = arith.constant 0 : index
      %81 = vector.load %arg6[%c9, %c1_94, %c0_95] : memref<10x18x4xf32, #tpu.memory_space<vmem>>, vector<1x16x4xf32>
      tpu.vector_store %arg6[%c9, %c1_94, %c0_95], %80 {strides = array<i32>} : memref<10x18x4xf32, #tpu.memory_space<vmem>>, vector<1x16x4xf32>,
    } else {
    }
    %c0_16 = arith.constant 0 : index
    %c0_17 = arith.constant 0 : index
    %c0_18 = arith.constant 0 : index
    %21 = vector.load %arg6[%c0_16, %c0_17, %c0_18] : memref<10x18x4xf32, #tpu.memory_space<vmem>>, vector<8x16x4xf32>
    %22 = vector.shape_cast %21 : vector<8x16x4xf32> to vector<128x4xf32>
    %c0_19 = arith.constant 0 : index
    %c0_20 = arith.constant 0 : index
    %23 = vector.load %arg7[%c0_19, %c0_20] : memref<128x12xf32, #tpu.memory_space<vmem>>, vector<128x4xf32>
    tpu.vector_store %arg7[%c0_19, %c0_20], %22 {strides = array<i32>} : memref<128x12xf32, #tpu.memory_space<vmem>>, vector<128x4xf32>,
    %c0_21 = arith.constant 0 : index
    %c1_22 = arith.constant 1 : index
    %c0_23 = arith.constant 0 : index
    %24 = vector.load %arg6[%c0_21, %c1_22, %c0_23] : memref<10x18x4xf32, #tpu.memory_space<vmem>>, vector<8x16x4xf32>
    %25 = vector.shape_cast %24 : vector<8x16x4xf32> to vector<128x4xf32>
    %c0_24 = arith.constant 0 : index
    %c4 = arith.constant 4 : index
    %26 = vector.load %arg7[%c0_24, %c4] : memref<128x12xf32, #tpu.memory_space<vmem>>, vector<128x4xf32>
    tpu.vector_store %arg7[%c0_24, %c4], %25 {strides = array<i32>} : memref<128x12xf32, #tpu.memory_space<vmem>>, vector<128x4xf32>,
    %c0_25 = arith.constant 0 : index
    %c2 = arith.constant 2 : index
    %c0_26 = arith.constant 0 : index
    %27 = vector.load %arg6[%c0_25, %c2, %c0_26] : memref<10x18x4xf32, #tpu.memory_space<vmem>>, vector<8x16x4xf32>
    %28 = vector.shape_cast %27 : vector<8x16x4xf32> to vector<128x4xf32>
    %c0_27 = arith.constant 0 : index
    %c8 = arith.constant 8 : index
    %29 = vector.load %arg7[%c0_27, %c8] : memref<128x12xf32, #tpu.memory_space<vmem>>, vector<128x4xf32>
    tpu.vector_store %arg7[%c0_27, %c8], %28 {strides = array<i32>} : memref<128x12xf32, #tpu.memory_space<vmem>>, vector<128x4xf32>,
    %c0_28 = arith.constant 0 : index
    %c0_29 = arith.constant 0 : index
    %30 = vector.load %arg7[%c0_28, %c0_29] : memref<128x12xf32, #tpu.memory_space<vmem>>, vector<128x12xf32>
    %c0_30 = arith.constant 0 : index
    %c0_31 = arith.constant 0 : index
    %c0_32 = arith.constant 0 : index
    %31 = vector.load %arg3[%c0_30, %c0_31, %c0_32] : memref<3x12x8xf32, #tpu.memory_space<vmem>>, vector<1x12x8xf32>
    %32 = vector.shape_cast %31 : vector<1x12x8xf32> to vector<12x8xf32>
    %cst_33 = arith.constant dense<0.000000e+00> : vector<128x8xf32>
    %33 = tpu.matmul %30, %32, %cst_33 {dimension_numbers = #tpu.dot_dimension_numbers<[1], [0], [0], [1], [0, 0, 1, 1], [], []>} : vector<128x12xf32>, vector<12x8xf32>, vector<128x8xf32> -> vector<128x8xf32>
    %c1_34 = arith.constant 1 : index
    %c0_35 = arith.constant 0 : index
    %c0_36 = arith.constant 0 : index
    %34 = vector.load %arg6[%c1_34, %c0_35, %c0_36] : memref<10x18x4xf32, #tpu.memory_space<vmem>>, vector<8x16x4xf32>
    %35 = vector.shape_cast %34 : vector<8x16x4xf32> to vector<128x4xf32>
    %c0_37 = arith.constant 0 : index
    %c0_38 = arith.constant 0 : index
    %36 = vector.load %arg7[%c0_37, %c0_38] : memref<128x12xf32, #tpu.memory_space<vmem>>, vector<128x4xf32>
    tpu.vector_store %arg7[%c0_37, %c0_38], %35 {strides = array<i32>} : memref<128x12xf32, #tpu.memory_space<vmem>>, vector<128x4xf32>,
    %c1_39 = arith.constant 1 : index
    %c1_40 = arith.constant 1 : index
    %c0_41 = arith.constant 0 : index
    %37 = vector.load %arg6[%c1_39, %c1_40, %c0_41] : memref<10x18x4xf32, #tpu.memory_space<vmem>>, vector<8x16x4xf32>
    %38 = vector.shape_cast %37 : vector<8x16x4xf32> to vector<128x4xf32>
    %c0_42 = arith.constant 0 : index
    %c4_43 = arith.constant 4 : index
    %39 = vector.load %arg7[%c0_42, %c4_43] : memref<128x12xf32, #tpu.memory_space<vmem>>, vector<128x4xf32>
    tpu.vector_store %arg7[%c0_42, %c4_43], %38 {strides = array<i32>} : memref<128x12xf32, #tpu.memory_space<vmem>>, vector<128x4xf32>,
    %c1_44 = arith.constant 1 : index
    %c2_45 = arith.constant 2 : index
    %c0_46 = arith.constant 0 : index
    %40 = vector.load %arg6[%c1_44, %c2_45, %c0_46] : memref<10x18x4xf32, #tpu.memory_space<vmem>>, vector<8x16x4xf32>
    %41 = vector.shape_cast %40 : vector<8x16x4xf32> to vector<128x4xf32>
    %c0_47 = arith.constant 0 : index
    %c8_48 = arith.constant 8 : index
    %42 = vector.load %arg7[%c0_47, %c8_48] : memref<128x12xf32, #tpu.memory_space<vmem>>, vector<128x4xf32>
    tpu.vector_store %arg7[%c0_47, %c8_48], %41 {strides = array<i32>} : memref<128x12xf32, #tpu.memory_space<vmem>>, vector<128x4xf32>,
    %c0_49 = arith.constant 0 : index
    %c0_50 = arith.constant 0 : index
    %43 = vector.load %arg7[%c0_49, %c0_50] : memref<128x12xf32, #tpu.memory_space<vmem>>, vector<128x12xf32>
    %c1_51 = arith.constant 1 : index
    %c0_52 = arith.constant 0 : index
    %c0_53 = arith.constant 0 : index
    %44 = vector.load %arg3[%c1_51, %c0_52, %c0_53] : memref<3x12x8xf32, #tpu.memory_space<vmem>>, vector<1x12x8xf32>
    %45 = vector.shape_cast %44 : vector<1x12x8xf32> to vector<12x8xf32>
    %cst_54 = arith.constant dense<0.000000e+00> : vector<128x8xf32>
    %46 = tpu.matmul %43, %45, %cst_54 {dimension_numbers = #tpu.dot_dimension_numbers<[1], [0], [0], [1], [0, 0, 1, 1], [], []>} : vector<128x12xf32>, vector<12x8xf32>, vector<128x8xf32> -> vector<128x8xf32>
    %47 = arith.addf %33, %46 : vector<128x8xf32>
    %c2_55 = arith.constant 2 : index
    %c0_56 = arith.constant 0 : index
    %c0_57 = arith.constant 0 : index
    %48 = vector.load %arg6[%c2_55, %c0_56, %c0_57] : memref<10x18x4xf32, #tpu.memory_space<vmem>>, vector<8x16x4xf32>
    %49 = vector.shape_cast %48 : vector<8x16x4xf32> to vector<128x4xf32>
    %c0_58 = arith.constant 0 : index
    %c0_59 = arith.constant 0 : index
    %50 = vector.load %arg7[%c0_58, %c0_59] : memref<128x12xf32, #tpu.memory_space<vmem>>, vector<128x4xf32>
    tpu.vector_store %arg7[%c0_58, %c0_59], %49 {strides = array<i32>} : memref<128x12xf32, #tpu.memory_space<vmem>>, vector<128x4xf32>,
    %c2_60 = arith.constant 2 : index
    %c1_61 = arith.constant 1 : index
    %c0_62 = arith.constant 0 : index
    %51 = vector.load %arg6[%c2_60, %c1_61, %c0_62] : memref<10x18x4xf32, #tpu.memory_space<vmem>>, vector<8x16x4xf32>
    %52 = vector.shape_cast %51 : vector<8x16x4xf32> to vector<128x4xf32>
    %c0_63 = arith.constant 0 : index
    %c4_64 = arith.constant 4 : index
    %53 = vector.load %arg7[%c0_63, %c4_64] : memref<128x12xf32, #tpu.memory_space<vmem>>, vector<128x4xf32>
    tpu.vector_store %arg7[%c0_63, %c4_64], %52 {strides = array<i32>} : memref<128x12xf32, #tpu.memory_space<vmem>>, vector<128x4xf32>,
    %c2_65 = arith.constant 2 : index
    %c2_66 = arith.constant 2 : index
    %c0_67 = arith.constant 0 : index
    %54 = vector.load %arg6[%c2_65, %c2_66, %c0_67] : memref<10x18x4xf32, #tpu.memory_space<vmem>>, vector<8x16x4xf32>
    %55 = vector.shape_cast %54 : vector<8x16x4xf32> to vector<128x4xf32>
    %c0_68 = arith.constant 0 : index
    %c8_69 = arith.constant 8 : index
    %56 = vector.load %arg7[%c0_68, %c8_69] : memref<128x12xf32, #tpu.memory_space<vmem>>, vector<128x4xf32>
    tpu.vector_store %arg7[%c0_68, %c8_69], %55 {strides = array<i32>} : memref<128x12xf32, #tpu.memory_space<vmem>>, vector<128x4xf32>,
    %c0_70 = arith.constant 0 : index
    %c0_71 = arith.constant 0 : index
    %57 = vector.load %arg7[%c0_70, %c0_71] : memref<128x12xf32, #tpu.memory_space<vmem>>, vector<128x12xf32>
    %c2_72 = arith.constant 2 : index
    %c0_73 = arith.constant 0 : index
    %c0_74 = arith.constant 0 : index
    %58 = vector.load %arg3[%c2_72, %c0_73, %c0_74] : memref<3x12x8xf32, #tpu.memory_space<vmem>>, vector<1x12x8xf32>
    %59 = vector.shape_cast %58 : vector<1x12x8xf32> to vector<12x8xf32>
    %cst_75 = arith.constant dense<0.000000e+00> : vector<128x8xf32>
    %60 = tpu.matmul %57, %59, %cst_75 {dimension_numbers = #tpu.dot_dimension_numbers<[1], [0], [0], [1], [0, 0, 1, 1], [], []>} : vector<128x12xf32>, vector<12x8xf32>, vector<128x8xf32> -> vector<128x8xf32>
    %61 = arith.addf %47, %60 : vector<128x8xf32>
    %cst_76 = arith.constant dense<0.000000e+00> : vector<8xf32>
    %62 = vector.multi_reduction <add>, %61, %cst_76 [0] : vector<128x8xf32> to vector<8xf32>
    %63 = vector.shape_cast %62 : vector<8xf32> to vector<1x8xf32>
    %c0_77 = arith.constant 0 : index
    %c0_78 = arith.constant 0 : index
    %c0_79 = arith.constant 0 : index
    %c0_80 = arith.constant 0 : index
    %64 = vector.load %arg5[%c0_77, %c0_78, %c0_79, %c0_80] : memref<1x1x2x8xf32, #tpu.memory_space<vmem>>, vector<1x1x1x8xf32>
    %65 = vector.shape_cast %64 : vector<1x1x1x8xf32> to vector<1x8xf32>
    %66 = vector.shape_cast %63 : vector<1x8xf32> to vector<1x1x1x8xf32>
    tpu.vector_store %arg5[%c0_77, %c0_78, %c0_79, %c0_80], %66 {strides = array<i32>} : memref<1x1x2x8xf32, #tpu.memory_space<vmem>>, vector<1x1x1x8xf32>,
    %67 = arith.mulf %61, %61 : vector<128x8xf32>
    %cst_81 = arith.constant dense<0.000000e+00> : vector<8xf32>
    %68 = vector.multi_reduction <add>, %67, %cst_81 [0] : vector<128x8xf32> to vector<8xf32>
    %69 = vector.shape_cast %68 : vector<8xf32> to vector<1x8xf32>
    %c0_82 = arith.constant 0 : index
    %c0_83 = arith.constant 0 : index
    %c1_84 = arith.constant 1 : index
    %c0_85 = arith.constant 0 : index
    %70 = vector.load %arg5[%c0_82, %c0_83, %c1_84, %c0_85] : memref<1x1x2x8xf32, #tpu.memory_space<vmem>>, vector<1x1x1x8xf32>
    %71 = vector.shape_cast %70 : vector<1x1x1x8xf32> to vector<1x8xf32>
    %72 = vector.shape_cast %69 : vector<1x8xf32> to vector<1x1x1x8xf32>
    tpu.vector_store %arg5[%c0_82, %c0_83, %c1_84, %c0_85], %72 {strides = array<i32>} : memref<1x1x2x8xf32, #tpu.memory_space<vmem>>, vector<1x1x1x8xf32>,
    %73 = vector.shape_cast %61 : vector<128x8xf32> to vector<8x16x8xf32>
    %c0_86 = arith.constant 0 : index
    %c0_87 = arith.constant 0 : index
    %c0_88 = arith.constant 0 : index
    %c0_89 = arith.constant 0 : index
    %74 = vector.load %arg4[%c0_86, %c0_87, %c0_88, %c0_89] : memref<1x8x16x8xf32, #tpu.memory_space<vmem>>, vector<1x8x16x8xf32>
    %75 = vector.shape_cast %74 : vector<1x8x16x8xf32> to vector<8x16x8xf32>
    %76 = vector.shape_cast %73 : vector<8x16x8xf32> to vector<1x8x16x8xf32>
    tpu.vector_store %arg4[%c0_86, %c0_87, %c0_88, %c0_89], %76 {strides = array<i32>} : memref<1x8x16x8xf32, #tpu.memory_space<vmem>>, vector<1x8x16x8xf32>,
    return
  }
  func.func @transform_0(%arg0: i32, %arg1: i32) -> (i32, i32, i32, i32) {
    %c0_i32 = arith.constant 0 : i32
    %c0_i32_0 = arith.constant 0 : i32
    %c0_i32_1 = arith.constant 0 : i32
    %c0_i32_2 = arith.constant 0 : i32
    return %arg0, %c0_i32, %c0_i32_0, %c0_i32_1 : i32, i32, i32, i32
  }
  func.func @transform_1(%arg0: i32, %arg1: i32) -> (i32, i32, i32) {
    %c0_i32 = arith.constant 0 : i32
    %c0_i32_0 = arith.constant 0 : i32
    %c0_i32_1 = arith.constant 0 : i32
    %c0_i32_2 = arith.constant 0 : i32
    return %c0_i32, %c0_i32_0, %c0_i32_1 : i32, i32, i32
  }
  func.func @transform_2(%arg0: i32, %arg1: i32) -> (i32, i32, i32, i32) {
    %c0_i32 = arith.constant 0 : i32
    %c0_i32_0 = arith.constant 0 : i32
    %c0_i32_1 = arith.constant 0 : i32
    return %arg0, %arg1, %c0_i32, %c0_i32_0 : i32, i32, i32, i32
  }
  func.func @transform_3(%arg0: i32, %arg1: i32) -> (i32, i32, i32, i32) {
    %c0_i32 = arith.constant 0 : i32
    %c0_i32_0 = arith.constant 0 : i32
    %c0_i32_1 = arith.constant 0 : i32
    return %arg0, %arg1, %c0_i32, %c0_i32_0 : i32, i32, i32, i32
  }
}

module attributes {stable_mosaic.version = 11 : i64} {
  func.func @bn_relu_nchw_kernel(%arg0: i32, %arg1: i32, %arg2: memref<1x8x16x8xf32, #tpu.memory_space<vmem>>, %arg3: memref<1x8xf32, #tpu.memory_space<vmem>>, %arg4: memref<1x8xf32, #tpu.memory_space<vmem>>, %arg5: memref<1x8x128xf32, #tpu.memory_space<vmem>>) attributes {dimension_semantics = [#tpu.dimension_semantics<parallel>, #tpu.dimension_semantics<parallel>], iteration_bounds = array<i64: 2, 2>, scalar_prefetch = 0 : i64, scratch_operands = 0 : i64, tpu.core_type = #tpu.core_type<tc>, window_params = [{transform_indices = @transform_0, window_bounds = array<i64: 1, 8, 16, 8>}, {pipeline_mode = #tpu.pipeline_mode<synchronous>, transform_indices = @transform_1, window_bounds = array<i64: 1, 8>}, {pipeline_mode = #tpu.pipeline_mode<synchronous>, transform_indices = @transform_2, window_bounds = array<i64: 1, 8>}, {transform_indices = @transform_3, window_bounds = array<i64: 1, 8, 128>}]} {
    %c0 = arith.constant 0 : index
    %c0_0 = arith.constant 0 : index
    %c0_1 = arith.constant 0 : index
    %c0_2 = arith.constant 0 : index
    %0 = vector.load %arg2[%c0, %c0_0, %c0_1, %c0_2] : memref<1x8x16x8xf32, #tpu.memory_space<vmem>>, vector<1x8x16x8xf32>
    %1 = vector.shape_cast %0 : vector<1x8x16x8xf32> to vector<8x16x8xf32>
    %c0_3 = arith.constant 0 : index
    %c0_4 = arith.constant 0 : index
    %2 = vector.load %arg3[%c0_3, %c0_4] : memref<1x8xf32, #tpu.memory_space<vmem>>, vector<1x8xf32>
    %3 = vector.shape_cast %2 : vector<1x8xf32> to vector<1x1x8xf32>
    %4 = vector.broadcast %3 : vector<1x1x8xf32> to vector<8x16x8xf32>
    %5 = arith.mulf %1, %4 : vector<8x16x8xf32>
    %c0_5 = arith.constant 0 : index
    %c0_6 = arith.constant 0 : index
    %6 = vector.load %arg4[%c0_5, %c0_6] : memref<1x8xf32, #tpu.memory_space<vmem>>, vector<1x8xf32>
    %7 = vector.shape_cast %6 : vector<1x8xf32> to vector<1x1x8xf32>
    %8 = vector.broadcast %7 : vector<1x1x8xf32> to vector<8x16x8xf32>
    %9 = arith.addf %5, %8 : vector<8x16x8xf32>
    %cst = arith.constant 0.000000e+00 : f32
    %10 = vector.broadcast %cst : f32 to vector<8x16x8xf32>
    %11 = arith.maximumf %9, %10 : vector<8x16x8xf32>
    %12 = vector.shape_cast %11 : vector<8x16x8xf32> to vector<128x8xf32>
    %13 = tpu.transpose %12, [1, 0] : vector<128x8xf32> -> vector<8x128xf32>
    %c0_7 = arith.constant 0 : index
    %c0_8 = arith.constant 0 : index
    %c0_9 = arith.constant 0 : index
    %14 = vector.load %arg5[%c0_7, %c0_8, %c0_9] : memref<1x8x128xf32, #tpu.memory_space<vmem>>, vector<1x8x128xf32>
    %15 = vector.shape_cast %14 : vector<1x8x128xf32> to vector<8x128xf32>
    %16 = vector.shape_cast %13 : vector<8x128xf32> to vector<1x8x128xf32>
    tpu.vector_store %arg5[%c0_7, %c0_8, %c0_9], %16 {strides = array<i32>} : memref<1x8x128xf32, #tpu.memory_space<vmem>>, vector<1x8x128xf32>,
    return
  }
  func.func @transform_0(%arg0: i32, %arg1: i32) -> (i32, i32, i32, i32) {
    %c0_i32 = arith.constant 0 : i32
    %c0_i32_0 = arith.constant 0 : i32
    %c0_i32_1 = arith.constant 0 : i32
    return %arg0, %arg1, %c0_i32, %c0_i32_0 : i32, i32, i32, i32
  }
  func.func @transform_1(%arg0: i32, %arg1: i32) -> (i32, i32) {
    %c0_i32 = arith.constant 0 : i32
    %c0_i32_0 = arith.constant 0 : i32
    %c0_i32_1 = arith.constant 0 : i32
    return %c0_i32, %c0_i32_0 : i32, i32
  }
  func.func @transform_2(%arg0: i32, %arg1: i32) -> (i32, i32) {
    %c0_i32 = arith.constant 0 : i32
    %c0_i32_0 = arith.constant 0 : i32
    %c0_i32_1 = arith.constant 0 : i32
    return %c0_i32, %c0_i32_0 : i32, i32
  }
  func.func @transform_3(%arg0: i32, %arg1: i32) -> (i32, i32, i32) {
    %c0_i32 = arith.constant 0 : i32
    %c0_i32_0 = arith.constant 0 : i32
    return %arg0, %c0_i32, %arg1 : i32, i32, i32
  }
}

module attributes {stable_mosaic.version = 11 : i64} {
  func.func @bn_relu_conv_stats_kernel(%arg0: i32, %arg1: i32, %arg2: memref<1x16x16x8xf32, #tpu.memory_space<vmem>>, %arg3: memref<1x8xf32, #tpu.memory_space<vmem>>, %arg4: memref<1x8xf32, #tpu.memory_space<vmem>>, %arg5: memref<3x24x8xf32, #tpu.memory_space<vmem>>, %arg6: memref<1x8x16x8xf32, #tpu.memory_space<vmem>>, %arg7: memref<1x1x2x8xf32, #tpu.memory_space<vmem>>, %arg8: memref<10x18x8xf32, #tpu.memory_space<vmem>>, %arg9: memref<128x24xf32, #tpu.memory_space<vmem>>) attributes {dimension_semantics = [#tpu.dimension_semantics<parallel>, #tpu.dimension_semantics<parallel>], iteration_bounds = array<i64: 2, 2>, scalar_prefetch = 0 : i64, scratch_operands = 2 : i64, tpu.core_type = #tpu.core_type<tc>, window_params = [{transform_indices = @transform_0, window_bounds = array<i64: 1, 16, 16, 8>}, {pipeline_mode = #tpu.pipeline_mode<synchronous>, transform_indices = @transform_1, window_bounds = array<i64: 1, 8>}, {pipeline_mode = #tpu.pipeline_mode<synchronous>, transform_indices = @transform_2, window_bounds = array<i64: 1, 8>}, {pipeline_mode = #tpu.pipeline_mode<synchronous>, transform_indices = @transform_3, window_bounds = array<i64: 3, 24, 8>}, {transform_indices = @transform_4, window_bounds = array<i64: 1, 8, 16, 8>}, {transform_indices = @transform_5, window_bounds = array<i64: 1, 1, 2, 8>}]} {
    %c8_i32 = arith.constant 8 : i32
    %0 = arith.muli %arg1, %c8_i32 : i32
    %cst = arith.constant 0.000000e+00 : f32
    %1 = vector.broadcast %cst : f32 to vector<10x1x8xf32>
    %c0 = arith.constant 0 : index
    %c0_0 = arith.constant 0 : index
    %c0_1 = arith.constant 0 : index
    %2 = vector.load %arg8[%c0, %c0_0, %c0_1] : memref<10x18x8xf32, #tpu.memory_space<vmem>>, vector<10x1x8xf32>
    tpu.vector_store %arg8[%c0, %c0_0, %c0_1], %1 {strides = array<i32>} : memref<10x18x8xf32, #tpu.memory_space<vmem>>, vector<10x1x8xf32>,
    %cst_2 = arith.constant 0.000000e+00 : f32
    %3 = vector.broadcast %cst_2 : f32 to vector<10x1x8xf32>
    %c0_3 = arith.constant 0 : index
    %c17 = arith.constant 17 : index
    %c0_4 = arith.constant 0 : index
    %4 = vector.load %arg8[%c0_3, %c17, %c0_4] : memref<10x18x8xf32, #tpu.memory_space<vmem>>, vector<10x1x8xf32>
    tpu.vector_store %arg8[%c0_3, %c17, %c0_4], %3 {strides = array<i32>} : memref<10x18x8xf32, #tpu.memory_space<vmem>>, vector<10x1x8xf32>,
    %c0_5 = arith.constant 0 : index
    %5 = arith.index_cast %0 : i32 to index
    %c0_6 = arith.constant 0 : index
    %c0_7 = arith.constant 0 : index
    %6 = vector.load %arg2[%c0_5, %5, %c0_6, %c0_7] : memref<1x16x16x8xf32, #tpu.memory_space<vmem>>, vector<1x8x16x8xf32>
    %7 = vector.shape_cast %6 : vector<1x8x16x8xf32> to vector<8x16x8xf32>
    %c0_8 = arith.constant 0 : index
    %c0_9 = arith.constant 0 : index
    %8 = vector.load %arg3[%c0_8, %c0_9] : memref<1x8xf32, #tpu.memory_space<vmem>>, vector<1x8xf32>
    %9 = vector.shape_cast %8 : vector<1x8xf32> to vector<1x1x8xf32>
    %10 = vector.broadcast %9 : vector<1x1x8xf32> to vector<8x16x8xf32>
    %11 = arith.mulf %7, %10 : vector<8x16x8xf32>
    %c0_10 = arith.constant 0 : index
    %c0_11 = arith.constant 0 : index
    %12 = vector.load %arg4[%c0_10, %c0_11] : memref<1x8xf32, #tpu.memory_space<vmem>>, vector<1x8xf32>
    %13 = vector.shape_cast %12 : vector<1x8xf32> to vector<1x1x8xf32>
    %14 = vector.broadcast %13 : vector<1x1x8xf32> to vector<8x16x8xf32>
    %15 = arith.addf %11, %14 : vector<8x16x8xf32>
    %cst_12 = arith.constant 0.000000e+00 : f32
    %16 = vector.broadcast %cst_12 : f32 to vector<8x16x8xf32>
    %17 = arith.maximumf %15, %16 : vector<8x16x8xf32>
    %c1 = arith.constant 1 : index
    %c1_13 = arith.constant 1 : index
    %c0_14 = arith.constant 0 : index
    %18 = vector.load %arg8[%c1, %c1_13, %c0_14] : memref<10x18x8xf32, #tpu.memory_space<vmem>>, vector<8x16x8xf32>
    tpu.vector_store %arg8[%c1, %c1_13, %c0_14], %17 {strides = array<i32>} : memref<10x18x8xf32, #tpu.memory_space<vmem>>, vector<8x16x8xf32>,
    %c0_i32 = arith.constant 0 : i32
    %19 = arith.cmpi eq, %arg1, %c0_i32 : i32
    %20 = arith.extui %19 : i1 to i32
    %c0_i32_15 = arith.constant 0 : i32
    %21 = arith.cmpi ne, %20, %c0_i32_15 : i32
    scf.if %21 {
      %cst_95 = arith.constant 0.000000e+00 : f32
      %87 = vector.broadcast %cst_95 : f32 to vector<1x16x8xf32>
      %c0_96 = arith.constant 0 : index
      %c1_97 = arith.constant 1 : index
      %c0_98 = arith.constant 0 : index
      %88 = vector.load %arg8[%c0_96, %c1_97, %c0_98] : memref<10x18x8xf32, #tpu.memory_space<vmem>>, vector<1x16x8xf32>
      tpu.vector_store %arg8[%c0_96, %c1_97, %c0_98], %87 {strides = array<i32>} : memref<10x18x8xf32, #tpu.memory_space<vmem>>, vector<1x16x8xf32>,
    } else {
    }
    %c0_i32_16 = arith.constant 0 : i32
    %22 = arith.cmpi sgt, %arg1, %c0_i32_16 : i32
    %23 = arith.extui %22 : i1 to i32
    %c0_i32_17 = arith.constant 0 : i32
    %24 = arith.cmpi ne, %23, %c0_i32_17 : i32
    scf.if %24 {
      %c1_i32_95 = arith.constant 1 : i32
      %87 = arith.subi %0, %c1_i32_95 : i32
      %c0_96 = arith.constant 0 : index
      %88 = arith.index_cast %87 : i32 to index
      %c0_97 = arith.constant 0 : index
      %c0_98 = arith.constant 0 : index
      %89 = vector.load %arg2[%c0_96, %88, %c0_97, %c0_98] : memref<1x16x16x8xf32, #tpu.memory_space<vmem>>, vector<1x1x16x8xf32>
      %90 = vector.shape_cast %89 : vector<1x1x16x8xf32> to vector<1x16x8xf32>
      %c0_99 = arith.constant 0 : index
      %c0_100 = arith.constant 0 : index
      %91 = vector.load %arg3[%c0_99, %c0_100] : memref<1x8xf32, #tpu.memory_space<vmem>>, vector<1x8xf32>
      %92 = vector.shape_cast %91 : vector<1x8xf32> to vector<1x1x8xf32>
      %93 = vector.broadcast %92 : vector<1x1x8xf32> to vector<1x16x8xf32>
      %94 = arith.mulf %90, %93 : vector<1x16x8xf32>
      %c0_101 = arith.constant 0 : index
      %c0_102 = arith.constant 0 : index
      %95 = vector.load %arg4[%c0_101, %c0_102] : memref<1x8xf32, #tpu.memory_space<vmem>>, vector<1x8xf32>
      %96 = vector.shape_cast %95 : vector<1x8xf32> to vector<1x1x8xf32>
      %97 = vector.broadcast %96 : vector<1x1x8xf32> to vector<1x16x8xf32>
      %98 = arith.addf %94, %97 : vector<1x16x8xf32>
      %cst_103 = arith.constant 0.000000e+00 : f32
      %99 = vector.broadcast %cst_103 : f32 to vector<1x16x8xf32>
      %100 = arith.maximumf %98, %99 : vector<1x16x8xf32>
      %c0_104 = arith.constant 0 : index
      %c1_105 = arith.constant 1 : index
      %c0_106 = arith.constant 0 : index
      %101 = vector.load %arg8[%c0_104, %c1_105, %c0_106] : memref<10x18x8xf32, #tpu.memory_space<vmem>>, vector<1x16x8xf32>
      tpu.vector_store %arg8[%c0_104, %c1_105, %c0_106], %100 {strides = array<i32>} : memref<10x18x8xf32, #tpu.memory_space<vmem>>, vector<1x16x8xf32>,
    } else {
    }
    %c1_i32 = arith.constant 1 : i32
    %25 = arith.cmpi eq, %arg1, %c1_i32 : i32
    %26 = arith.extui %25 : i1 to i32
    %c0_i32_18 = arith.constant 0 : i32
    %27 = arith.cmpi ne, %26, %c0_i32_18 : i32
    scf.if %27 {
      %cst_95 = arith.constant 0.000000e+00 : f32
      %87 = vector.broadcast %cst_95 : f32 to vector<1x16x8xf32>
      %c9 = arith.constant 9 : index
      %c1_96 = arith.constant 1 : index
      %c0_97 = arith.constant 0 : index
      %88 = vector.load %arg8[%c9, %c1_96, %c0_97] : memref<10x18x8xf32, #tpu.memory_space<vmem>>, vector<1x16x8xf32>
      tpu.vector_store %arg8[%c9, %c1_96, %c0_97], %87 {strides = array<i32>} : memref<10x18x8xf32, #tpu.memory_space<vmem>>, vector<1x16x8xf32>,
    } else {
    }
    %c1_i32_19 = arith.constant 1 : i32
    %28 = arith.cmpi slt, %arg1, %c1_i32_19 : i32
    %29 = arith.extui %28 : i1 to i32
    %c0_i32_20 = arith.constant 0 : i32
    %30 = arith.cmpi ne, %29, %c0_i32_20 : i32
    scf.if %30 {
      %c8_i32_95 = arith.constant 8 : i32
      %87 = arith.addi %0, %c8_i32_95 : i32
      %c0_96 = arith.constant 0 : index
      %88 = arith.index_cast %87 : i32 to index
      %c0_97 = arith.constant 0 : index
      %c0_98 = arith.constant 0 : index
      %89 = vector.load %arg2[%c0_96, %88, %c0_97, %c0_98] : memref<1x16x16x8xf32, #tpu.memory_space<vmem>>, vector<1x1x16x8xf32>
      %90 = vector.shape_cast %89 : vector<1x1x16x8xf32> to vector<1x16x8xf32>
      %c0_99 = arith.constant 0 : index
      %c0_100 = arith.constant 0 : index
      %91 = vector.load %arg3[%c0_99, %c0_100] : memref<1x8xf32, #tpu.memory_space<vmem>>, vector<1x8xf32>
      %92 = vector.shape_cast %91 : vector<1x8xf32> to vector<1x1x8xf32>
      %93 = vector.broadcast %92 : vector<1x1x8xf32> to vector<1x16x8xf32>
      %94 = arith.mulf %90, %93 : vector<1x16x8xf32>
      %c0_101 = arith.constant 0 : index
      %c0_102 = arith.constant 0 : index
      %95 = vector.load %arg4[%c0_101, %c0_102] : memref<1x8xf32, #tpu.memory_space<vmem>>, vector<1x8xf32>
      %96 = vector.shape_cast %95 : vector<1x8xf32> to vector<1x1x8xf32>
      %97 = vector.broadcast %96 : vector<1x1x8xf32> to vector<1x16x8xf32>
      %98 = arith.addf %94, %97 : vector<1x16x8xf32>
      %cst_103 = arith.constant 0.000000e+00 : f32
      %99 = vector.broadcast %cst_103 : f32 to vector<1x16x8xf32>
      %100 = arith.maximumf %98, %99 : vector<1x16x8xf32>
      %c9 = arith.constant 9 : index
      %c1_104 = arith.constant 1 : index
      %c0_105 = arith.constant 0 : index
      %101 = vector.load %arg8[%c9, %c1_104, %c0_105] : memref<10x18x8xf32, #tpu.memory_space<vmem>>, vector<1x16x8xf32>
      tpu.vector_store %arg8[%c9, %c1_104, %c0_105], %100 {strides = array<i32>} : memref<10x18x8xf32, #tpu.memory_space<vmem>>, vector<1x16x8xf32>,
    } else {
    }
    %c0_21 = arith.constant 0 : index
    %c0_22 = arith.constant 0 : index
    %c0_23 = arith.constant 0 : index
    %31 = vector.load %arg8[%c0_21, %c0_22, %c0_23] : memref<10x18x8xf32, #tpu.memory_space<vmem>>, vector<8x16x8xf32>
    %32 = vector.shape_cast %31 : vector<8x16x8xf32> to vector<128x8xf32>
    %c0_24 = arith.constant 0 : index
    %c0_25 = arith.constant 0 : index
    %33 = vector.load %arg9[%c0_24, %c0_25] : memref<128x24xf32, #tpu.memory_space<vmem>>, vector<128x8xf32>
    tpu.vector_store %arg9[%c0_24, %c0_25], %32 {strides = array<i32>} : memref<128x24xf32, #tpu.memory_space<vmem>>, vector<128x8xf32>,
    %c0_26 = arith.constant 0 : index
    %c1_27 = arith.constant 1 : index
    %c0_28 = arith.constant 0 : index
    %34 = vector.load %arg8[%c0_26, %c1_27, %c0_28] : memref<10x18x8xf32, #tpu.memory_space<vmem>>, vector<8x16x8xf32>
    %35 = vector.shape_cast %34 : vector<8x16x8xf32> to vector<128x8xf32>
    %c0_29 = arith.constant 0 : index
    %c8 = arith.constant 8 : index
    %36 = vector.load %arg9[%c0_29, %c8] : memref<128x24xf32, #tpu.memory_space<vmem>>, vector<128x8xf32>
    tpu.vector_store %arg9[%c0_29, %c8], %35 {strides = array<i32>} : memref<128x24xf32, #tpu.memory_space<vmem>>, vector<128x8xf32>,
    %c0_30 = arith.constant 0 : index
    %c2 = arith.constant 2 : index
    %c0_31 = arith.constant 0 : index
    %37 = vector.load %arg8[%c0_30, %c2, %c0_31] : memref<10x18x8xf32, #tpu.memory_space<vmem>>, vector<8x16x8xf32>
    %38 = vector.shape_cast %37 : vector<8x16x8xf32> to vector<128x8xf32>
    %c0_32 = arith.constant 0 : index
    %c16 = arith.constant 16 : index
    %39 = vector.load %arg9[%c0_32, %c16] : memref<128x24xf32, #tpu.memory_space<vmem>>, vector<128x8xf32>
    tpu.vector_store %arg9[%c0_32, %c16], %38 {strides = array<i32>} : memref<128x24xf32, #tpu.memory_space<vmem>>, vector<128x8xf32>,
    %c0_33 = arith.constant 0 : index
    %c0_34 = arith.constant 0 : index
    %40 = vector.load %arg9[%c0_33, %c0_34] : memref<128x24xf32, #tpu.memory_space<vmem>>, vector<128x24xf32>
    %c0_35 = arith.constant 0 : index
    %c0_36 = arith.constant 0 : index
    %c0_37 = arith.constant 0 : index
    %41 = vector.load %arg5[%c0_35, %c0_36, %c0_37] : memref<3x24x8xf32, #tpu.memory_space<vmem>>, vector<1x24x8xf32>
    %42 = vector.shape_cast %41 : vector<1x24x8xf32> to vector<24x8xf32>
    %cst_38 = arith.constant dense<0.000000e+00> : vector<128x8xf32>
    %43 = tpu.matmul %40, %42, %cst_38 {dimension_numbers = #tpu.dot_dimension_numbers<[1], [0], [0], [1], [0, 0, 1, 1], [], []>} : vector<128x24xf32>, vector<24x8xf32>, vector<128x8xf32> -> vector<128x8xf32>
    %c1_39 = arith.constant 1 : index
    %c0_40 = arith.constant 0 : index
    %c0_41 = arith.constant 0 : index
    %44 = vector.load %arg8[%c1_39, %c0_40, %c0_41] : memref<10x18x8xf32, #tpu.memory_space<vmem>>, vector<8x16x8xf32>
    %45 = vector.shape_cast %44 : vector<8x16x8xf32> to vector<128x8xf32>
    %c0_42 = arith.constant 0 : index
    %c0_43 = arith.constant 0 : index
    %46 = vector.load %arg9[%c0_42, %c0_43] : memref<128x24xf32, #tpu.memory_space<vmem>>, vector<128x8xf32>
    tpu.vector_store %arg9[%c0_42, %c0_43], %45 {strides = array<i32>} : memref<128x24xf32, #tpu.memory_space<vmem>>, vector<128x8xf32>,
    %c1_44 = arith.constant 1 : index
    %c1_45 = arith.constant 1 : index
    %c0_46 = arith.constant 0 : index
    %47 = vector.load %arg8[%c1_44, %c1_45, %c0_46] : memref<10x18x8xf32, #tpu.memory_space<vmem>>, vector<8x16x8xf32>
    %48 = vector.shape_cast %47 : vector<8x16x8xf32> to vector<128x8xf32>
    %c0_47 = arith.constant 0 : index
    %c8_48 = arith.constant 8 : index
    %49 = vector.load %arg9[%c0_47, %c8_48] : memref<128x24xf32, #tpu.memory_space<vmem>>, vector<128x8xf32>
    tpu.vector_store %arg9[%c0_47, %c8_48], %48 {strides = array<i32>} : memref<128x24xf32, #tpu.memory_space<vmem>>, vector<128x8xf32>,
    %c1_49 = arith.constant 1 : index
    %c2_50 = arith.constant 2 : index
    %c0_51 = arith.constant 0 : index
    %50 = vector.load %arg8[%c1_49, %c2_50, %c0_51] : memref<10x18x8xf32, #tpu.memory_space<vmem>>, vector<8x16x8xf32>
    %51 = vector.shape_cast %50 : vector<8x16x8xf32> to vector<128x8xf32>
    %c0_52 = arith.constant 0 : index
    %c16_53 = arith.constant 16 : index
    %52 = vector.load %arg9[%c0_52, %c16_53] : memref<128x24xf32, #tpu.memory_space<vmem>>, vector<128x8xf32>
    tpu.vector_store %arg9[%c0_52, %c16_53], %51 {strides = array<i32>} : memref<128x24xf32, #tpu.memory_space<vmem>>, vector<128x8xf32>,
    %c0_54 = arith.constant 0 : index
    %c0_55 = arith.constant 0 : index
    %53 = vector.load %arg9[%c0_54, %c0_55] : memref<128x24xf32, #tpu.memory_space<vmem>>, vector<128x24xf32>
    %c1_56 = arith.constant 1 : index
    %c0_57 = arith.constant 0 : index
    %c0_58 = arith.constant 0 : index
    %54 = vector.load %arg5[%c1_56, %c0_57, %c0_58] : memref<3x24x8xf32, #tpu.memory_space<vmem>>, vector<1x24x8xf32>
    %55 = vector.shape_cast %54 : vector<1x24x8xf32> to vector<24x8xf32>
    %cst_59 = arith.constant dense<0.000000e+00> : vector<128x8xf32>
    %56 = tpu.matmul %53, %55, %cst_59 {dimension_numbers = #tpu.dot_dimension_numbers<[1], [0], [0], [1], [0, 0, 1, 1], [], []>} : vector<128x24xf32>, vector<24x8xf32>, vector<128x8xf32> -> vector<128x8xf32>
    %57 = arith.addf %43, %56 : vector<128x8xf32>
    %c2_60 = arith.constant 2 : index
    %c0_61 = arith.constant 0 : index
    %c0_62 = arith.constant 0 : index
    %58 = vector.load %arg8[%c2_60, %c0_61, %c0_62] : memref<10x18x8xf32, #tpu.memory_space<vmem>>, vector<8x16x8xf32>
    %59 = vector.shape_cast %58 : vector<8x16x8xf32> to vector<128x8xf32>
    %c0_63 = arith.constant 0 : index
    %c0_64 = arith.constant 0 : index
    %60 = vector.load %arg9[%c0_63, %c0_64] : memref<128x24xf32, #tpu.memory_space<vmem>>, vector<128x8xf32>
    tpu.vector_store %arg9[%c0_63, %c0_64], %59 {strides = array<i32>} : memref<128x24xf32, #tpu.memory_space<vmem>>, vector<128x8xf32>,
    %c2_65 = arith.constant 2 : index
    %c1_66 = arith.constant 1 : index
    %c0_67 = arith.constant 0 : index
    %61 = vector.load %arg8[%c2_65, %c1_66, %c0_67] : memref<10x18x8xf32, #tpu.memory_space<vmem>>, vector<8x16x8xf32>
    %62 = vector.shape_cast %61 : vector<8x16x8xf32> to vector<128x8xf32>
    %c0_68 = arith.constant 0 : index
    %c8_69 = arith.constant 8 : index
    %63 = vector.load %arg9[%c0_68, %c8_69] : memref<128x24xf32, #tpu.memory_space<vmem>>, vector<128x8xf32>
    tpu.vector_store %arg9[%c0_68, %c8_69], %62 {strides = array<i32>} : memref<128x24xf32, #tpu.memory_space<vmem>>, vector<128x8xf32>,
    %c2_70 = arith.constant 2 : index
    %c2_71 = arith.constant 2 : index
    %c0_72 = arith.constant 0 : index
    %64 = vector.load %arg8[%c2_70, %c2_71, %c0_72] : memref<10x18x8xf32, #tpu.memory_space<vmem>>, vector<8x16x8xf32>
    %65 = vector.shape_cast %64 : vector<8x16x8xf32> to vector<128x8xf32>
    %c0_73 = arith.constant 0 : index
    %c16_74 = arith.constant 16 : index
    %66 = vector.load %arg9[%c0_73, %c16_74] : memref<128x24xf32, #tpu.memory_space<vmem>>, vector<128x8xf32>
    tpu.vector_store %arg9[%c0_73, %c16_74], %65 {strides = array<i32>} : memref<128x24xf32, #tpu.memory_space<vmem>>, vector<128x8xf32>,
    %c0_75 = arith.constant 0 : index
    %c0_76 = arith.constant 0 : index
    %67 = vector.load %arg9[%c0_75, %c0_76] : memref<128x24xf32, #tpu.memory_space<vmem>>, vector<128x24xf32>
    %c2_77 = arith.constant 2 : index
    %c0_78 = arith.constant 0 : index
    %c0_79 = arith.constant 0 : index
    %68 = vector.load %arg5[%c2_77, %c0_78, %c0_79] : memref<3x24x8xf32, #tpu.memory_space<vmem>>, vector<1x24x8xf32>
    %69 = vector.shape_cast %68 : vector<1x24x8xf32> to vector<24x8xf32>
    %cst_80 = arith.constant dense<0.000000e+00> : vector<128x8xf32>
    %70 = tpu.matmul %67, %69, %cst_80 {dimension_numbers = #tpu.dot_dimension_numbers<[1], [0], [0], [1], [0, 0, 1, 1], [], []>} : vector<128x24xf32>, vector<24x8xf32>, vector<128x8xf32> -> vector<128x8xf32>
    %71 = arith.addf %57, %70 : vector<128x8xf32>
    %cst_81 = arith.constant dense<0.000000e+00> : vector<8xf32>
    %72 = vector.multi_reduction <add>, %71, %cst_81 [0] : vector<128x8xf32> to vector<8xf32>
    %73 = vector.shape_cast %72 : vector<8xf32> to vector<1x8xf32>
    %c0_82 = arith.constant 0 : index
    %c0_83 = arith.constant 0 : index
    %c0_84 = arith.constant 0 : index
    %c0_85 = arith.constant 0 : index
    %74 = vector.load %arg7[%c0_82, %c0_83, %c0_84, %c0_85] : memref<1x1x2x8xf32, #tpu.memory_space<vmem>>, vector<1x1x1x8xf32>
    %75 = vector.shape_cast %74 : vector<1x1x1x8xf32> to vector<1x8xf32>
    %76 = vector.shape_cast %73 : vector<1x8xf32> to vector<1x1x1x8xf32>
    tpu.vector_store %arg7[%c0_82, %c0_83, %c0_84, %c0_85], %76 {strides = array<i32>} : memref<1x1x2x8xf32, #tpu.memory_space<vmem>>, vector<1x1x1x8xf32>,
    %77 = arith.mulf %71, %71 : vector<128x8xf32>
    %cst_86 = arith.constant dense<0.000000e+00> : vector<8xf32>
    %78 = vector.multi_reduction <add>, %77, %cst_86 [0] : vector<128x8xf32> to vector<8xf32>
    %79 = vector.shape_cast %78 : vector<8xf32> to vector<1x8xf32>
    %c0_87 = arith.constant 0 : index
    %c0_88 = arith.constant 0 : index
    %c1_89 = arith.constant 1 : index
    %c0_90 = arith.constant 0 : index
    %80 = vector.load %arg7[%c0_87, %c0_88, %c1_89, %c0_90] : memref<1x1x2x8xf32, #tpu.memory_space<vmem>>, vector<1x1x1x8xf32>
    %81 = vector.shape_cast %80 : vector<1x1x1x8xf32> to vector<1x8xf32>
    %82 = vector.shape_cast %79 : vector<1x8xf32> to vector<1x1x1x8xf32>
    tpu.vector_store %arg7[%c0_87, %c0_88, %c1_89, %c0_90], %82 {strides = array<i32>} : memref<1x1x2x8xf32, #tpu.memory_space<vmem>>, vector<1x1x1x8xf32>,
    %83 = vector.shape_cast %71 : vector<128x8xf32> to vector<8x16x8xf32>
    %c0_91 = arith.constant 0 : index
    %c0_92 = arith.constant 0 : index
    %c0_93 = arith.constant 0 : index
    %c0_94 = arith.constant 0 : index
    %84 = vector.load %arg6[%c0_91, %c0_92, %c0_93, %c0_94] : memref<1x8x16x8xf32, #tpu.memory_space<vmem>>, vector<1x8x16x8xf32>
    %85 = vector.shape_cast %84 : vector<1x8x16x8xf32> to vector<8x16x8xf32>
    %86 = vector.shape_cast %83 : vector<8x16x8xf32> to vector<1x8x16x8xf32>
    tpu.vector_store %arg6[%c0_91, %c0_92, %c0_93, %c0_94], %86 {strides = array<i32>} : memref<1x8x16x8xf32, #tpu.memory_space<vmem>>, vector<1x8x16x8xf32>,
    return
  }
  func.func @transform_0(%arg0: i32, %arg1: i32) -> (i32, i32, i32, i32) {
    %c0_i32 = arith.constant 0 : i32
    %c0_i32_0 = arith.constant 0 : i32
    %c0_i32_1 = arith.constant 0 : i32
    %c0_i32_2 = arith.constant 0 : i32
    return %arg0, %c0_i32, %c0_i32_0, %c0_i32_1 : i32, i32, i32, i32
  }
  func.func @transform_1(%arg0: i32, %arg1: i32) -> (i32, i32) {
    %c0_i32 = arith.constant 0 : i32
    %c0_i32_0 = arith.constant 0 : i32
    %c0_i32_1 = arith.constant 0 : i32
    return %c0_i32, %c0_i32_0 : i32, i32
  }
  func.func @transform_2(%arg0: i32, %arg1: i32) -> (i32, i32) {
    %c0_i32 = arith.constant 0 : i32
    %c0_i32_0 = arith.constant 0 : i32
    %c0_i32_1 = arith.constant 0 : i32
    return %c0_i32, %c0_i32_0 : i32, i32
  }
  func.func @transform_3(%arg0: i32, %arg1: i32) -> (i32, i32, i32) {
    %c0_i32 = arith.constant 0 : i32
    %c0_i32_0 = arith.constant 0 : i32
    %c0_i32_1 = arith.constant 0 : i32
    %c0_i32_2 = arith.constant 0 : i32
    return %c0_i32, %c0_i32_0, %c0_i32_1 : i32, i32, i32
  }
  func.func @transform_4(%arg0: i32, %arg1: i32) -> (i32, i32, i32, i32) {
    %c0_i32 = arith.constant 0 : i32
    %c0_i32_0 = arith.constant 0 : i32
    %c0_i32_1 = arith.constant 0 : i32
    return %arg0, %arg1, %c0_i32, %c0_i32_0 : i32, i32, i32, i32
  }
  func.func @transform_5(%arg0: i32, %arg1: i32) -> (i32, i32, i32, i32) {
    %c0_i32 = arith.constant 0 : i32
    %c0_i32_0 = arith.constant 0 : i32
    %c0_i32_1 = arith.constant 0 : i32
    return %arg0, %arg1, %c0_i32, %c0_i32_0 : i32, i32, i32, i32
  }
}

</mosaic_0001>

<llo_original>
// kernel: _double_conv_impl.5
$region0: #{_double_conv_impl.5}
  #allocation0 [shape = 'u32[]', space=smem, size = 0x4, offset = 0x4, fixed_abs, tag = 'smem constant byte address 0x4 - core index']
  #allocation1 [shape = 'u32[72,128]{1,0:T(1,128)}', space=vmem, size = 0x9000, scoped, tag = 'internal scratch']
  %s0 = inlined_call_operand.vmem [shape: f32[2,16,16,8], index: 0, kind: input, shape index: {}]
  %s1 = inlined_call_operand.vmem [shape: f32[1,8], index: 1, kind: input, shape index: {}]
  %s2 = inlined_call_operand.vmem [shape: f32[1,8], index: 2, kind: input, shape index: {}]
  %s3 = inlined_call_operand.vmem [shape: f32[2,8,256], index: 3, kind: output, shape index: {}]
  %s4 = sld [smem:[#allocation0]]
  $region45: #{_double_conv_impl.5} parent=0
    _
  %s6 = ssub.s32 1, %s4
  %s7 = scalar_select 0, %s6, %s4
  loop: start=0, step=1, limit=6
  $region2: #{_double_conv_impl.5} parent=0 // loop_pre_header
    _
  $region3: #{_double_conv_impl.5} parent=0 // loop_header
    %s9 = sphi 0, %s13
    %p10 = scmp.ge.s32.totalorder %s9, 6
    %s16 = sphi 0, %s28
    %s17 = sphi 0, %s24
    %s18 = sphi 0, %s16
    %s19 = sphi 0, %s17
    %s20 = sphi 0, %s18
    %s21 = sphi 0, %s19
    %s33 = sphi 0, %s35
    %s36 = sphi 0, %s33
    %s37 = sphi 0, %s36
    %s53 = sphi 0, %s37
    %s57 = sphi 0, %s57
    %s59 = sphi 0, %s57
    %s60 = sphi 0, %s59
    %s74 = sphi 0, %s60
    %s78 = sphi 0, %s78
    %s80 = sphi 0, %s78
    %s81 = sphi 0, %s80
    %s95 = sphi 0, %s81
    %s103 = sphi 0, %s105
    %s106 = sphi 0, %s103
    %s107 = sphi 0, %s106
    %s123 = sphi 0, %s107
  $region4: #{_double_conv_impl.5} parent=0 // loop_header_branch
    %12 = sbr.rel (%p10) target = $region8
  $region5: #{_double_conv_impl.5} parent=0 // loop_body
    %s14 = ssub.s32 %s9, 1
    %s15 = ssub.s32 %s9, 2
    %s22 = sadd.s32 1, %s17
    %p23 = scmp.ge.s32.totalorder %s22, 2
    %s24 = scalar_select %p23, 0, %s22
    %s25 = sadd.s32 1, %s16
    %s26 = scalar_select %p23, %s25, %s16
    %p27 = scmp.ge.s32.totalorder %s26, 2
    %s28 = scalar_select %p27, 0, %s26
    %s29 = ssub.s32 %s16, %s28
    %s30 = ssub.s32 %s17, %s24
    %s31 = sor.u32 %s29, %s30
    %p32 = scmp.eq.s32.totalorder %s31, 0
    %s34 = sadd.s32 %s33, 1
    %s35 = scalar_select %p32, %s33, %s34
    %p38 = pneg %p32
    %p39 = scmp.eq.s32.totalorder %s9, 3
    %p40 = por %p38, %p39
    %p41 = scmp.ne.s32.totalorder %s33, %s36
    %p42 = scmp.eq.s32.totalorder %s9, 0
    %p43 = por %p41, %p42
    %p44 = scmp.ne.s32.totalorder %s33, %s36
    %p45 = scmp.eq.s32.totalorder %s14, 3
    %p46 = por %p44, %p45
    %p47 = scmp.ne.s32.totalorder %s36, %s37
    %p48 = scmp.eq.s32.totalorder %s14, 0
    %p49 = por %p47, %p48
    %p50 = scmp.ne.s32.totalorder %s36, %s37
    %p51 = scmp.eq.s32.totalorder %s15, 3
    %p52 = por %p50, %p51
    %p54 = scmp.ne.s32.totalorder %s37, %s53
    %p55 = scmp.eq.s32.totalorder %s15, 0
    %p56 = por %p54, %p55
    %s58 = sadd.s32 %s57, 1
    %p61 = scmp.eq.s32.totalorder %s9, 3
    %p62 = scmp.ne.s32.totalorder %s57, %s59
    %p63 = scmp.eq.s32.totalorder %s9, 0
    %p64 = por %p62, %p63
    %p65 = scmp.ne.s32.totalorder %s57, %s59
    %p66 = scmp.eq.s32.totalorder %s14, 3
    %p67 = por %p65, %p66
    %p68 = scmp.ne.s32.totalorder %s59, %s60
    %p69 = scmp.eq.s32.totalorder %s14, 0
    %p70 = por %p68, %p69
    %p71 = scmp.ne.s32.totalorder %s59, %s60
    %p72 = scmp.eq.s32.totalorder %s15, 3
    %p73 = por %p71, %p72
    %p75 = scmp.ne.s32.totalorder %s60, %s74
    %p76 = scmp.eq.s32.totalorder %s15, 0
    %p77 = por %p75, %p76
    %s79 = sadd.s32 %s78, 1
    %p82 = scmp.eq.s32.totalorder %s9, 3
    %p83 = scmp.ne.s32.totalorder %s78, %s80
    %p84 = scmp.eq.s32.totalorder %s9, 0
    %p85 = por %p83, %p84
    %p86 = scmp.ne.s32.totalorder %s78, %s80
    %p87 = scmp.eq.s32.totalorder %s14, 3
    %p88 = por %p86, %p87
    %p89 = scmp.ne.s32.totalorder %s80, %s81
    %p90 = scmp.eq.s32.totalorder %s14, 0
    %p91 = por %p89, %p90
    %p92 = scmp.ne.s32.totalorder %s80, %s81
    %p93 = scmp.eq.s32.totalorder %s15, 3
    %p94 = por %p92, %p93
    %p96 = scmp.ne.s32.totalorder %s81, %s95
    %p97 = scmp.eq.s32.totalorder %s15, 0
    %p98 = por %p96, %p97
    %s99 = ssub.s32 %s16, %s28
    %s100 = ssub.s32 %s17, %s24
    %s101 = sor.u32 %s99, %s100
    %p102 = scmp.eq.s32.totalorder %s101, 0
    %s104 = sadd.s32 %s103, 1
    %s105 = scalar_select %p102, %s103, %s104
    %p108 = pneg %p102
    %p109 = scmp.eq.s32.totalorder %s9, 3
    %p110 = por %p108, %p109
    %p111 = scmp.ne.s32.totalorder %s103, %s106
    %p112 = scmp.eq.s32.totalorder %s9, 0
    %p113 = por %p111, %p112
    %p114 = scmp.ne.s32.totalorder %s103, %s106
    %p115 = scmp.eq.s32.totalorder %s14, 3
    %p116 = por %p114, %p115
    %p117 = scmp.ne.s32.totalorder %s106, %s107
    %p118 = scmp.eq.s32.totalorder %s14, 0
    %p119 = por %p117, %p118
    %p120 = scmp.ne.s32.totalorder %s106, %s107
    %p121 = scmp.eq.s32.totalorder %s15, 3
    %p122 = por %p120, %p121
    %p124 = scmp.ne.s32.totalorder %s107, %s123
    %p125 = scmp.eq.s32.totalorder %s15, 0
    %p126 = por %p124, %p125
    %p127 = scmp.le.s32.totalorder 1, %s9
    %p128 = scmp.lt.s32.totalorder %s9, 5
    %p129 = pnand %p127, %p128
    %p130 = pneg %p129
    // Predicated region
    $region9: #{_double_conv_impl.5} parent=5 // pred_check
      _
    $region10: #{_double_conv_impl.5} parent=5 // pred_check_branch
      %132 = sbr.rel (%p129) target = $region12
    $region11: #{_double_conv_impl.5} parent=5 // pred_region
      %s133 = ssub.s32 %s9, 1
      // Predicated region
      $region13: #{_double_conv_impl.5} parent=11 // pred_check
        %p134 = pneg %p70
      $region14: #{_double_conv_impl.5} parent=11 // pred_check_branch
        %136 = sbr.rel (%p134) target = $region16
      $region15: #{_double_conv_impl.5} parent=11 // pred_region
        _
      $region16: #{_double_conv_impl.5} parent=11 // pred_fallthru
        _
      // Predicated region
      $region17: #{_double_conv_impl.5} parent=11 // pred_check
        %p137 = pneg %p91
      $region18: #{_double_conv_impl.5} parent=11 // pred_check_branch
        %139 = sbr.rel (%p137) target = $region20
      $region19: #{_double_conv_impl.5} parent=11 // pred_region
        _
      $region20: #{_double_conv_impl.5} parent=11 // pred_fallthru
        _
    $region12: #{_double_conv_impl.5} parent=5 // pred_fallthru
      _
    %p140 = scmp.lt.s32.totalorder %s9, 4
    // Predicated region
    $region21: #{_double_conv_impl.5} parent=5 // pred_check
      %p141 = pneg %p140
    $region22: #{_double_conv_impl.5} parent=5 // pred_check_branch
      %143 = sbr.rel (%p141) target = $region24
    $region23: #{_double_conv_impl.5} parent=5 // pred_region
      // Predicated region
      $region25: #{_double_conv_impl.5} parent=23 // pred_check
        %p144 = pneg %p43
      $region26: #{_double_conv_impl.5} parent=23 // pred_check_branch
        %146 = sbr.rel (%p144) target = $region28
      $region27: #{_double_conv_impl.5} parent=23 // pred_region
        %s147 = smul.u32 8, %s17
        %p148 = scmp.lt.s32.totalorder %s16, 1
        %s149 = scalar_select %p148, %s16, 1
        %p150 = scmp.lt.s32.totalorder %s147, 15
        %s151 = scalar_select %p150, %s147, 15
        %s152 = smul.addr %s151, 2
        %s153 = smul.addr %s149, 32
        %s154 = sadd.s32 %s152, %s153
        %s155 = smul.addr %s154, 8
        %s156 = scalar_lea.vmem %s0, %s155
        %s157 = smul.u32 8, %s17
      $region28: #{_double_conv_impl.5} parent=23 // pred_fallthru
        _
    $region24: #{_double_conv_impl.5} parent=5 // pred_fallthru
      _
    %p158 = scmp.le.s32.totalorder 1, %s9
    %p159 = scmp.lt.s32.totalorder %s9, 5
    %p160 = pnand %p158, %p159
    %p161 = pneg %p160
    // Predicated region
    $region29: #{_double_conv_impl.5} parent=5 // pred_check
      _
    $region30: #{_double_conv_impl.5} parent=5 // pred_check_branch
      %163 = sbr.rel (%p160) target = $region32
    $region31: #{_double_conv_impl.5} parent=5 // pred_region
      %s164 = ssub.s32 %s9, 1
      %s165 = smul.u32 8, %s19
      %p166 = scmp.lt.s32.totalorder %s18, 1
      %s167 = scalar_select %p166, %s18, 1
      %p168 = scmp.lt.s32.totalorder %s165, 15
      %s169 = scalar_select %p168, %s165, 15
      %s170 = smul.addr %s169, 2
      %s171 = smul.addr %s167, 32
      %s172 = sadd.s32 %s170, %s171
      %s173 = smul.addr %s172, 8
      %s174 = scalar_lea.vmem %s0, %s173
      %p175 = pneg %p49
      %p176 = pneg %p46
      %p177 = pneg %p70
      %p178 = pneg %p67
      %p179 = pneg %p91
      %p180 = pneg %p88
      %p181 = pneg %p119
      %p182 = pneg %p116
      %p183 = scmp.lt.s32.totalorder %s18, 1
      %s184 = scalar_select %p183, %s18, 1
      %p185 = scmp.lt.s32.totalorder %s19, 1
      %s186 = scalar_select %p185, %s19, 1
      %s187 = smul.addr %s184, 2
      %s188 = sadd.s32 %s186, %s187
      %s189 = smul.addr %s188, 8
      %s190 = scalar_lea.vmem %s3, %s189
      %s191 = smul.u32 8, %s19
      %p192 = scmp.lt.s32.totalorder %s18, 1
      %s193 = scalar_select %p192, %s18, 1
      %p194 = scmp.lt.s32.totalorder %s191, 15
      %s195 = scalar_select %p194, %s191, 15
      %s196 = smul.addr %s195, 2
      %s197 = smul.addr %s193, 32
      %s198 = sadd.s32 %s196, %s197
      %s199 = smul.addr %s198, 8
      %s200 = scalar_lea.vmem %s0, %s199
      %s201 = smul.u32 8, %s19
      %p202 = scmp.lt.s32.totalorder %s18, 1
      %s203 = scalar_select %p202, %s18, 1
      %p204 = scmp.lt.s32.totalorder %s19, 1
      %s205 = scalar_select %p204, %s19, 1
      %s206 = smul.addr %s203, 2
      %s207 = sadd.s32 %s205, %s206
      %s208 = smul.addr %s207, 8
      %s209 = scalar_lea.vmem %s3, %s208
      %v210 = vld [vmem:[%s200] sm:$0xff]
      %v211 = vld [vmem:[%s200 + $0x8] sm:$0xff]
      %v212 = vld [vmem:[%s200 + $0x10] sm:$0xff]
      %v213 = vld [vmem:[%s200 + $0x18] sm:$0xff]
      %v214 = vld [vmem:[%s200 + $0x20] sm:$0xff]
      %v215 = vld [vmem:[%s200 + $0x28] sm:$0xff]
      %v216 = vld [vmem:[%s200 + $0x30] sm:$0xff]
      %v217 = vld [vmem:[%s200 + $0x38] sm:$0xff]
      %v218 = vld [vmem:[%s200 + $0x40] sm:$0xff]
      %v219 = vld [vmem:[%s200 + $0x48] sm:$0xff]
      %v220 = vld [vmem:[%s200 + $0x50] sm:$0xff]
      %v221 = vld [vmem:[%s200 + $0x58] sm:$0xff]
      %v222 = vld [vmem:[%s200 + $0x60] sm:$0xff]
      %v223 = vld [vmem:[%s200 + $0x68] sm:$0xff]
      %v224 = vld [vmem:[%s200 + $0x70] sm:$0xff]
      %v225 = vld [vmem:[%s200 + $0x78] sm:$0xff]
      %v226 = vld [vmem:[%s1] sm:$0x1]
      %v228 = vperm.slane %v226, 0
      %v230 = vmul.f32 %v210, %v228
      %v231 = vmul.f32 %v211, %v228
      %v232 = vmul.f32 %v212, %v228
      %v233 = vmul.f32 %v213, %v228
      %v234 = vmul.f32 %v214, %v228
      %v235 = vmul.f32 %v215, %v228
      %v236 = vmul.f32 %v216, %v228
      %v237 = vmul.f32 %v217, %v228
      %v238 = vmul.f32 %v218, %v228
      %v239 = vmul.f32 %v219, %v228
      %v240 = vmul.f32 %v220, %v228
      %v241 = vmul.f32 %v221, %v228
      %v242 = vmul.f32 %v222, %v228
      %v243 = vmul.f32 %v223, %v228
      %v244 = vmul.f32 %v224, %v228
      %v245 = vmul.f32 %v225, %v228
      %v246 = vld [vmem:[%s2] sm:$0x1]
      %v248 = vperm.slane %v246, 0
      %v250 = vadd.f32 %v230, %v248
      %v251 = vadd.f32 %v231, %v248
      %v252 = vadd.f32 %v232, %v248
      %v253 = vadd.f32 %v233, %v248
      %v254 = vadd.f32 %v234, %v248
      %v255 = vadd.f32 %v235, %v248
      %v256 = vadd.f32 %v236, %v248
      %v257 = vadd.f32 %v237, %v248
      %v258 = vadd.f32 %v238, %v248
      %v259 = vadd.f32 %v239, %v248
      %v260 = vadd.f32 %v240, %v248
      %v261 = vadd.f32 %v241, %v248
      %v262 = vadd.f32 %v242, %v248
      %v263 = vadd.f32 %v243, %v248
      %v264 = vadd.f32 %v244, %v248
      %v265 = vadd.f32 %v245, %v248
      %v266 = vmax.f32 %v250, 0.0
      %v267 = vmax.f32 %v251, 0.0
      %v268 = vmax.f32 %v252, 0.0
      %v269 = vmax.f32 %v253, 0.0
      %v270 = vmax.f32 %v254, 0.0
      %v271 = vmax.f32 %v255, 0.0
      %v272 = vmax.f32 %v256, 0.0
      %v273 = vmax.f32 %v257, 0.0
      %v274 = vmax.f32 %v258, 0.0
      %v275 = vmax.f32 %v259, 0.0
      %v276 = vmax.f32 %v260, 0.0
      %v277 = vmax.f32 %v261, 0.0
      %v278 = vmax.f32 %v262, 0.0
      %v279 = vmax.f32 %v263, 0.0
      %v280 = vmax.f32 %v264, 0.0
      %v281 = vmax.f32 %v265, 0.0
      %282 = vxpose.xlu0.b32.start [1/16] %v266, 128
      %283 = vxpose.xlu0.b32.cont [2/16] %v267, 128
      %284 = vxpose.xlu0.b32.cont [3/16] %v268, 128
      %285 = vxpose.xlu0.b32.cont [4/16] %v269, 128
      %286 = vxpose.xlu0.b32.cont [5/16] %v270, 128
      %287 = vxpose.xlu0.b32.cont [6/16] %v271, 128
      %288 = vxpose.xlu0.b32.cont [7/16] %v272, 128
      %289 = vxpose.xlu0.b32.cont [8/16] %v273, 128
      %290 = vxpose.xlu0.b32.cont [9/16] %v274, 128
      %291 = vxpose.xlu0.b32.cont [10/16] %v275, 128
      %292 = vxpose.xlu0.b32.cont [11/16] %v276, 128
      %293 = vxpose.xlu0.b32.cont [12/16] %v277, 128
      %294 = vxpose.xlu0.b32.cont [13/16] %v278, 128
      %295 = vxpose.xlu0.b32.cont [14/16] %v279, 128
      %296 = vxpose.xlu0.b32.cont [15/16] %v280, 128
      %297 = vxpose.xlu0.b32.end [16/16] %v281, 128
      %v298 = vpop.trf.xlu0
      %v299 = vpop.trf.xlu0
      %v300 = vpop.trf.xlu0
      %v301 = vpop.trf.xlu0
      %v302 = vpop.trf.xlu0
      %v303 = vpop.trf.xlu0
      %v304 = vpop.trf.xlu0
      %v305 = vpop.trf.xlu0
      %v306 = vpop.trf.xlu0
      %v307 = vpop.trf.xlu0
      %v308 = vpop.trf.xlu0
      %v309 = vpop.trf.xlu0
      %v310 = vpop.trf.xlu0
      %v311 = vpop.trf.xlu0
      %v312 = vpop.trf.xlu0
      %v313 = vpop.trf.xlu0
      %314 = vst [vmem:[%s209] sm:$0xff] %v298
      %p315 = scmp.lt.s32.totalorder %s18, 1
      %s316 = scalar_select %p315, %s18, 1
      %p317 = scmp.lt.s32.totalorder %s19, 1
      %s318 = scalar_select %p317, %s19, 1
      %s319 = smul.addr %s316, 2
      %s320 = sadd.s32 %s318, %s319
      %s321 = smul.addr %s320, 8
      %s322 = scalar_lea.vmem %s3, %s321
      // Predicated region
      $region33: #{_double_conv_impl.5} parent=31 // pred_check
        %p323 = pneg %p116
      $region34: #{_double_conv_impl.5} parent=31 // pred_check_branch
        %325 = sbr.rel (%p323) target = $region36
      $region35: #{_double_conv_impl.5} parent=31 // pred_region
        _
      $region36: #{_double_conv_impl.5} parent=31 // pred_fallthru
        _
    $region32: #{_double_conv_impl.5} parent=5 // pred_fallthru
      _
    %p326 = scmp.le.s32.totalorder 2, %s9
    // Predicated region
    $region37: #{_double_conv_impl.5} parent=5 // pred_check
      %p327 = pneg %p326
    $region38: #{_double_conv_impl.5} parent=5 // pred_check_branch
      %329 = sbr.rel (%p327) target = $region40
    $region39: #{_double_conv_impl.5} parent=5 // pred_region
      %s330 = ssub.s32 %s9, 2
      // Predicated region
      $region41: #{_double_conv_impl.5} parent=39 // pred_check
        %p331 = pneg %p122
      $region42: #{_double_conv_impl.5} parent=39 // pred_check_branch
        %333 = sbr.rel (%p331) target = $region44
      $region43: #{_double_conv_impl.5} parent=39 // pred_region
        %p334 = scmp.lt.s32.totalorder %s20, 1
        %s335 = scalar_select %p334, %s20, 1
        %p336 = scmp.lt.s32.totalorder %s21, 1
        %s337 = scalar_select %p336, %s21, 1
        %s338 = smul.addr %s335, 2
        %s339 = sadd.s32 %s337, %s338
        %s340 = smul.addr %s339, 8
        %s341 = scalar_lea.vmem %s3, %s340
      $region44: #{_double_conv_impl.5} parent=39 // pred_fallthru
        _
    $region40: #{_double_conv_impl.5} parent=5 // pred_fallthru
      _
  $region6: #{_double_conv_impl.5} parent=0 // loop_footer
    %s13 = sadd.s32 1, %s9
  $region7: #{_double_conv_impl.5} parent=0 // loop_footer_branch
    %8 = sbr.rel target = $region3
  $region8: #{_double_conv_impl.5} parent=0 // loop_exit
    _

// kernel: _double_conv_impl.4
$region0: #{_double_conv_impl.4}
  #allocation0 [shape = 'u32[]', space=smem, size = 0x4, offset = 0x4, fixed_abs, tag = 'smem constant byte address 0x4 - core index']
  #allocation1 [shape = 'u32[72,128]{1,0:T(1,128)}', space=vmem, size = 0x9000, scoped, tag = 'internal scratch']
  #allocation2 [shape = 'f32[10,18,8]{2,1,0:T(8,128)}', space=vmem, size = 0x1e000, scoped, tag = 'scratch operand']
  #allocation3 [shape = 'f32[128,24]{1,0:T(8,128)}', space=vmem, size = 0x10000, scoped, tag = 'scratch operand']
  %s0 = inlined_call_operand.vmem [shape: f32[2,16,16,8], index: 0, kind: input, shape index: {}]
  %s1 = inlined_call_operand.vmem [shape: f32[1,8], index: 1, kind: input, shape index: {}]
  %s2 = inlined_call_operand.vmem [shape: f32[1,8], index: 2, kind: input, shape index: {}]
  %s3 = inlined_call_operand.vmem [shape: f32[3,24,8], index: 3, kind: input, shape index: {}]
  %s4 = inlined_call_operand.vmem [shape: f32[2,16,16,8], index: 4, kind: output, shape index: {0}]
  %s5 = inlined_call_operand.vmem [shape: f32[2,2,2,8], index: 5, kind: output, shape index: {1}]
  %6 = xla_tuple %s4, %s5
  %s7 = sld [smem:[#allocation0]]
  $region73: #{_double_conv_impl.4} parent=0
    _
  %s9 = ssub.s32 1, %s7
  %s10 = scalar_select 0, %s9, %s7
  loop: start=0, step=1, limit=6
  $region2: #{_double_conv_impl.4} parent=0 // loop_pre_header
    _
  $region3: #{_double_conv_impl.4} parent=0 // loop_header
    %s12 = sphi 0, %s16
    %p13 = scmp.ge.s32.totalorder %s12, 6
    %s19 = sphi 0, %s31
    %s20 = sphi 0, %s27
    %s21 = sphi 0, %s19
    %s22 = sphi 0, %s20
    %s23 = sphi 0, %s21
    %s24 = sphi 0, %s22
    %s34 = sphi 0, %s36
    %s37 = sphi 0, %s34
    %s38 = sphi 0, %s37
    %s54 = sphi 0, %s38
    %s58 = sphi 0, %s58
    %s60 = sphi 0, %s58
    %s61 = sphi 0, %s60
    %s75 = sphi 0, %s61
    %s79 = sphi 0, %s79
    %s81 = sphi 0, %s79
    %s82 = sphi 0, %s81
    %s96 = sphi 0, %s82
    %s100 = sphi 0, %s100
    %s102 = sphi 0, %s100
    %s103 = sphi 0, %s102
    %s117 = sphi 0, %s103
    %s125 = sphi 0, %s127
    %s128 = sphi 0, %s125
    %s129 = sphi 0, %s128
    %s145 = sphi 0, %s129
    %s153 = sphi 0, %s155
    %s156 = sphi 0, %s153
    %s157 = sphi 0, %s156
    %s173 = sphi 0, %s157
  $region4: #{_double_conv_impl.4} parent=0 // loop_header_branch
    %15 = sbr.rel (%p13) target = $region8
  $region5: #{_double_conv_impl.4} parent=0 // loop_body
    %s17 = ssub.s32 %s12, 1
    %s18 = ssub.s32 %s12, 2
    %s25 = sadd.s32 1, %s20
    %p26 = scmp.ge.s32.totalorder %s25, 2
    %s27 = scalar_select %p26, 0, %s25
    %s28 = sadd.s32 1, %s19
    %s29 = scalar_select %p26, %s28, %s19
    %p30 = scmp.ge.s32.totalorder %s29, 2
    %s31 = scalar_select %p30, 0, %s29
    %s32 = ssub.s32 %s19, %s31
    %p33 = scmp.eq.s32.totalorder %s32, 0
    %s35 = sadd.s32 %s34, 1
    %s36 = scalar_select %p33, %s34, %s35
    %p39 = pneg %p33
    %p40 = scmp.eq.s32.totalorder %s12, 3
    %p41 = por %p39, %p40
    %p42 = scmp.ne.s32.totalorder %s34, %s37
    %p43 = scmp.eq.s32.totalorder %s12, 0
    %p44 = por %p42, %p43
    %p45 = scmp.ne.s32.totalorder %s34, %s37
    %p46 = scmp.eq.s32.totalorder %s17, 3
    %p47 = por %p45, %p46
    %p48 = scmp.ne.s32.totalorder %s37, %s38
    %p49 = scmp.eq.s32.totalorder %s17, 0
    %p50 = por %p48, %p49
    %p51 = scmp.ne.s32.totalorder %s37, %s38
    %p52 = scmp.eq.s32.totalorder %s18, 3
    %p53 = por %p51, %p52
    %p55 = scmp.ne.s32.totalorder %s38, %s54
    %p56 = scmp.eq.s32.totalorder %s18, 0
    %p57 = por %p55, %p56
    %s59 = sadd.s32 %s58, 1
    %p62 = scmp.eq.s32.totalorder %s12, 3
    %p63 = scmp.ne.s32.totalorder %s58, %s60
    %p64 = scmp.eq.s32.totalorder %s12, 0
    %p65 = por %p63, %p64
    %p66 = scmp.ne.s32.totalorder %s58, %s60
    %p67 = scmp.eq.s32.totalorder %s17, 3
    %p68 = por %p66, %p67
    %p69 = scmp.ne.s32.totalorder %s60, %s61
    %p70 = scmp.eq.s32.totalorder %s17, 0
    %p71 = por %p69, %p70
    %p72 = scmp.ne.s32.totalorder %s60, %s61
    %p73 = scmp.eq.s32.totalorder %s18, 3
    %p74 = por %p72, %p73
    %p76 = scmp.ne.s32.totalorder %s61, %s75
    %p77 = scmp.eq.s32.totalorder %s18, 0
    %p78 = por %p76, %p77
    %s80 = sadd.s32 %s79, 1
    %p83 = scmp.eq.s32.totalorder %s12, 3
    %p84 = scmp.ne.s32.totalorder %s79, %s81
    %p85 = scmp.eq.s32.totalorder %s12, 0
    %p86 = por %p84, %p85
    %p87 = scmp.ne.s32.totalorder %s79, %s81
    %p88 = scmp.eq.s32.totalorder %s17, 3
    %p89 = por %p87, %p88
    %p90 = scmp.ne.s32.totalorder %s81, %s82
    %p91 = scmp.eq.s32.totalorder %s17, 0
    %p92 = por %p90, %p91
    %p93 = scmp.ne.s32.totalorder %s81, %s82
    %p94 = scmp.eq.s32.totalorder %s18, 3
    %p95 = por %p93, %p94
    %p97 = scmp.ne.s32.totalorder %s82, %s96
    %p98 = scmp.eq.s32.totalorder %s18, 0
    %p99 = por %p97, %p98
    %s101 = sadd.s32 %s100, 1
    %p104 = scmp.eq.s32.totalorder %s12, 3
    %p105 = scmp.ne.s32.totalorder %s100, %s102
    %p106 = scmp.eq.s32.totalorder %s12, 0
    %p107 = por %p105, %p106
    %p108 = scmp.ne.s32.totalorder %s100, %s102
    %p109 = scmp.eq.s32.totalorder %s17, 3
    %p110 = por %p108, %p109
    %p111 = scmp.ne.s32.totalorder %s102, %s103
    %p112 = scmp.eq.s32.totalorder %s17, 0
    %p113 = por %p111, %p112
    %p114 = scmp.ne.s32.totalorder %s102, %s103
    %p115 = scmp.eq.s32.totalorder %s18, 3
    %p116 = por %p114, %p115
    %p118 = scmp.ne.s32.totalorder %s103, %s117
    %p119 = scmp.eq.s32.totalorder %s18, 0
    %p120 = por %p118, %p119
    %s121 = ssub.s32 %s19, %s31
    %s122 = ssub.s32 %s20, %s27
    %s123 = sor.u32 %s121, %s122
    %p124 = scmp.eq.s32.totalorder %s123, 0
    %s126 = sadd.s32 %s125, 1
    %s127 = scalar_select %p124, %s125, %s126
    %p130 = pneg %p124
    %p131 = scmp.eq.s32.totalorder %s12, 3
    %p132 = por %p130, %p131
    %p133 = scmp.ne.s32.totalorder %s125, %s128
    %p134 = scmp.eq.s32.totalorder %s12, 0
    %p135 = por %p133, %p134
    %p136 = scmp.ne.s32.totalorder %s125, %s128
    %p137 = scmp.eq.s32.totalorder %s17, 3
    %p138 = por %p136, %p137
    %p139 = scmp.ne.s32.totalorder %s128, %s129
    %p140 = scmp.eq.s32.totalorder %s17, 0
    %p141 = por %p139, %p140
    %p142 = scmp.ne.s32.totalorder %s128, %s129
    %p143 = scmp.eq.s32.totalorder %s18, 3
    %p144 = por %p142, %p143
    %p146 = scmp.ne.s32.totalorder %s129, %s145
    %p147 = scmp.eq.s32.totalorder %s18, 0
    %p148 = por %p146, %p147
    %s149 = ssub.s32 %s19, %s31
    %s150 = ssub.s32 %s20, %s27
    %s151 = sor.u32 %s149, %s150
    %p152 = scmp.eq.s32.totalorder %s151, 0
    %s154 = sadd.s32 %s153, 1
    %s155 = scalar_select %p152, %s153, %s154
    %p158 = pneg %p152
    %p159 = scmp.eq.s32.totalorder %s12, 3
    %p160 = por %p158, %p159
    %p161 = scmp.ne.s32.totalorder %s153, %s156
    %p162 = scmp.eq.s32.totalorder %s12, 0
    %p163 = por %p161, %p162
    %p164 = scmp.ne.s32.totalorder %s153, %s156
    %p165 = scmp.eq.s32.totalorder %s17, 3
    %p166 = por %p164, %p165
    %p167 = scmp.ne.s32.totalorder %s156, %s157
    %p168 = scmp.eq.s32.totalorder %s17, 0
    %p169 = por %p167, %p168
    %p170 = scmp.ne.s32.totalorder %s156, %s157
    %p171 = scmp.eq.s32.totalorder %s18, 3
    %p172 = por %p170, %p171
    %p174 = scmp.ne.s32.totalorder %s157, %s173
    %p175 = scmp.eq.s32.totalorder %s18, 0
    %p176 = por %p174, %p175
    %p177 = scmp.le.s32.totalorder 1, %s12
    %p178 = scmp.lt.s32.totalorder %s12, 5
    %p179 = pnand %p177, %p178
    %p180 = pneg %p179
    // Predicated region
    $region9: #{_double_conv_impl.4} parent=5 // pred_check
      _
    $region10: #{_double_conv_impl.4} parent=5 // pred_check_branch
      %182 = sbr.rel (%p179) target = $region12
    $region11: #{_double_conv_impl.4} parent=5 // pred_region
      %s183 = ssub.s32 %s12, 1
      // Predicated region
      $region13: #{_double_conv_impl.4} parent=11 // pred_check
        %p184 = pneg %p71
      $region14: #{_double_conv_impl.4} parent=11 // pred_check_branch
        %186 = sbr.rel (%p184) target = $region16
      $region15: #{_double_conv_impl.4} parent=11 // pred_region
        _
      $region16: #{_double_conv_impl.4} parent=11 // pred_fallthru
        _
      // Predicated region
      $region17: #{_double_conv_impl.4} parent=11 // pred_check
        %p187 = pneg %p92
      $region18: #{_double_conv_impl.4} parent=11 // pred_check_branch
        %189 = sbr.rel (%p187) target = $region20
      $region19: #{_double_conv_impl.4} parent=11 // pred_region
        _
      $region20: #{_double_conv_impl.4} parent=11 // pred_fallthru
        _
      // Predicated region
      $region21: #{_double_conv_impl.4} parent=11 // pred_check
        %p190 = pneg %p113
      $region22: #{_double_conv_impl.4} parent=11 // pred_check_branch
        %192 = sbr.rel (%p190) target = $region24
      $region23: #{_double_conv_impl.4} parent=11 // pred_region
        _
      $region24: #{_double_conv_impl.4} parent=11 // pred_fallthru
        _
    $region12: #{_double_conv_impl.4} parent=5 // pred_fallthru
      _
    %p193 = scmp.lt.s32.totalorder %s12, 4
    // Predicated region
    $region25: #{_double_conv_impl.4} parent=5 // pred_check
      %p194 = pneg %p193
    $region26: #{_double_conv_impl.4} parent=5 // pred_check_branch
      %196 = sbr.rel (%p194) target = $region28
    $region27: #{_double_conv_impl.4} parent=5 // pred_region
      // Predicated region
      $region29: #{_double_conv_impl.4} parent=27 // pred_check
        %p197 = pneg %p44
      $region30: #{_double_conv_impl.4} parent=27 // pred_check_branch
        %199 = sbr.rel (%p197) target = $region32
      $region31: #{_double_conv_impl.4} parent=27 // pred_region
        %p200 = scmp.lt.s32.totalorder %s19, 1
        %s201 = scalar_select %p200, %s19, 1
        %s202 = smul.addr %s201, 32
        %s203 = smul.addr %s202, 8
        %s204 = scalar_lea.vmem %s0, %s203
      $region32: #{_double_conv_impl.4} parent=27 // pred_fallthru
        _
    $region28: #{_double_conv_impl.4} parent=5 // pred_fallthru
      _
    %p205 = scmp.le.s32.totalorder 1, %s12
    %p206 = scmp.lt.s32.totalorder %s12, 5
    %p207 = pnand %p205, %p206
    %p208 = pneg %p207
    // Predicated region
    $region33: #{_double_conv_impl.4} parent=5 // pred_check
      _
    $region34: #{_double_conv_impl.4} parent=5 // pred_check_branch
      %210 = sbr.rel (%p207) target = $region36
    $region35: #{_double_conv_impl.4} parent=5 // pred_region
      %s211 = ssub.s32 %s12, 1
      %p212 = scmp.lt.s32.totalorder %s21, 1
      %s213 = scalar_select %p212, %s21, 1
      %s214 = smul.addr %s213, 32
      %s215 = smul.addr %s214, 8
      %s216 = scalar_lea.vmem %s0, %s215
      %p217 = pneg %p50
      %p218 = pneg %p47
      %p219 = pneg %p71
      %p220 = pneg %p68
      %p221 = pneg %p92
      %p222 = pneg %p89
      %p223 = pneg %p113
      %p224 = pneg %p110
      %p225 = pneg %p141
      %p226 = pneg %p138
      %s227 = smul.u32 8, %s22
      %p228 = scmp.lt.s32.totalorder %s21, 1
      %s229 = scalar_select %p228, %s21, 1
      %p230 = scmp.lt.s32.totalorder %s227, 15
      %s231 = scalar_select %p230, %s227, 15
      %s232 = smul.addr %s231, 2
      %s233 = smul.addr %s229, 32
      %s234 = sadd.s32 %s232, %s233
      %s235 = smul.addr %s234, 8
      %s236 = scalar_lea.vmem %s4, %s235
      %p237 = pneg %p169
      %p238 = pneg %p166
      %p239 = scmp.lt.s32.totalorder %s21, 1
      %s240 = scalar_select %p239, %s21, 1
      %p241 = scmp.lt.s32.totalorder %s22, 1
      %s242 = scalar_select %p241, %s22, 1
      %s243 = smul.addr %s240, 2
      %s244 = sadd.s32 %s242, %s243
      %s245 = smul.addr %s244, 2
      %s246 = scalar_lea.vmem %s5, %s245
      %p247 = scmp.lt.s32.totalorder %s21, 1
      %s248 = scalar_select %p247, %s21, 1
      %s249 = smul.addr %s248, 32
      %s250 = smul.addr %s249, 8
      %s251 = scalar_lea.vmem %s0, %s250
      %s252 = smul.u32 8, %s22
      %p253 = scmp.lt.s32.totalorder %s21, 1
      %s254 = scalar_select %p253, %s21, 1
      %p255 = scmp.lt.s32.totalorder %s252, 15
      %s256 = scalar_select %p255, %s252, 15
      %s257 = smul.addr %s256, 2
      %s258 = smul.addr %s254, 32
      %s259 = sadd.s32 %s257, %s258
      %s260 = smul.addr %s259, 8
      %s261 = scalar_lea.vmem %s4, %s260
      %s262 = smul.u32 8, %s22
      %p263 = scmp.lt.s32.totalorder %s21, 1
      %s264 = scalar_select %p263, %s21, 1
      %p265 = scmp.lt.s32.totalorder %s22, 1
      %s266 = scalar_select %p265, %s22, 1
      %s267 = smul.addr %s264, 2
      %s268 = sadd.s32 %s266, %s267
      %s269 = smul.addr %s268, 2
      %s270 = scalar_lea.vmem %s5, %s269
      %s271 = smul.u32 %s22, 8
      %vm272 = vcmask 57344
      %273 = vst.msk [vmem:[#allocation2] sm:$0x1] %vm272, 0.0
      %274 = vst.msk [vmem:[#allocation2 + $0x18] sm:$0x1] %vm272, 0.0
      %275 = vst.msk [vmem:[#allocation2 + $0x30] sm:$0x1] %vm272, 0.0
      %276 = vst.msk [vmem:[#allocation2 + $0x48] sm:$0x1] %vm272, 0.0
      %277 = vst.msk [vmem:[#allocation2 + $0x60] sm:$0x1] %vm272, 0.0
      %278 = vst.msk [vmem:[#allocation2 + $0x78] sm:$0x1] %vm272, 0.0
      %279 = vst.msk [vmem:[#allocation2 + $0x90] sm:$0x1] %vm272, 0.0
      %280 = vst.msk [vmem:[#allocation2 + $0xa8] sm:$0x1] %vm272, 0.0
      %281 = vst.msk [vmem:[#allocation2 + $0xc0] sm:$0x1] %vm272, 0.0
      %282 = vst.msk [vmem:[#allocation2 + $0xd8] sm:$0x1] %vm272, 0.0
      %283 = vst.msk [vmem:[#allocation2 + $0x11] sm:$0x1] %vm272, 0.0
      %284 = vst.msk [vmem:[#allocation2 + $0x29] sm:$0x1] %vm272, 0.0
      %285 = vst.msk [vmem:[#allocation2 + $0x41] sm:$0x1] %vm272, 0.0
      %286 = vst.msk [vmem:[#allocation2 + $0x59] sm:$0x1] %vm272, 0.0
      %287 = vst.msk [vmem:[#allocation2 + $0x71] sm:$0x1] %vm272, 0.0
      %288 = vst.msk [vmem:[#allocation2 + $0x89] sm:$0x1] %vm272, 0.0
      %289 = vst.msk [vmem:[#allocation2 + $0xa1] sm:$0x1] %vm272, 0.0
      %290 = vst.msk [vmem:[#allocation2 + $0xb9] sm:$0x1] %vm272, 0.0
      %291 = vst.msk [vmem:[#allocation2 + $0xd1] sm:$0x1] %vm272, 0.0
      %292 = vst.msk [vmem:[#allocation2 + $0xe9] sm:$0x1] %vm272, 0.0
      %s293 = smul.u32 %s271, 16
      %s294 = scalar_lea.vmem %s251, %s293
      %v295 = vld [vmem:[%s294] sm:$0xff]
      %v296 = vld [vmem:[%s294 + $0x8] sm:$0xff]
      %v297 = vld [vmem:[%s294 + $0x10] sm:$0xff]
      %v298 = vld [vmem:[%s294 + $0x18] sm:$0xff]
      %v299 = vld [vmem:[%s294 + $0x20] sm:$0xff]
      %v300 = vld [vmem:[%s294 + $0x28] sm:$0xff]
      %v301 = vld [vmem:[%s294 + $0x30] sm:$0xff]
      %v302 = vld [vmem:[%s294 + $0x38] sm:$0xff]
      %v303 = vld [vmem:[%s294 + $0x40] sm:$0xff]
      %v304 = vld [vmem:[%s294 + $0x48] sm:$0xff]
      %v305 = vld [vmem:[%s294 + $0x50] sm:$0xff]
      %v306 = vld [vmem:[%s294 + $0x58] sm:$0xff]
      %v307 = vld [vmem:[%s294 + $0x60] sm:$0xff]
      %v308 = vld [vmem:[%s294 + $0x68] sm:$0xff]
      %v309 = vld [vmem:[%s294 + $0x70] sm:$0xff]
      %v310 = vld [vmem:[%s294 + $0x78] sm:$0xff]
      %v311 = vld [vmem:[%s1] sm:$0x1]
      %v313 = vperm.slane %v311, 0
      %v315 = vmul.f32 %v295, %v313
      %v316 = vmul.f32 %v296, %v313
      %v317 = vmul.f32 %v297, %v313
      %v318 = vmul.f32 %v298, %v313
      %v319 = vmul.f32 %v299, %v313
      %v320 = vmul.f32 %v300, %v313
      %v321 = vmul.f32 %v301, %v313
      %v322 = vmul.f32 %v302, %v313
      %v323 = vmul.f32 %v303, %v313
      %v324 = vmul.f32 %v304, %v313
      %v325 = vmul.f32 %v305, %v313
      %v326 = vmul.f32 %v306, %v313
      %v327 = vmul.f32 %v307, %v313
      %v328 = vmul.f32 %v308, %v313
      %v329 = vmul.f32 %v309, %v313
      %v330 = vmul.f32 %v310, %v313
      %v331 = vld [vmem:[%s2] sm:$0x1]
      %v333 = vperm.slane %v331, 0
      %v335 = vadd.f32 %v315, %v333
      %v336 = vadd.f32 %v316, %v333
      %v337 = vadd.f32 %v317, %v333
      %v338 = vadd.f32 %v318, %v333
      %v339 = vadd.f32 %v319, %v333
      %v340 = vadd.f32 %v320, %v333
      %v341 = vadd.f32 %v321, %v333
      %v342 = vadd.f32 %v322, %v333
      %v343 = vadd.f32 %v323, %v333
      %v344 = vadd.f32 %v324, %v333
      %v345 = vadd.f32 %v325, %v333
      %v346 = vadd.f32 %v326, %v333
      %v347 = vadd.f32 %v327, %v333
      %v348 = vadd.f32 %v328, %v333
      %v349 = vadd.f32 %v329, %v333
      %v350 = vadd.f32 %v330, %v333
      %v351 = vmax.f32 %v335, 0.0
      %v352 = vmax.f32 %v336, 0.0
      %v353 = vmax.f32 %v337, 0.0
      %v354 = vmax.f32 %v338, 0.0
      %v355 = vmax.f32 %v339, 0.0
      %v356 = vmax.f32 %v340, 0.0
      %v357 = vmax.f32 %v341, 0.0
      %v358 = vmax.f32 %v342, 0.0
      %v359 = vmax.f32 %v343, 0.0
      %v360 = vmax.f32 %v344, 0.0
      %v361 = vmax.f32 %v345, 0.0
      %v362 = vmax.f32 %v346, 0.0
      %v363 = vmax.f32 %v347, 0.0
      %v364 = vmax.f32 %v348, 0.0
      %v365 = vmax.f32 %v349, 0.0
      %v366 = vmax.f32 %v350, 0.0
      %s367 = scalar_lea.vmem [#allocation2], 24
      %vm368 = vcmask 64512
      %369 = vst.msk [vmem:[%s367 + $0x1] sm:$0xff] %vm368, %v351
      %370 = vst.msk [vmem:[%s367 + $0x9] sm:$0xff] %vm368, %v352
      %371 = vst.msk [vmem:[%s367 + $0x19] sm:$0xff] %vm368, %v353
      %372 = vst.msk [vmem:[%s367 + $0x21] sm:$0xff] %vm368, %v354
      %373 = vst.msk [vmem:[%s367 + $0x31] sm:$0xff] %vm368, %v355
      %374 = vst.msk [vmem:[%s367 + $0x39] sm:$0xff] %vm368, %v356
      %375 = vst.msk [vmem:[%s367 + $0x49] sm:$0xff] %vm368, %v357
      %376 = vst.msk [vmem:[%s367 + $0x51] sm:$0xff] %vm368, %v358
      %377 = vst.msk [vmem:[%s367 + $0x61] sm:$0xff] %vm368, %v359
      %378 = vst.msk [vmem:[%s367 + $0x69] sm:$0xff] %vm368, %v360
      %379 = vst.msk [vmem:[%s367 + $0x79] sm:$0xff] %vm368, %v361
      %380 = vst.msk [vmem:[%s367 + $0x81] sm:$0xff] %vm368, %v362
      %381 = vst.msk [vmem:[%s367 + $0x91] sm:$0xff] %vm368, %v363
      %382 = vst.msk [vmem:[%s367 + $0x99] sm:$0xff] %vm368, %v364
      %383 = vst.msk [vmem:[%s367 + $0xa9] sm:$0xff] %vm368, %v365
      %384 = vst.msk [vmem:[%s367 + $0xb1] sm:$0xff] %vm368, %v366
      %p385 = scmp.eq.s32.totalorder %s22, 0
      // Predicated region
      $region37: #{_double_conv_impl.4} parent=35 // pred_check
        %p386 = pneg %p385
      $region38: #{_double_conv_impl.4} parent=35 // pred_check_branch
        %388 = sbr.rel (%p386) target = $region40
      $region39: #{_double_conv_impl.4} parent=35 // pred_region
        %389 = vst.msk [vmem:[#allocation2 + $0x1] sm:$0xff] %vm368, 0.0
        %390 = vst.msk [vmem:[#allocation2 + $0x9] sm:$0xff] %vm368, 0.0
      $region40: #{_double_conv_impl.4} parent=35 // pred_fallthru
        _
      %p391 = scmp.gt.s32.totalorder %s22, 0
      // Predicated region
      $region41: #{_double_conv_impl.4} parent=35 // pred_check
        %p392 = pneg %p391
      $region42: #{_double_conv_impl.4} parent=35 // pred_check_branch
        %394 = sbr.rel (%p392) target = $region44
      $region43: #{_double_conv_impl.4} parent=35 // pred_region
        %s395 = ssub.s32 %s271, 1
        %s396 = smul.u32 %s395, 16
        %s397 = scalar_lea.vmem %s251, %s396
        %v398 = vld [vmem:[%s397] sm:$0xff]
        %v399 = vld [vmem:[%s397 + $0x8] sm:$0xff]
        %v400 = vld [vmem:[%s1] sm:$0x1]
        %v402 = vperm.slane %v400, 0
        %v404 = vmul.f32 %v398, %v402
        %v405 = vmul.f32 %v399, %v402
        %v406 = vld [vmem:[%s2] sm:$0x1]
        %v408 = vperm.slane %v406, 0
        %v410 = vadd.f32 %v404, %v408
        %v411 = vadd.f32 %v405, %v408
        %v412 = vmax.f32 %v410, 0.0
        %v413 = vmax.f32 %v411, 0.0
        %414 = vst.msk [vmem:[#allocation2 + $0x1] sm:$0xff] %vm368, %v412
        %415 = vst.msk [vmem:[#allocation2 + $0x9] sm:$0xff] %vm368, %v413
      $region44: #{_double_conv_impl.4} parent=35 // pred_fallthru
        _
      %p416 = scmp.eq.s32.totalorder %s22, 1
      // Predicated region
      $region45: #{_double_conv_impl.4} parent=35 // pred_check
        %p417 = pneg %p416
      $region46: #{_double_conv_impl.4} parent=35 // pred_check_branch
        %419 = sbr.rel (%p417) target = $region48
      $region47: #{_double_conv_impl.4} parent=35 // pred_region
        %s420 = scalar_lea.vmem [#allocation2], 216
        %421 = vst.msk [vmem:[%s420 + $0x1] sm:$0xff] %vm368, 0.0
        %422 = vst.msk [vmem:[%s420 + $0x9] sm:$0xff] %vm368, 0.0
      $region48: #{_double_conv_impl.4} parent=35 // pred_fallthru
        _
      %p423 = scmp.lt.s32.totalorder %s22, 1
      // Predicated region
      $region49: #{_double_conv_impl.4} parent=35 // pred_check
        %p424 = pneg %p423
      $region50: #{_double_conv_impl.4} parent=35 // pred_check_branch
        %426 = sbr.rel (%p424) target = $region52
      $region51: #{_double_conv_impl.4} parent=35 // pred_region
        %s427 = sadd.s32 %s271, 8
        %s428 = smul.u32 %s427, 16
        %s429 = scalar_lea.vmem %s251, %s428
        %v430 = vld [vmem:[%s429] sm:$0xff]
        %v431 = vld [vmem:[%s429 + $0x8] sm:$0xff]
        %v432 = vld [vmem:[%s1] sm:$0x1]
        %v434 = vperm.slane %v432, 0
        %v436 = vmul.f32 %v430, %v434
        %v437 = vmul.f32 %v431, %v434
        %v438 = vld [vmem:[%s2] sm:$0x1]
        %v440 = vperm.slane %v438, 0
        %v442 = vadd.f32 %v436, %v440
        %v443 = vadd.f32 %v437, %v440
        %v444 = vmax.f32 %v442, 0.0
        %v445 = vmax.f32 %v443, 0.0
        %s446 = scalar_lea.vmem [#allocation2], 216
        %447 = vst.msk [vmem:[%s446 + $0x1] sm:$0xff] %vm368, %v444
        %448 = vst.msk [vmem:[%s446 + $0x9] sm:$0xff] %vm368, %v445
      $region52: #{_double_conv_impl.4} parent=35 // pred_fallthru
        _
      %v449 = vld [vmem:[#allocation2] sm:$0xff]
      %v450 = vld [vmem:[#allocation2 + $0x8] sm:$0xff]
      %v451 = vld [vmem:[#allocation2 + $0x18] sm:$0xff]
      %v452 = vld [vmem:[#allocation2 + $0x20] sm:$0xff]
      %v453 = vld [vmem:[#allocation2 + $0x30] sm:$0xff]
      %v454 = vld [vmem:[#allocation2 + $0x38] sm:$0xff]
      %v455 = vld [vmem:[#allocation2 + $0x48] sm:$0xff]
      %v456 = vld [vmem:[#allocation2 + $0x50] sm:$0xff]
      %v457 = vld [vmem:[#allocation2 + $0x60] sm:$0xff]
      %v458 = vld [vmem:[#allocation2 + $0x68] sm:$0xff]
      %v459 = vld [vmem:[#allocation2 + $0x78] sm:$0xff]
      %v460 = vld [vmem:[#allocation2 + $0x80] sm:$0xff]
      %v461 = vld [vmem:[#allocation2 + $0x90] sm:$0xff]
      %v462 = vld [vmem:[#allocation2 + $0x98] sm:$0xff]
      %v463 = vld [vmem:[#allocation2 + $0xa8] sm:$0xff]
      %v464 = vld [vmem:[#allocation2 + $0xb0] sm:$0xff]
      %465 = vst.msk [vmem:[#allocation3] sm:$0xff] %vm368, %v449
      %466 = vst.msk [vmem:[#allocation3 + $0x8] sm:$0xff] %vm368, %v450
      %467 = vst.msk [vmem:[#allocation3 + $0x10] sm:$0xff] %vm368, %v451
      %468 = vst.msk [vmem:[#allocation3 + $0x18] sm:$0xff] %vm368, %v452
      %469 = vst.msk [vmem:[#allocation3 + $0x20] sm:$0xff] %vm368, %v453
      %470 = vst.msk [vmem:[#allocation3 + $0x28] sm:$0xff] %vm368, %v454
      %471 = vst.msk [vmem:[#allocation3 + $0x30] sm:$0xff] %vm368, %v455
      %472 = vst.msk [vmem:[#allocation3 + $0x38] sm:$0xff] %vm368, %v456
      %473 = vst.msk [vmem:[#allocation3 + $0x40] sm:$0xff] %vm368, %v457
      %474 = vst.msk [vmem:[#allocation3 + $0x48] sm:$0xff] %vm368, %v458
      %475 = vst.msk [vmem:[#allocation3 + $0x50] sm:$0xff] %vm368, %v459
      %476 = vst.msk [vmem:[#allocation3 + $0x58] sm:$0xff] %vm368, %v460
      %477 = vst.msk [vmem:[#allocation3 + $0x60] sm:$0xff] %vm368, %v461
      %478 = vst.msk [vmem:[#allocation3 + $0x68] sm:$0xff] %vm368, %v462
      %479 = vst.msk [vmem:[#allocation3 + $0x70] sm:$0xff] %vm368, %v463
      %480 = vst.msk [vmem:[#allocation3 + $0x78] sm:$0xff] %vm368, %v464
      %v481 = vld [vmem:[#allocation2 + $0x1] sm:$0xff]
      %v482 = vld [vmem:[#allocation2 + $0x9] sm:$0xff]
      %v483 = vld [vmem:[#allocation2 + $0x19] sm:$0xff]
      %v484 = vld [vmem:[#allocation2 + $0x21] sm:$0xff]
      %v485 = vld [vmem:[#allocation2 + $0x31] sm:$0xff]
      %v486 = vld [vmem:[#allocation2 + $0x39] sm:$0xff]
      %v487 = vld [vmem:[#allocation2 + $0x49] sm:$0xff]
      %v488 = vld [vmem:[#allocation2 + $0x51] sm:$0xff]
      %v489 = vld [vmem:[#allocation2 + $0x61] sm:$0xff]
      %v490 = vld [vmem:[#allocation2 + $0x69] sm:$0xff]
      %v491 = vld [vmem:[#allocation2 + $0x79] sm:$0xff]
      %v492 = vld [vmem:[#allocation2 + $0x81] sm:$0xff]
      %v493 = vld [vmem:[#allocation2 + $0x91] sm:$0xff]
      %v494 = vld [vmem:[#allocation2 + $0x99] sm:$0xff]
      %v495 = vld [vmem:[#allocation2 + $0xa9] sm:$0xff]
      %v496 = vld [vmem:[#allocation2 + $0xb1] sm:$0xff]
      %513 = vrot.lane.b32.xlu0 %v481, 8
      %v514 = vpop.permute.xlu0 %513
      %515 = vrot.lane.b32.xlu0 %v482, 8
      %v516 = vpop.permute.xlu0 %515
      %517 = vrot.lane.b32.xlu0 %v483, 8
      %v518 = vpop.permute.xlu0 %517
      %519 = vrot.lane.b32.xlu0 %v484, 8
      %v520 = vpop.permute.xlu0 %519
      %521 = vrot.lane.b32.xlu0 %v485, 8
      %v522 = vpop.permute.xlu0 %521
      %523 = vrot.lane.b32.xlu0 %v486, 8
      %v524 = vpop.permute.xlu0 %523
      %525 = vrot.lane.b32.xlu0 %v487, 8
      %v526 = vpop.permute.xlu0 %525
      %527 = vrot.lane.b32.xlu0 %v488, 8
      %v528 = vpop.permute.xlu0 %527
      %529 = vrot.lane.b32.xlu0 %v489, 8
      %v530 = vpop.permute.xlu0 %529
      %531 = vrot.lane.b32.xlu0 %v490, 8
      %v532 = vpop.permute.xlu0 %531
      %533 = vrot.lane.b32.xlu0 %v491, 8
      %v534 = vpop.permute.xlu0 %533
      %535 = vrot.lane.b32.xlu0 %v492, 8
      %v536 = vpop.permute.xlu0 %535
      %537 = vrot.lane.b32.xlu0 %v493, 8
      %v538 = vpop.permute.xlu0 %537
      %539 = vrot.lane.b32.xlu0 %v494, 8
      %v540 = vpop.permute.xlu0 %539
      %541 = vrot.lane.b32.xlu0 %v495, 8
      %v542 = vpop.permute.xlu0 %541
      %543 = vrot.lane.b32.xlu0 %v496, 8
      %v544 = vpop.permute.xlu0 %543
      %vm561 = vcmask 130112
      %562 = vst.msk [vmem:[#allocation3] sm:$0xff] %vm561, %v514
      %563 = vst.msk [vmem:[#allocation3 + $0x8] sm:$0xff] %vm561, %v516
      %564 = vst.msk [vmem:[#allocation3 + $0x10] sm:$0xff] %vm561, %v518
      %565 = vst.msk [vmem:[#allocation3 + $0x18] sm:$0xff] %vm561, %v520
      %566 = vst.msk [vmem:[#allocation3 + $0x20] sm:$0xff] %vm561, %v522
      %567 = vst.msk [vmem:[#allocation3 + $0x28] sm:$0xff] %vm561, %v524
      %568 = vst.msk [vmem:[#allocation3 + $0x30] sm:$0xff] %vm561, %v526
      %569 = vst.msk [vmem:[#allocation3 + $0x38] sm:$0xff] %vm561, %v528
      %570 = vst.msk [vmem:[#allocation3 + $0x40] sm:$0xff] %vm561, %v530
      %571 = vst.msk [vmem:[#allocation3 + $0x48] sm:$0xff] %vm561, %v532
      %572 = vst.msk [vmem:[#allocation3 + $0x50] sm:$0xff] %vm561, %v534
      %573 = vst.msk [vmem:[#allocation3 + $0x58] sm:$0xff] %vm561, %v536
      %574 = vst.msk [vmem:[#allocation3 + $0x60] sm:$0xff] %vm561, %v538
      %575 = vst.msk [vmem:[#allocation3 + $0x68] sm:$0xff] %vm561, %v540
      %576 = vst.msk [vmem:[#allocation3 + $0x70] sm:$0xff] %vm561, %v542
      %577 = vst.msk [vmem:[#allocation3 + $0x78] sm:$0xff] %vm561, %v544
      %v578 = vld [vmem:[#allocation2 + $0x2] sm:$0xff]
      %v579 = vld [vmem:[#allocation2 + $0xa] sm:$0xff]
      %v580 = vld [vmem:[#allocation2 + $0x1a] sm:$0xff]
      %v581 = vld [vmem:[#allocation2 + $0x22] sm:$0xff]
      %v582 = vld [vmem:[#allocation2 + $0x32] sm:$0xff]
      %v583 = vld [vmem:[#allocation2 + $0x3a] sm:$0xff]
      %v584 = vld [vmem:[#allocation2 + $0x4a] sm:$0xff]
      %v585 = vld [vmem:[#allocation2 + $0x52] sm:$0xff]
      %v586 = vld [vmem:[#allocation2 + $0x62] sm:$0xff]
      %v587 = vld [vmem:[#allocation2 + $0x6a] sm:$0xff]
      %v588 = vld [vmem:[#allocation2 + $0x7a] sm:$0xff]
      %v589 = vld [vmem:[#allocation2 + $0x82] sm:$0xff]
      %v590 = vld [vmem:[#allocation2 + $0x92] sm:$0xff]
      %v591 = vld [vmem:[#allocation2 + $0x9a] sm:$0xff]
      %v592 = vld [vmem:[#allocation2 + $0xaa] sm:$0xff]
      %v593 = vld [vmem:[#allocation2 + $0xb2] sm:$0xff]
      %610 = vrot.lane.b32.xlu0 %v578, 16
      %v611 = vpop.permute.xlu0 %610
      %612 = vrot.lane.b32.xlu0 %v579, 16
      %v613 = vpop.permute.xlu0 %612
      %614 = vrot.lane.b32.xlu0 %v580, 16
      %v615 = vpop.permute.xlu0 %614
      %616 = vrot.lane.b32.xlu0 %v581, 16
      %v617 = vpop.permute.xlu0 %616
      %618 = vrot.lane.b32.xlu0 %v582, 16
      %v619 = vpop.permute.xlu0 %618
      %620 = vrot.lane.b32.xlu0 %v583, 16
      %v621 = vpop.permute.xlu0 %620
      %622 = vrot.lane.b32.xlu0 %v584, 16
      %v623 = vpop.permute.xlu0 %622
      %624 = vrot.lane.b32.xlu0 %v585, 16
      %v625 = vpop.permute.xlu0 %624
      %626 = vrot.lane.b32.xlu0 %v586, 16
      %v627 = vpop.permute.xlu0 %626
      %628 = vrot.lane.b32.xlu0 %v587, 16
      %v629 = vpop.permute.xlu0 %628
      %630 = vrot.lane.b32.xlu0 %v588, 16
      %v631 = vpop.permute.xlu0 %630
      %632 = vrot.lane.b32.xlu0 %v589, 16
      %v633 = vpop.permute.xlu0 %632
      %634 = vrot.lane.b32.xlu0 %v590, 16
      %v635 = vpop.permute.xlu0 %634
      %636 = vrot.lane.b32.xlu0 %v591, 16
      %v637 = vpop.permute.xlu0 %636
      %638 = vrot.lane.b32.xlu0 %v592, 16
      %v639 = vpop.permute.xlu0 %638
      %640 = vrot.lane.b32.xlu0 %v593, 16
      %v641 = vpop.permute.xlu0 %640
      %vm658 = vcmask 195712
      %659 = vst.msk [vmem:[#allocation3] sm:$0xff] %vm658, %v611
      %660 = vst.msk [vmem:[#allocation3 + $0x8] sm:$0xff] %vm658, %v613
      %661 = vst.msk [vmem:[#allocation3 + $0x10] sm:$0xff] %vm658, %v615
      %662 = vst.msk [vmem:[#allocation3 + $0x18] sm:$0xff] %vm658, %v617
      %663 = vst.msk [vmem:[#allocation3 + $0x20] sm:$0xff] %vm658, %v619
      %664 = vst.msk [vmem:[#allocation3 + $0x28] sm:$0xff] %vm658, %v621
      %665 = vst.msk [vmem:[#allocation3 + $0x30] sm:$0xff] %vm658, %v623
      %666 = vst.msk [vmem:[#allocation3 + $0x38] sm:$0xff] %vm658, %v625
      %667 = vst.msk [vmem:[#allocation3 + $0x40] sm:$0xff] %vm658, %v627
      %668 = vst.msk [vmem:[#allocation3 + $0x48] sm:$0xff] %vm658, %v629
      %669 = vst.msk [vmem:[#allocation3 + $0x50] sm:$0xff] %vm658, %v631
      %670 = vst.msk [vmem:[#allocation3 + $0x58] sm:$0xff] %vm658, %v633
      %671 = vst.msk [vmem:[#allocation3 + $0x60] sm:$0xff] %vm658, %v635
      %672 = vst.msk [vmem:[#allocation3 + $0x68] sm:$0xff] %vm658, %v637
      %673 = vst.msk [vmem:[#allocation3 + $0x70] sm:$0xff] %vm658, %v639
      %674 = vst.msk [vmem:[#allocation3 + $0x78] sm:$0xff] %vm658, %v641
      %v675 = vld [vmem:[#allocation3] sm:$0xff]
      %v676 = vld [vmem:[#allocation3 + $0x8] sm:$0xff]
      %v677 = vld [vmem:[#allocation3 + $0x10] sm:$0xff]
      %v678 = vld [vmem:[#allocation3 + $0x18] sm:$0xff]
      %v679 = vld [vmem:[#allocation3 + $0x20] sm:$0xff]
      %v680 = vld [vmem:[#allocation3 + $0x28] sm:$0xff]
      %v681 = vld [vmem:[#allocation3 + $0x30] sm:$0xff]
      %v682 = vld [vmem:[#allocation3 + $0x38] sm:$0xff]
      %v683 = vld [vmem:[#allocation3 + $0x40] sm:$0xff]
      %v684 = vld [vmem:[#allocation3 + $0x48] sm:$0xff]
      %v685 = vld [vmem:[#allocation3 + $0x50] sm:$0xff]
      %v686 = vld [vmem:[#allocation3 + $0x58] sm:$0xff]
      %v687 = vld [vmem:[#allocation3 + $0x60] sm:$0xff]
      %v688 = vld [vmem:[#allocation3 + $0x68] sm:$0xff]
      %v689 = vld [vmem:[#allocation3 + $0x70] sm:$0xff]
      %v690 = vld [vmem:[#allocation3 + $0x78] sm:$0xff]
      %v691 = vld [vmem:[%s3] sm:$0xff]
      %v692 = vld [vmem:[%s3 + $0x8] sm:$0xff]
      %v693 = vld [vmem:[%s3 + $0x10] sm:$0xff]
      %v694 = vld [vmem:[%s367] sm:$0xff]
      %v695 = vld [vmem:[%s367 + $0x8] sm:$0xff]
      %v696 = vld [vmem:[%s367 + $0x18] sm:$0xff]
      %v697 = vld [vmem:[%s367 + $0x20] sm:$0xff]
      %v698 = vld [vmem:[%s367 + $0x30] sm:$0xff]
      %v699 = vld [vmem:[%s367 + $0x38] sm:$0xff]
      %v700 = vld [vmem:[%s367 + $0x48] sm:$0xff]
      %v701 = vld [vmem:[%s367 + $0x50] sm:$0xff]
      %v702 = vld [vmem:[%s367 + $0x60] sm:$0xff]
      %v703 = vld [vmem:[%s367 + $0x68] sm:$0xff]
      %v704 = vld [vmem:[%s367 + $0x78] sm:$0xff]
      %v705 = vld [vmem:[%s367 + $0x80] sm:$0xff]
      %v706 = vld [vmem:[%s367 + $0x90] sm:$0xff]
      %v707 = vld [vmem:[%s367 + $0x98] sm:$0xff]
      %v708 = vld [vmem:[%s367 + $0xa8] sm:$0xff]
      %v709 = vld [vmem:[%s367 + $0xb0] sm:$0xff]
      %710 = vst.msk [vmem:[#allocation3] sm:$0xff] %vm368, %v694
      %711 = vst.msk [vmem:[#allocation3 + $0x8] sm:$0xff] %vm368, %v695
      %712 = vst.msk [vmem:[#allocation3 + $0x10] sm:$0xff] %vm368, %v696
      %713 = vst.msk [vmem:[#allocation3 + $0x18] sm:$0xff] %vm368, %v697
      %714 = vst.msk [vmem:[#allocation3 + $0x20] sm:$0xff] %vm368, %v698
      %715 = vst.msk [vmem:[#allocation3 + $0x28] sm:$0xff] %vm368, %v699
      %716 = vst.msk [vmem:[#allocation3 + $0x30] sm:$0xff] %vm368, %v700
      %717 = vst.msk [vmem:[#allocation3 + $0x38] sm:$0xff] %vm368, %v701
      %718 = vst.msk [vmem:[#allocation3 + $0x40] sm:$0xff] %vm368, %v702
      %719 = vst.msk [vmem:[#allocation3 + $0x48] sm:$0xff] %vm368, %v703
      %720 = vst.msk [vmem:[#allocation3 + $0x50] sm:$0xff] %vm368, %v704
      %721 = vst.msk [vmem:[#allocation3 + $0x58] sm:$0xff] %vm368, %v705
      %722 = vst.msk [vmem:[#allocation3 + $0x60] sm:$0xff] %vm368, %v706
      %723 = vst.msk [vmem:[#allocation3 + $0x68] sm:$0xff] %vm368, %v707
      %724 = vst.msk [vmem:[#allocation3 + $0x70] sm:$0xff] %vm368, %v708
      %725 = vst.msk [vmem:[#allocation3 + $0x78] sm:$0xff] %vm368, %v709
      %v726 = vld [vmem:[%s367 + $0x1] sm:$0xff]
      %v727 = vld [vmem:[%s367 + $0x9] sm:$0xff]
      %v728 = vld [vmem:[%s367 + $0x19] sm:$0xff]
      %v729 = vld [vmem:[%s367 + $0x21] sm:$0xff]
      %v730 = vld [vmem:[%s367 + $0x31] sm:$0xff]
      %v731 = vld [vmem:[%s367 + $0x39] sm:$0xff]
      %v732 = vld [vmem:[%s367 + $0x49] sm:$0xff]
      %v733 = vld [vmem:[%s367 + $0x51] sm:$0xff]
      %v734 = vld [vmem:[%s367 + $0x61] sm:$0xff]
      %v735 = vld [vmem:[%s367 + $0x69] sm:$0xff]
      %v736 = vld [vmem:[%s367 + $0x79] sm:$0xff]
      %v737 = vld [vmem:[%s367 + $0x81] sm:$0xff]
      %v738 = vld [vmem:[%s367 + $0x91] sm:$0xff]
      %v739 = vld [vmem:[%s367 + $0x99] sm:$0xff]
      %v740 = vld [vmem:[%s367 + $0xa9] sm:$0xff]
      %v741 = vld [vmem:[%s367 + $0xb1] sm:$0xff]
      %758 = vrot.lane.b32.xlu0 %v726, 8
      %v759 = vpop.permute.xlu0 %758
      %760 = vrot.lane.b32.xlu0 %v727, 8
      %v761 = vpop.permute.xlu0 %760
      %762 = vrot.lane.b32.xlu0 %v728, 8
      %v763 = vpop.permute.xlu0 %762
      %764 = vrot.lane.b32.xlu0 %v729, 8
      %v765 = vpop.permute.xlu0 %764
      %766 = vrot.lane.b32.xlu0 %v730, 8
      %v767 = vpop.permute.xlu0 %766
      %768 = vrot.lane.b32.xlu0 %v731, 8
      %v769 = vpop.permute.xlu0 %768
      %770 = vrot.lane.b32.xlu0 %v732, 8
      %v771 = vpop.permute.xlu0 %770
      %772 = vrot.lane.b32.xlu0 %v733, 8
      %v773 = vpop.permute.xlu0 %772
      %774 = vrot.lane.b32.xlu0 %v734, 8
      %v775 = vpop.permute.xlu0 %774
      %776 = vrot.lane.b32.xlu0 %v735, 8
      %v777 = vpop.permute.xlu0 %776
      %778 = vrot.lane.b32.xlu0 %v736, 8
      %v779 = vpop.permute.xlu0 %778
      %780 = vrot.lane.b32.xlu0 %v737, 8
      %v781 = vpop.permute.xlu0 %780
      %782 = vrot.lane.b32.xlu0 %v738, 8
      %v783 = vpop.permute.xlu0 %782
      %784 = vrot.lane.b32.xlu0 %v739, 8
      %v785 = vpop.permute.xlu0 %784
      %786 = vrot.lane.b32.xlu0 %v740, 8
      %v787 = vpop.permute.xlu0 %786
      %788 = vrot.lane.b32.xlu0 %v741, 8
      %v789 = vpop.permute.xlu0 %788
      %806 = vst.msk [vmem:[#allocation3] sm:$0xff] %vm561, %v759
      %807 = vst.msk [vmem:[#allocation3 + $0x8] sm:$0xff] %vm561, %v761
      %808 = vst.msk [vmem:[#allocation3 + $0x10] sm:$0xff] %vm561, %v763
      %809 = vst.msk [vmem:[#allocation3 + $0x18] sm:$0xff] %vm561, %v765
      %810 = vst.msk [vmem:[#allocation3 + $0x20] sm:$0xff] %vm561, %v767
      %811 = vst.msk [vmem:[#allocation3 + $0x28] sm:$0xff] %vm561, %v769
      %812 = vst.msk [vmem:[#allocation3 + $0x30] sm:$0xff] %vm561, %v771
      %813 = vst.msk [vmem:[#allocation3 + $0x38] sm:$0xff] %vm561, %v773
      %814 = vst.msk [vmem:[#allocation3 + $0x40] sm:$0xff] %vm561, %v775
      %815 = vst.msk [vmem:[#allocation3 + $0x48] sm:$0xff] %vm561, %v777
      %816 = vst.msk [vmem:[#allocation3 + $0x50] sm:$0xff] %vm561, %v779
      %817 = vst.msk [vmem:[#allocation3 + $0x58] sm:$0xff] %vm561, %v781
      %818 = vst.msk [vmem:[#allocation3 + $0x60] sm:$0xff] %vm561, %v783
      %819 = vst.msk [vmem:[#allocation3 + $0x68] sm:$0xff] %vm561, %v785
      %820 = vst.msk [vmem:[#allocation3 + $0x70] sm:$0xff] %vm561, %v787
      %821 = vst.msk [vmem:[#allocation3 + $0x78] sm:$0xff] %vm561, %v789
      %v822 = vld [vmem:[%s367 + $0x2] sm:$0xff]
      %v823 = vld [vmem:[%s367 + $0xa] sm:$0xff]
      %v824 = vld [vmem:[%s367 + $0x1a] sm:$0xff]
      %v825 = vld [vmem:[%s367 + $0x22] sm:$0xff]
      %v826 = vld [vmem:[%s367 + $0x32] sm:$0xff]
      %v827 = vld [vmem:[%s367 + $0x3a] sm:$0xff]
      %v828 = vld [vmem:[%s367 + $0x4a] sm:$0xff]
      %v829 = vld [vmem:[%s367 + $0x52] sm:$0xff]
      %v830 = vld [vmem:[%s367 + $0x62] sm:$0xff]
      %v831 = vld [vmem:[%s367 + $0x6a] sm:$0xff]
      %v832 = vld [vmem:[%s367 + $0x7a] sm:$0xff]
      %v833 = vld [vmem:[%s367 + $0x82] sm:$0xff]
      %v834 = vld [vmem:[%s367 + $0x92] sm:$0xff]
      %v835 = vld [vmem:[%s367 + $0x9a] sm:$0xff]
      %v836 = vld [vmem:[%s367 + $0xaa] sm:$0xff]
      %v837 = vld [vmem:[%s367 + $0xb2] sm:$0xff]
      %854 = vrot.lane.b32.xlu0 %v822, 16
      %v855 = vpop.permute.xlu0 %854
      %856 = vrot.lane.b32.xlu0 %v823, 16
      %v857 = vpop.permute.xlu0 %856
      %858 = vrot.lane.b32.xlu0 %v824, 16
      %v859 = vpop.permute.xlu0 %858
      %860 = vrot.lane.b32.xlu0 %v825, 16
      %v861 = vpop.permute.xlu0 %860
      %862 = vrot.lane.b32.xlu0 %v826, 16
      %v863 = vpop.permute.xlu0 %862
      %864 = vrot.lane.b32.xlu0 %v827, 16
      %v865 = vpop.permute.xlu0 %864
      %866 = vrot.lane.b32.xlu0 %v828, 16
      %v867 = vpop.permute.xlu0 %866
      %868 = vrot.lane.b32.xlu0 %v829, 16
      %v869 = vpop.permute.xlu0 %868
      %870 = vrot.lane.b32.xlu0 %v830, 16
      %v871 = vpop.permute.xlu0 %870
      %872 = vrot.lane.b32.xlu0 %v831, 16
      %v873 = vpop.permute.xlu0 %872
      %874 = vrot.lane.b32.xlu0 %v832, 16
      %v875 = vpop.permute.xlu0 %874
      %876 = vrot.lane.b32.xlu0 %v833, 16
      %v877 = vpop.permute.xlu0 %876
      %878 = vrot.lane.b32.xlu0 %v834, 16
      %v879 = vpop.permute.xlu0 %878
      %880 = vrot.lane.b32.xlu0 %v835, 16
      %v881 = vpop.permute.xlu0 %880
      %882 = vrot.lane.b32.xlu0 %v836, 16
      %v883 = vpop.permute.xlu0 %882
      %884 = vrot.lane.b32.xlu0 %v837, 16
      %v885 = vpop.permute.xlu0 %884
      %902 = vst.msk [vmem:[#allocation3] sm:$0xff] %vm658, %v855
      %903 = vst.msk [vmem:[#allocation3 + $0x8] sm:$0xff] %vm658, %v857
      %904 = vst.msk [vmem:[#allocation3 + $0x10] sm:$0xff] %vm658, %v859
      %905 = vst.msk [vmem:[#allocation3 + $0x18] sm:$0xff] %vm658, %v861
      %906 = vst.msk [vmem:[#allocation3 + $0x20] sm:$0xff] %vm658, %v863
      %907 = vst.msk [vmem:[#allocation3 + $0x28] sm:$0xff] %vm658, %v865
      %908 = vst.msk [vmem:[#allocation3 + $0x30] sm:$0xff] %vm658, %v867
      %909 = vst.msk [vmem:[#allocation3 + $0x38] sm:$0xff] %vm658, %v869
      %910 = vst.msk [vmem:[#allocation3 + $0x40] sm:$0xff] %vm658, %v871
      %911 = vst.msk [vmem:[#allocation3 + $0x48] sm:$0xff] %vm658, %v873
      %912 = vst.msk [vmem:[#allocation3 + $0x50] sm:$0xff] %vm658, %v875
      %913 = vst.msk [vmem:[#allocation3 + $0x58] sm:$0xff] %vm658, %v877
      %914 = vst.msk [vmem:[#allocation3 + $0x60] sm:$0xff] %vm658, %v879
      %915 = vst.msk [vmem:[#allocation3 + $0x68] sm:$0xff] %vm658, %v881
      %916 = vst.msk [vmem:[#allocation3 + $0x70] sm:$0xff] %vm658, %v883
      %917 = vst.msk [vmem:[#allocation3 + $0x78] sm:$0xff] %vm658, %v885
      %v918 = vld [vmem:[#allocation3] sm:$0xff]
      %v919 = vld [vmem:[#allocation3 + $0x8] sm:$0xff]
      %v920 = vld [vmem:[#allocation3 + $0x10] sm:$0xff]
      %v921 = vld [vmem:[#allocation3 + $0x18] sm:$0xff]
      %v922 = vld [vmem:[#allocation3 + $0x20] sm:$0xff]
      %v923 = vld [vmem:[#allocation3 + $0x28] sm:$0xff]
      %v924 = vld [vmem:[#allocation3 + $0x30] sm:$0xff]
      %v925 = vld [vmem:[#allocation3 + $0x38] sm:$0xff]
      %v926 = vld [vmem:[#allocation3 + $0x40] sm:$0xff]
      %v927 = vld [vmem:[#allocation3 + $0x48] sm:$0xff]
      %v928 = vld [vmem:[#allocation3 + $0x50] sm:$0xff]
      %v929 = vld [vmem:[#allocation3 + $0x58] sm:$0xff]
      %v930 = vld [vmem:[#allocation3 + $0x60] sm:$0xff]
      %v931 = vld [vmem:[#allocation3 + $0x68] sm:$0xff]
      %v932 = vld [vmem:[#allocation3 + $0x70] sm:$0xff]
      %v933 = vld [vmem:[#allocation3 + $0x78] sm:$0xff]
      %s934 = scalar_lea.vmem %s3, 24
      %v935 = vld [vmem:[%s934] sm:$0xff]
      %v936 = vld [vmem:[%s934 + $0x8] sm:$0xff]
      %v937 = vld [vmem:[%s934 + $0x10] sm:$0xff]
      %vm938 = vcmask 195584
      %v940 = vsel %vm938, %v918, 0
      %v943 = vsel %vm938, %v919, 0
      %v946 = vsel %vm938, %v920, 0
      %v949 = vsel %vm938, %v921, 0
      %v952 = vsel %vm938, %v922, 0
      %v955 = vsel %vm938, %v923, 0
      %v958 = vsel %vm938, %v924, 0
      %v961 = vsel %vm938, %v925, 0
      %v964 = vsel %vm938, %v926, 0
      %v967 = vsel %vm938, %v927, 0
      %v970 = vsel %vm938, %v928, 0
      %v973 = vsel %vm938, %v929, 0
      %v976 = vsel %vm938, %v930, 0
      %v979 = vsel %vm938, %v931, 0
      %v982 = vsel %vm938, %v932, 0
      %v985 = vsel %vm938, %v933, 0
      %987 = vmatpush.msra.mxu0 0.0
      %988 = vmatpush.msra.mxu0 0.0
      %989 = vmatpush.msra.mxu0 0.0
      %990 = vmatpush.msra.mxu0 0.0
      %991 = vmatpush.msra.mxu0 0.0
      %992 = vmatpush.msra.mxu0 0.0
      %993 = vmatpush.msra.mxu0 0.0
      %994 = vmatpush.msra.mxu0 0.0
      %995 = vmatpush.msra.mxu0 0.0
      %996 = vmatpush.msra.mxu0 0.0
      %997 = vmatpush.msra.mxu0 0.0
      %998 = vmatpush.msra.mxu0 0.0
      %999 = vmatpush.msra.mxu0 0.0
      %1000 = vmatpush.msra.mxu0 %v937
      %1001 = vmatpush.msra.mxu0 %v936
      %1002 = vmatpush.msra.mxu0 %v935
      %1003 = vmatmul.f32.gmra.mxu0 %v940
      %v1004 = vpop.f32.mrf.mxu0
      %v1005 = vadd.f32 0.0, %v1004
      %1006 = vmatmul.f32.gmra.mxu0 %v943
      %v1007 = vpop.f32.mrf.mxu0
      %v1008 = vadd.f32 0.0, %v1007
      %1009 = vmatmul.f32.gmra.mxu0 %v946
      %v1010 = vpop.f32.mrf.mxu0
      %v1011 = vadd.f32 0.0, %v1010
      %1012 = vmatmul.f32.gmra.mxu0 %v949
      %v1013 = vpop.f32.mrf.mxu0
      %v1014 = vadd.f32 0.0, %v1013
      %1015 = vmatmul.f32.gmra.mxu0 %v952
      %v1016 = vpop.f32.mrf.mxu0
      %v1017 = vadd.f32 0.0, %v1016
      %1018 = vmatmul.f32.gmra.mxu0 %v955
      %v1019 = vpop.f32.mrf.mxu0
      %v1020 = vadd.f32 0.0, %v1019
      %1021 = vmatmul.f32.gmra.mxu0 %v958
      %v1022 = vpop.f32.mrf.mxu0
      %v1023 = vadd.f32 0.0, %v1022
      %1024 = vmatmul.f32.gmra.mxu0 %v961
      %v1025 = vpop.f32.mrf.mxu0
      %v1026 = vadd.f32 0.0, %v1025
      %1027 = vmatmul.f32.gmra.mxu0 %v964
      %v1028 = vpop.f32.mrf.mxu0
      %v1029 = vadd.f32 0.0, %v1028
      %1030 = vmatmul.f32.gmra.mxu0 %v967
      %v1031 = vpop.f32.mrf.mxu0
      %v1032 = vadd.f32 0.0, %v1031
      %1033 = vmatmul.f32.gmra.mxu0 %v970
      %v1034 = vpop.f32.mrf.mxu0
      %v1035 = vadd.f32 0.0, %v1034
      %1036 = vmatmul.f32.gmra.mxu0 %v973
      %v1037 = vpop.f32.mrf.mxu0
      %v1038 = vadd.f32 0.0, %v1037
      %1039 = vmatmul.f32.gmra.mxu0 %v976
      %v1040 = vpop.f32.mrf.mxu0
      %v1041 = vadd.f32 0.0, %v1040
      %1042 = vmatmul.f32.gmra.mxu0 %v979
      %v1043 = vpop.f32.mrf.mxu0
      %v1044 = vadd.f32 0.0, %v1043
      %1045 = vmatmul.f32.gmra.mxu0 %v982
      %v1046 = vpop.f32.mrf.mxu0
      %v1047 = vadd.f32 0.0, %v1046
      %1048 = vmatmul.f32.gmra.mxu0 %v985
      %v1049 = vpop.f32.mrf.mxu0
      %v1050 = vadd.f32 0.0, %v1049
      %1051 = vdwg.mxu0
      %v1053 = vsel %vm938, %v675, 0
      %v1056 = vsel %vm938, %v676, 0
      %v1059 = vsel %vm938, %v677, 0
      %v1062 = vsel %vm938, %v678, 0
      %v1065 = vsel %vm938, %v679, 0
      %v1068 = vsel %vm938, %v680, 0
      %v1071 = vsel %vm938, %v681, 0
      %v1074 = vsel %vm938, %v682, 0
      %v1077 = vsel %vm938, %v683, 0
      %v1080 = vsel %vm938, %v684, 0
      %v1083 = vsel %vm938, %v685, 0
      %v1086 = vsel %vm938, %v686, 0
      %v1089 = vsel %vm938, %v687, 0
      %v1092 = vsel %vm938, %v688, 0
      %v1095 = vsel %vm938, %v689, 0
      %v1098 = vsel %vm938, %v690, 0
      %1100 = vmatpush.msra.mxu0 0.0
      %1101 = vmatpush.msra.mxu0 0.0
      %1102 = vmatpush.msra.mxu0 0.0
      %1103 = vmatpush.msra.mxu0 0.0
      %1104 = vmatpush.msra.mxu0 0.0
      %1105 = vmatpush.msra.mxu0 0.0
      %1106 = vmatpush.msra.mxu0 0.0
      %1107 = vmatpush.msra.mxu0 0.0
      %1108 = vmatpush.msra.mxu0 0.0
      %1109 = vmatpush.msra.mxu0 0.0
      %1110 = vmatpush.msra.mxu0 0.0
      %1111 = vmatpush.msra.mxu0 0.0
      %1112 = vmatpush.msra.mxu0 0.0
      %1113 = vmatpush.msra.mxu0 %v693
      %1114 = vmatpush.msra.mxu0 %v692
      %1115 = vmatpush.msra.mxu0 %v691
      %1116 = vmatmul.f32.gmra.mxu0 %v1053
      %v1117 = vpop.f32.mrf.mxu0
      %v1118 = vadd.f32 %v1005, %v1117
      %1119 = vmatmul.f32.gmra.mxu0 %v1056
      %v1120 = vpop.f32.mrf.mxu0
      %v1121 = vadd.f32 %v1008, %v1120
      %1122 = vmatmul.f32.gmra.mxu0 %v1059
      %v1123 = vpop.f32.mrf.mxu0
      %v1124 = vadd.f32 %v1011, %v1123
      %1125 = vmatmul.f32.gmra.mxu0 %v1062
      %v1126 = vpop.f32.mrf.mxu0
      %v1127 = vadd.f32 %v1014, %v1126
      %1128 = vmatmul.f32.gmra.mxu0 %v1065
      %v1129 = vpop.f32.mrf.mxu0
      %v1130 = vadd.f32 %v1017, %v1129
      %1131 = vmatmul.f32.gmra.mxu0 %v1068
      %v1132 = vpop.f32.mrf.mxu0
      %v1133 = vadd.f32 %v1020, %v1132
      %1134 = vmatmul.f32.gmra.mxu0 %v1071
      %v1135 = vpop.f32.mrf.mxu0
      %v1136 = vadd.f32 %v1023, %v1135
      %1137 = vmatmul.f32.gmra.mxu0 %v1074
      %v1138 = vpop.f32.mrf.mxu0
      %v1139 = vadd.f32 %v1026, %v1138
      %1140 = vmatmul.f32.gmra.mxu0 %v1077
      %v1141 = vpop.f32.mrf.mxu0
      %v1142 = vadd.f32 %v1029, %v1141
      %1143 = vmatmul.f32.gmra.mxu0 %v1080
      %v1144 = vpop.f32.mrf.mxu0
      %v1145 = vadd.f32 %v1032, %v1144
      %1146 = vmatmul.f32.gmra.mxu0 %v1083
      %v1147 = vpop.f32.mrf.mxu0
      %v1148 = vadd.f32 %v1035, %v1147
      %1149 = vmatmul.f32.gmra.mxu0 %v1086
      %v1150 = vpop.f32.mrf.mxu0
      %v1151 = vadd.f32 %v1038, %v1150
      %1152 = vmatmul.f32.gmra.mxu0 %v1089
      %v1153 = vpop.f32.mrf.mxu0
      %v1154 = vadd.f32 %v1041, %v1153
      %1155 = vmatmul.f32.gmra.mxu0 %v1092
      %v1156 = vpop.f32.mrf.mxu0
      %v1157 = vadd.f32 %v1044, %v1156
      %1158 = vmatmul.f32.gmra.mxu0 %v1095
      %v1159 = vpop.f32.mrf.mxu0
      %v1160 = vadd.f32 %v1047, %v1159
      %1161 = vmatmul.f32.gmra.mxu0 %v1098
      %v1162 = vpop.f32.mrf.mxu0
      %v1163 = vadd.f32 %v1050, %v1162
      %1164 = vdwg.mxu0
      %s1165 = scalar_lea.vmem [#allocation2], 48
      %v1166 = vld [vmem:[%s1165] sm:$0xff]
      %v1167 = vld [vmem:[%s1165 + $0x8] sm:$0xff]
      %v1168 = vld [vmem:[%s1165 + $0x18] sm:$0xff]
      %v1169 = vld [vmem:[%s1165 + $0x20] sm:$0xff]
      %v1170 = vld [vmem:[%s1165 + $0x30] sm:$0xff]
      %v1171 = vld [vmem:[%s1165 + $0x38] sm:$0xff]
      %v1172 = vld [vmem:[%s1165 + $0x48] sm:$0xff]
      %v1173 = vld [vmem:[%s1165 + $0x50] sm:$0xff]
      %v1174 = vld [vmem:[%s1165 + $0x60] sm:$0xff]
      %v1175 = vld [vmem:[%s1165 + $0x68] sm:$0xff]
      %v1176 = vld [vmem:[%s1165 + $0x78] sm:$0xff]
      %v1177 = vld [vmem:[%s1165 + $0x80] sm:$0xff]
      %v1178 = vld [vmem:[%s1165 + $0x90] sm:$0xff]
      %v1179 = vld [vmem:[%s1165 + $0x98] sm:$0xff]
      %v1180 = vld [vmem:[%s1165 + $0xa8] sm:$0xff]
      %v1181 = vld [vmem:[%s1165 + $0xb0] sm:$0xff]
      %1182 = vst.msk [vmem:[#allocation3] sm:$0xff] %vm368, %v1166
      %1183 = vst.msk [vmem:[#allocation3 + $0x8] sm:$0xff] %vm368, %v1167
      %1184 = vst.msk [vmem:[#allocation3 + $0x10] sm:$0xff] %vm368, %v1168
      %1185 = vst.msk [vmem:[#allocation3 + $0x18] sm:$0xff] %vm368, %v1169
      %1186 = vst.msk [vmem:[#allocation3 + $0x20] sm:$0xff] %vm368, %v1170
      %1187 = vst.msk [vmem:[#allocation3 + $0x28] sm:$0xff] %vm368, %v1171
      %1188 = vst.msk [vmem:[#allocation3 + $0x30] sm:$0xff] %vm368, %v1172
      %1189 = vst.msk [vmem:[#allocation3 + $0x38] sm:$0xff] %vm368, %v1173
      %1190 = vst.msk [vmem:[#allocation3 + $0x40] sm:$0xff] %vm368, %v1174
      %1191 = vst.msk [vmem:[#allocation3 + $0x48] sm:$0xff] %vm368, %v1175
      %1192 = vst.msk [vmem:[#allocation3 + $0x50] sm:$0xff] %vm368, %v1176
      %1193 = vst.msk [vmem:[#allocation3 + $0x58] sm:$0xff] %vm368, %v1177
      %1194 = vst.msk [vmem:[#allocation3 + $0x60] sm:$0xff] %vm368, %v1178
      %1195 = vst.msk [vmem:[#allocation3 + $0x68] sm:$0xff] %vm368, %v1179
      %1196 = vst.msk [vmem:[#allocation3 + $0x70] sm:$0xff] %vm368, %v1180
      %1197 = vst.msk [vmem:[#allocation3 + $0x78] sm:$0xff] %vm368, %v1181
      %v1198 = vld [vmem:[%s1165 + $0x1] sm:$0xff]
      %v1199 = vld [vmem:[%s1165 + $0x9] sm:$0xff]
      %v1200 = vld [vmem:[%s1165 + $0x19] sm:$0xff]
      %v1201 = vld [vmem:[%s1165 + $0x21] sm:$0xff]
      %v1202 = vld [vmem:[%s1165 + $0x31] sm:$0xff]
      %v1203 = vld [vmem:[%s1165 + $0x39] sm:$0xff]
      %v1204 = vld [vmem:[%s1165 + $0x49] sm:$0xff]
      %v1205 = vld [vmem:[%s1165 + $0x51] sm:$0xff]
      %v1206 = vld [vmem:[%s1165 + $0x61] sm:$0xff]
      %v1207 = vld [vmem:[%s1165 + $0x69] sm:$0xff]
      %v1208 = vld [vmem:[%s1165 + $0x79] sm:$0xff]
      %v1209 = vld [vmem:[%s1165 + $0x81] sm:$0xff]
      %v1210 = vld [vmem:[%s1165 + $0x91] sm:$0xff]
      %v1211 = vld [vmem:[%s1165 + $0x99] sm:$0xff]
      %v1212 = vld [vmem:[%s1165 + $0xa9] sm:$0xff]
      %v1213 = vld [vmem:[%s1165 + $0xb1] sm:$0xff]
      %1230 = vrot.lane.b32.xlu0 %v1198, 8
      %v1231 = vpop.permute.xlu0 %1230
      %1232 = vrot.lane.b32.xlu0 %v1199, 8
      %v1233 = vpop.permute.xlu0 %1232
      %1234 = vrot.lane.b32.xlu0 %v1200, 8
      %v1235 = vpop.permute.xlu0 %1234
      %1236 = vrot.lane.b32.xlu0 %v1201, 8
      %v1237 = vpop.permute.xlu0 %1236
      %1238 = vrot.lane.b32.xlu0 %v1202, 8
      %v1239 = vpop.permute.xlu0 %1238
      %1240 = vrot.lane.b32.xlu0 %v1203, 8
      %v1241 = vpop.permute.xlu0 %1240
      %1242 = vrot.lane.b32.xlu0 %v1204, 8
      %v1243 = vpop.permute.xlu0 %1242
      %1244 = vrot.lane.b32.xlu0 %v1205, 8
      %v1245 = vpop.permute.xlu0 %1244
      %1246 = vrot.lane.b32.xlu0 %v1206, 8
      %v1247 = vpop.permute.xlu0 %1246
      %1248 = vrot.lane.b32.xlu0 %v1207, 8
      %v1249 = vpop.permute.xlu0 %1248
      %1250 = vrot.lane.b32.xlu0 %v1208, 8
      %v1251 = vpop.permute.xlu0 %1250
      %1252 = vrot.lane.b32.xlu0 %v1209, 8
      %v1253 = vpop.permute.xlu0 %1252
      %1254 = vrot.lane.b32.xlu0 %v1210, 8
      %v1255 = vpop.permute.xlu0 %1254
      %1256 = vrot.lane.b32.xlu0 %v1211, 8
      %v1257 = vpop.permute.xlu0 %1256
      %1258 = vrot.lane.b32.xlu0 %v1212, 8
      %v1259 = vpop.permute.xlu0 %1258
      %1260 = vrot.lane.b32.xlu0 %v1213, 8
      %v1261 = vpop.permute.xlu0 %1260
      %1278 = vst.msk [vmem:[#allocation3] sm:$0xff] %vm561, %v1231
      %1279 = vst.msk [vmem:[#allocation3 + $0x8] sm:$0xff] %vm561, %v1233
      %1280 = vst.msk [vmem:[#allocation3 + $0x10] sm:$0xff] %vm561, %v1235
      %1281 = vst.msk [vmem:[#allocation3 + $0x18] sm:$0xff] %vm561, %v1237
      %1282 = vst.msk [vmem:[#allocation3 + $0x20] sm:$0xff] %vm561, %v1239
      %1283 = vst.msk [vmem:[#allocation3 + $0x28] sm:$0xff] %vm561, %v1241
      %1284 = vst.msk [vmem:[#allocation3 + $0x30] sm:$0xff] %vm561, %v1243
      %1285 = vst.msk [vmem:[#allocation3 + $0x38] sm:$0xff] %vm561, %v1245
      %1286 = vst.msk [vmem:[#allocation3 + $0x40] sm:$0xff] %vm561, %v1247
      %1287 = vst.msk [vmem:[#allocation3 + $0x48] sm:$0xff] %vm561, %v1249
      %1288 = vst.msk [vmem:[#allocation3 + $0x50] sm:$0xff] %vm561, %v1251
      %1289 = vst.msk [vmem:[#allocation3 + $0x58] sm:$0xff] %vm561, %v1253
      %1290 = vst.msk [vmem:[#allocation3 + $0x60] sm:$0xff] %vm561, %v1255
      %1291 = vst.msk [vmem:[#allocation3 + $0x68] sm:$0xff] %vm561, %v1257
      %1292 = vst.msk [vmem:[#allocation3 + $0x70] sm:$0xff] %vm561, %v1259
      %1293 = vst.msk [vmem:[#allocation3 + $0x78] sm:$0xff] %vm561, %v1261
      %v1294 = vld [vmem:[%s1165 + $0x2] sm:$0xff]
      %v1295 = vld [vmem:[%s1165 + $0xa] sm:$0xff]
      %v1296 = vld [vmem:[%s1165 + $0x1a] sm:$0xff]
      %v1297 = vld [vmem:[%s1165 + $0x22] sm:$0xff]
      %v1298 = vld [vmem:[%s1165 + $0x32] sm:$0xff]
      %v1299 = vld [vmem:[%s1165 + $0x3a] sm:$0xff]
      %v1300 = vld [vmem:[%s1165 + $0x4a] sm:$0xff]
      %v1301 = vld [vmem:[%s1165 + $0x52] sm:$0xff]
      %v1302 = vld [vmem:[%s1165 + $0x62] sm:$0xff]
      %v1303 = vld [vmem:[%s1165 + $0x6a] sm:$0xff]
      %v1304 = vld [vmem:[%s1165 + $0x7a] sm:$0xff]
      %v1305 = vld [vmem:[%s1165 + $0x82] sm:$0xff]
      %v1306 = vld [vmem:[%s1165 + $0x92] sm:$0xff]
      %v1307 = vld [vmem:[%s1165 + $0x9a] sm:$0xff]
      %v1308 = vld [vmem:[%s1165 + $0xaa] sm:$0xff]
      %v1309 = vld [vmem:[%s1165 + $0xb2] sm:$0xff]
      %1326 = vrot.lane.b32.xlu0 %v1294, 16
      %v1327 = vpop.permute.xlu0 %1326
      %1328 = vrot.lane.b32.xlu0 %v1295, 16
      %v1329 = vpop.permute.xlu0 %1328
      %1330 = vrot.lane.b32.xlu0 %v1296, 16
      %v1331 = vpop.permute.xlu0 %1330
      %1332 = vrot.lane.b32.xlu0 %v1297, 16
      %v1333 = vpop.permute.xlu0 %1332
      %1334 = vrot.lane.b32.xlu0 %v1298, 16
      %v1335 = vpop.permute.xlu0 %1334
      %1336 = vrot.lane.b32.xlu0 %v1299, 16
      %v1337 = vpop.permute.xlu0 %1336
      %1338 = vrot.lane.b32.xlu0 %v1300, 16
      %v1339 = vpop.permute.xlu0 %1338
      %1340 = vrot.lane.b32.xlu0 %v1301, 16
      %v1341 = vpop.permute.xlu0 %1340
      %1342 = vrot.lane.b32.xlu0 %v1302, 16
      %v1343 = vpop.permute.xlu0 %1342
      %1344 = vrot.lane.b32.xlu0 %v1303, 16
      %v1345 = vpop.permute.xlu0 %1344
      %1346 = vrot.lane.b32.xlu0 %v1304, 16
      %v1347 = vpop.permute.xlu0 %1346
      %1348 = vrot.lane.b32.xlu0 %v1305, 16
      %v1349 = vpop.permute.xlu0 %1348
      %1350 = vrot.lane.b32.xlu0 %v1306, 16
      %v1351 = vpop.permute.xlu0 %1350
      %1352 = vrot.lane.b32.xlu0 %v1307, 16
      %v1353 = vpop.permute.xlu0 %1352
      %1354 = vrot.lane.b32.xlu0 %v1308, 16
      %v1355 = vpop.permute.xlu0 %1354
      %1356 = vrot.lane.b32.xlu0 %v1309, 16
      %v1357 = vpop.permute.xlu0 %1356
      %1374 = vst.msk [vmem:[#allocation3] sm:$0xff] %vm658, %v1327
      %1375 = vst.msk [vmem:[#allocation3 + $0x8] sm:$0xff] %vm658, %v1329
      %1376 = vst.msk [vmem:[#allocation3 + $0x10] sm:$0xff] %vm658, %v1331
      %1377 = vst.msk [vmem:[#allocation3 + $0x18] sm:$0xff] %vm658, %v1333
      %1378 = vst.msk [vmem:[#allocation3 + $0x20] sm:$0xff] %vm658, %v1335
      %1379 = vst.msk [vmem:[#allocation3 + $0x28] sm:$0xff] %vm658, %v1337
      %1380 = vst.msk [vmem:[#allocation3 + $0x30] sm:$0xff] %vm658, %v1339
      %1381 = vst.msk [vmem:[#allocation3 + $0x38] sm:$0xff] %vm658, %v1341
      %1382 = vst.msk [vmem:[#allocation3 + $0x40] sm:$0xff] %vm658, %v1343
      %1383 = vst.msk [vmem:[#allocation3 + $0x48] sm:$0xff] %vm658, %v1345
      %1384 = vst.msk [vmem:[#allocation3 + $0x50] sm:$0xff] %vm658, %v1347
      %1385 = vst.msk [vmem:[#allocation3 + $0x58] sm:$0xff] %vm658, %v1349
      %1386 = vst.msk [vmem:[#allocation3 + $0x60] sm:$0xff] %vm658, %v1351
      %1387 = vst.msk [vmem:[#allocation3 + $0x68] sm:$0xff] %vm658, %v1353
      %1388 = vst.msk [vmem:[#allocation3 + $0x70] sm:$0xff] %vm658, %v1355
      %1389 = vst.msk [vmem:[#allocation3 + $0x78] sm:$0xff] %vm658, %v1357
      %v1390 = vld [vmem:[#allocation3] sm:$0xff]
      %v1391 = vld [vmem:[#allocation3 + $0x8] sm:$0xff]
      %v1392 = vld [vmem:[#allocation3 + $0x10] sm:$0xff]
      %v1393 = vld [vmem:[#allocation3 + $0x18] sm:$0xff]
      %v1394 = vld [vmem:[#allocation3 + $0x20] sm:$0xff]
      %v1395 = vld [vmem:[#allocation3 + $0x28] sm:$0xff]
      %v1396 = vld [vmem:[#allocation3 + $0x30] sm:$0xff]
      %v1397 = vld [vmem:[#allocation3 + $0x38] sm:$0xff]
      %v1398 = vld [vmem:[#allocation3 + $0x40] sm:$0xff]
      %v1399 = vld [vmem:[#allocation3 + $0x48] sm:$0xff]
      %v1400 = vld [vmem:[#allocation3 + $0x50] sm:$0xff]
      %v1401 = vld [vmem:[#allocation3 + $0x58] sm:$0xff]
      %v1402 = vld [vmem:[#allocation3 + $0x60] sm:$0xff]
      %v1403 = vld [vmem:[#allocation3 + $0x68] sm:$0xff]
      %v1404 = vld [vmem:[#allocation3 + $0x70] sm:$0xff]
      %v1405 = vld [vmem:[#allocation3 + $0x78] sm:$0xff]
      %s1406 = scalar_lea.vmem %s3, 48
      %v1407 = vld [vmem:[%s1406] sm:$0xff]
      %v1408 = vld [vmem:[%s1406 + $0x8] sm:$0xff]
      %v1409 = vld [vmem:[%s1406 + $0x10] sm:$0xff]
      %v1411 = vsel %vm938, %v1390, 0
      %v1414 = vsel %vm938, %v1391, 0
      %v1417 = vsel %vm938, %v1392, 0
      %v1420 = vsel %vm938, %v1393, 0
      %v1423 = vsel %vm938, %v1394, 0
      %v1426 = vsel %vm938, %v1395, 0
      %v1429 = vsel %vm938, %v1396, 0
      %v1432 = vsel %vm938, %v1397, 0
      %v1435 = vsel %vm938, %v1398, 0
      %v1438 = vsel %vm938, %v1399, 0
      %v1441 = vsel %vm938, %v1400, 0
      %v1444 = vsel %vm938, %v1401, 0
      %v1447 = vsel %vm938, %v1402, 0
      %v1450 = vsel %vm938, %v1403, 0
      %v1453 = vsel %vm938, %v1404, 0
      %v1456 = vsel %vm938, %v1405, 0
      %1458 = vmatpush.msra.mxu0 0.0
      %1459 = vmatpush.msra.mxu0 0.0
      %1460 = vmatpush.msra.mxu0 0.0
      %1461 = vmatpush.msra.mxu0 0.0
      %1462 = vmatpush.msra.mxu0 0.0
      %1463 = vmatpush.msra.mxu0 0.0
      %1464 = vmatpush.msra.mxu0 0.0
      %1465 = vmatpush.msra.mxu0 0.0
      %1466 = vmatpush.msra.mxu0 0.0
      %1467 = vmatpush.msra.mxu0 0.0
      %1468 = vmatpush.msra.mxu0 0.0
      %1469 = vmatpush.msra.mxu0 0.0
      %1470 = vmatpush.msra.mxu0 0.0
      %1471 = vmatpush.msra.mxu0 %v1409
      %1472 = vmatpush.msra.mxu0 %v1408
      %1473 = vmatpush.msra.mxu0 %v1407
      %1474 = vmatmul.f32.gmra.mxu0 %v1411
      %v1475 = vpop.f32.mrf.mxu0
      %v1476 = vadd.f32 0.0, %v1475
      %1477 = vmatmul.f32.gmra.mxu0 %v1414
      %v1478 = vpop.f32.mrf.mxu0
      %v1479 = vadd.f32 0.0, %v1478
      %1480 = vmatmul.f32.gmra.mxu0 %v1417
      %v1481 = vpop.f32.mrf.mxu0
      %v1482 = vadd.f32 0.0, %v1481
      %1483 = vmatmul.f32.gmra.mxu0 %v1420
      %v1484 = vpop.f32.mrf.mxu0
      %v1485 = vadd.f32 0.0, %v1484
      %1486 = vmatmul.f32.gmra.mxu0 %v1423
      %v1487 = vpop.f32.mrf.mxu0
      %v1488 = vadd.f32 0.0, %v1487
      %1489 = vmatmul.f32.gmra.mxu0 %v1426
      %v1490 = vpop.f32.mrf.mxu0
      %v1491 = vadd.f32 0.0, %v1490
      %1492 = vmatmul.f32.gmra.mxu0 %v1429
      %v1493 = vpop.f32.mrf.mxu0
      %v1494 = vadd.f32 0.0, %v1493
      %1495 = vmatmul.f32.gmra.mxu0 %v1432
      %v1496 = vpop.f32.mrf.mxu0
      %v1497 = vadd.f32 0.0, %v1496
      %1498 = vmatmul.f32.gmra.mxu0 %v1435
      %v1499 = vpop.f32.mrf.mxu0
      %v1500 = vadd.f32 0.0, %v1499
      %1501 = vmatmul.f32.gmra.mxu0 %v1438
      %v1502 = vpop.f32.mrf.mxu0
      %v1503 = vadd.f32 0.0, %v1502
      %1504 = vmatmul.f32.gmra.mxu0 %v1441
      %v1505 = vpop.f32.mrf.mxu0
      %v1506 = vadd.f32 0.0, %v1505
      %1507 = vmatmul.f32.gmra.mxu0 %v1444
      %v1508 = vpop.f32.mrf.mxu0
      %v1509 = vadd.f32 0.0, %v1508
      %1510 = vmatmul.f32.gmra.mxu0 %v1447
      %v1511 = vpop.f32.mrf.mxu0
      %v1512 = vadd.f32 0.0, %v1511
      %1513 = vmatmul.f32.gmra.mxu0 %v1450
      %v1514 = vpop.f32.mrf.mxu0
      %v1515 = vadd.f32 0.0, %v1514
      %1516 = vmatmul.f32.gmra.mxu0 %v1453
      %v1517 = vpop.f32.mrf.mxu0
      %v1518 = vadd.f32 0.0, %v1517
      %1519 = vmatmul.f32.gmra.mxu0 %v1456
      %v1520 = vpop.f32.mrf.mxu0
      %v1521 = vadd.f32 0.0, %v1520
      %1522 = vdwg.mxu0
      %v1523 = vadd.f32 %v1118, %v1476
      %v1524 = vadd.f32 %v1121, %v1479
      %v1525 = vadd.f32 %v1124, %v1482
      %v1526 = vadd.f32 %v1127, %v1485
      %v1527 = vadd.f32 %v1130, %v1488
      %v1528 = vadd.f32 %v1133, %v1491
      %v1529 = vadd.f32 %v1136, %v1494
      %v1530 = vadd.f32 %v1139, %v1497
      %v1531 = vadd.f32 %v1142, %v1500
      %v1532 = vadd.f32 %v1145, %v1503
      %v1533 = vadd.f32 %v1148, %v1506
      %v1534 = vadd.f32 %v1151, %v1509
      %v1535 = vadd.f32 %v1154, %v1512
      %v1536 = vadd.f32 %v1157, %v1515
      %v1537 = vadd.f32 %v1160, %v1518
      %v1538 = vadd.f32 %v1163, %v1521
      %v1539 = vsel %vm368, %v1523, 0.0
      %v1540 = vsel %vm368, %v1524, 0.0
      %v1541 = vadd.f32 %v1539, %v1540
      %v1542 = vsel %vm368, %v1525, 0.0
      %v1543 = vadd.f32 %v1541, %v1542
      %v1544 = vsel %vm368, %v1526, 0.0
      %v1545 = vadd.f32 %v1543, %v1544
      %v1546 = vsel %vm368, %v1527, 0.0
      %v1547 = vadd.f32 %v1545, %v1546
      %v1548 = vsel %vm368, %v1528, 0.0
      %v1549 = vadd.f32 %v1547, %v1548
      %v1550 = vsel %vm368, %v1529, 0.0
      %v1551 = vadd.f32 %v1549, %v1550
      %v1552 = vsel %vm368, %v1530, 0.0
      %v1553 = vadd.f32 %v1551, %v1552
      %v1554 = vsel %vm368, %v1531, 0.0
      %v1555 = vadd.f32 %v1553, %v1554
      %v1556 = vsel %vm368, %v1532, 0.0
      %v1557 = vadd.f32 %v1555, %v1556
      %v1558 = vsel %vm368, %v1533, 0.0
      %v1559 = vadd.f32 %v1557, %v1558
      %v1560 = vsel %vm368, %v1534, 0.0
      %v1561 = vadd.f32 %v1559, %v1560
      %v1562 = vsel %vm368, %v1535, 0.0
      %v1563 = vadd.f32 %v1561, %v1562
      %v1564 = vsel %vm368, %v1536, 0.0
      %v1565 = vadd.f32 %v1563, %v1564
      %v1566 = vsel %vm368, %v1537, 0.0
      %v1567 = vadd.f32 %v1565, %v1566
      %v1568 = vsel %vm368, %v1538, 0.0
      %v1569 = vadd.f32 %v1567, %v1568
      %v1570 = vrot.slane %v1569, 4
      %v1571 = vadd.f32 %v1569, %v1570
      %v1572 = vrot.slane %v1571, 2
      %v1573 = vadd.f32 %v1571, %v1572
      %v1574 = vrot.slane %v1573, 1
      %v1575 = vadd.f32 %v1573, %v1574
      %1576 = vst.msk [vmem:[%s270] sm:$0x1] %vm272, %v1575
      %v1577 = vmul.f32 %v1523, %v1523
      %v1578 = vmul.f32 %v1524, %v1524
      %v1579 = vmul.f32 %v1525, %v1525
      %v1580 = vmul.f32 %v1526, %v1526
      %v1581 = vmul.f32 %v1527, %v1527
      %v1582 = vmul.f32 %v1528, %v1528
      %v1583 = vmul.f32 %v1529, %v1529
      %v1584 = vmul.f32 %v1530, %v1530
      %v1585 = vmul.f32 %v1531, %v1531
      %v1586 = vmul.f32 %v1532, %v1532
      %v1587 = vmul.f32 %v1533, %v1533
      %v1588 = vmul.f32 %v1534, %v1534
      %v1589 = vmul.f32 %v1535, %v1535
      %v1590 = vmul.f32 %v1536, %v1536
      %v1591 = vmul.f32 %v1537, %v1537
      %v1592 = vmul.f32 %v1538, %v1538
      %v1593 = vsel %vm368, %v1577, 0.0
      %v1594 = vsel %vm368, %v1578, 0.0
      %v1595 = vadd.f32 %v1593, %v1594
      %v1596 = vsel %vm368, %v1579, 0.0
      %v1597 = vadd.f32 %v1595, %v1596
      %v1598 = vsel %vm368, %v1580, 0.0
      %v1599 = vadd.f32 %v1597, %v1598
      %v1600 = vsel %vm368, %v1581, 0.0
      %v1601 = vadd.f32 %v1599, %v1600
      %v1602 = vsel %vm368, %v1582, 0.0
      %v1603 = vadd.f32 %v1601, %v1602
      %v1604 = vsel %vm368, %v1583, 0.0
      %v1605 = vadd.f32 %v1603, %v1604
      %v1606 = vsel %vm368, %v1584, 0.0
      %v1607 = vadd.f32 %v1605, %v1606
      %v1608 = vsel %vm368, %v1585, 0.0
      %v1609 = vadd.f32 %v1607, %v1608
      %v1610 = vsel %vm368, %v1586, 0.0
      %v1611 = vadd.f32 %v1609, %v1610
      %v1612 = vsel %vm368, %v1587, 0.0
      %v1613 = vadd.f32 %v1611, %v1612
      %v1614 = vsel %vm368, %v1588, 0.0
      %v1615 = vadd.f32 %v1613, %v1614
      %v1616 = vsel %vm368, %v1589, 0.0
      %v1617 = vadd.f32 %v1615, %v1616
      %v1618 = vsel %vm368, %v1590, 0.0
      %v1619 = vadd.f32 %v1617, %v1618
      %v1620 = vsel %vm368, %v1591, 0.0
      %v1621 = vadd.f32 %v1619, %v1620
      %v1622 = vsel %vm368, %v1592, 0.0
      %v1623 = vadd.f32 %v1621, %v1622
      %v1624 = vrot.slane %v1623, 4
      %v1625 = vadd.f32 %v1623, %v1624
      %v1626 = vrot.slane %v1625, 2
      %v1627 = vadd.f32 %v1625, %v1626
      %v1628 = vrot.slane %v1627, 1
      %v1629 = vadd.f32 %v1627, %v1628
      %1630 = vst.msk [vmem:[%s270 + $0x1] sm:$0x1] %vm272, %v1629
      %1631 = vst.msk [vmem:[%s261] sm:$0xff] %vm368, %v1523
      %1632 = vst.msk [vmem:[%s261 + $0x8] sm:$0xff] %vm368, %v1524
      %1633 = vst.msk [vmem:[%s261 + $0x10] sm:$0xff] %vm368, %v1525
      %1634 = vst.msk [vmem:[%s261 + $0x18] sm:$0xff] %vm368, %v1526
      %1635 = vst.msk [vmem:[%s261 + $0x20] sm:$0xff] %vm368, %v1527
      %1636 = vst.msk [vmem:[%s261 + $0x28] sm:$0xff] %vm368, %v1528
      %1637 = vst.msk [vmem:[%s261 + $0x30] sm:$0xff] %vm368, %v1529
      %1638 = vst.msk [vmem:[%s261 + $0x38] sm:$0xff] %vm368, %v1530
      %1639 = vst.msk [vmem:[%s261 + $0x40] sm:$0xff] %vm368, %v1531
      %1640 = vst.msk [vmem:[%s261 + $0x48] sm:$0xff] %vm368, %v1532
      %1641 = vst.msk [vmem:[%s261 + $0x50] sm:$0xff] %vm368, %v1533
      %1642 = vst.msk [vmem:[%s261 + $0x58] sm:$0xff] %vm368, %v1534
      %1643 = vst.msk [vmem:[%s261 + $0x60] sm:$0xff] %vm368, %v1535
      %1644 = vst.msk [vmem:[%s261 + $0x68] sm:$0xff] %vm368, %v1536
      %1645 = vst.msk [vmem:[%s261 + $0x70] sm:$0xff] %vm368, %v1537
      %1646 = vst.msk [vmem:[%s261 + $0x78] sm:$0xff] %vm368, %v1538
      %s1647 = smul.u32 8, %s22
      %p1648 = scmp.lt.s32.totalorder %s21, 1
      %s1649 = scalar_select %p1648, %s21, 1
      %p1650 = scmp.lt.s32.totalorder %s1647, 15
      %s1651 = scalar_select %p1650, %s1647, 15
      %s1652 = smul.addr %s1651, 2
      %s1653 = smul.addr %s1649, 32
      %s1654 = sadd.s32 %s1652, %s1653
      %s1655 = smul.addr %s1654, 8
      %s1656 = scalar_lea.vmem %s4, %s1655
      %p1657 = scmp.lt.s32.totalorder %s21, 1
      %s1658 = scalar_select %p1657, %s21, 1
      %p1659 = scmp.lt.s32.totalorder %s22, 1
      %s1660 = scalar_select %p1659, %s22, 1
      %s1661 = smul.addr %s1658, 2
      %s1662 = sadd.s32 %s1660, %s1661
      %s1663 = smul.addr %s1662, 2
      %s1664 = scalar_lea.vmem %s5, %s1663
      // Predicated region
      $region53: #{_double_conv_impl.4} parent=35 // pred_check
        %p1665 = pneg %p138
      $region54: #{_double_conv_impl.4} parent=35 // pred_check_branch
        %1667 = sbr.rel (%p1665) target = $region56
      $region55: #{_double_conv_impl.4} parent=35 // pred_region
        %s1668 = smul.u32 8, %s22
      $region56: #{_double_conv_impl.4} parent=35 // pred_fallthru
        _
      // Predicated region
      $region57: #{_double_conv_impl.4} parent=35 // pred_check
        %p1669 = pneg %p166
      $region58: #{_double_conv_impl.4} parent=35 // pred_check_branch
        %1671 = sbr.rel (%p1669) target = $region60
      $region59: #{_double_conv_impl.4} parent=35 // pred_region
        _
      $region60: #{_double_conv_impl.4} parent=35 // pred_fallthru
        _
    $region36: #{_double_conv_impl.4} parent=5 // pred_fallthru
      _
    %p1672 = scmp.le.s32.totalorder 2, %s12
    // Predicated region
    $region61: #{_double_conv_impl.4} parent=5 // pred_check
      %p1673 = pneg %p1672
    $region62: #{_double_conv_impl.4} parent=5 // pred_check_branch
      %1675 = sbr.rel (%p1673) target = $region64
    $region63: #{_double_conv_impl.4} parent=5 // pred_region
      %s1676 = ssub.s32 %s12, 2
      // Predicated region
      $region65: #{_double_conv_impl.4} parent=63 // pred_check
        %p1677 = pneg %p144
      $region66: #{_double_conv_impl.4} parent=63 // pred_check_branch
        %1679 = sbr.rel (%p1677) target = $region68
      $region67: #{_double_conv_impl.4} parent=63 // pred_region
        %s1680 = smul.u32 8, %s24
        %p1681 = scmp.lt.s32.totalorder %s23, 1
        %s1682 = scalar_select %p1681, %s23, 1
        %p1683 = scmp.lt.s32.totalorder %s1680, 15
        %s1684 = scalar_select %p1683, %s1680, 15
        %s1685 = smul.addr %s1684, 2
        %s1686 = smul.addr %s1682, 32
        %s1687 = sadd.s32 %s1685, %s1686
        %s1688 = smul.addr %s1687, 8
        %s1689 = scalar_lea.vmem %s4, %s1688
      $region68: #{_double_conv_impl.4} parent=63 // pred_fallthru
        _
      // Predicated region
      $region69: #{_double_conv_impl.4} parent=63 // pred_check
        %p1690 = pneg %p172
      $region70: #{_double_conv_impl.4} parent=63 // pred_check_branch
        %1692 = sbr.rel (%p1690) target = $region72
      $region71: #{_double_conv_impl.4} parent=63 // pred_region
        %p1693 = scmp.lt.s32.totalorder %s23, 1
        %s1694 = scalar_select %p1693, %s23, 1
        %p1695 = scmp.lt.s32.totalorder %s24, 1
        %s1696 = scalar_select %p1695, %s24, 1
        %s1697 = smul.addr %s1694, 2
        %s1698 = sadd.s32 %s1696, %s1697
        %s1699 = smul.addr %s1698, 2
        %s1700 = scalar_lea.vmem %s5, %s1699
      $region72: #{_double_conv_impl.4} parent=63 // pred_fallthru
        _
    $region64: #{_double_conv_impl.4} parent=5 // pred_fallthru
      _
  $region6: #{_double_conv_impl.4} parent=0 // loop_footer
    %s16 = sadd.s32 1, %s12
  $region7: #{_double_conv_impl.4} parent=0 // loop_footer_branch
    %11 = sbr.rel target = $region3
  $region8: #{_double_conv_impl.4} parent=0 // loop_exit
    _

// kernel: _double_conv_impl.3
$region0: #{_double_conv_impl.3}
  #allocation0 [shape = 'u32[]', space=smem, size = 0x4, offset = 0x4, fixed_abs, tag = 'smem constant byte address 0x4 - core index']
  #allocation1 [shape = 'u32[72,128]{1,0:T(1,128)}', space=vmem, size = 0x9000, scoped, tag = 'internal scratch']
  #allocation2 [shape = 'f32[10,18,4]{2,1,0:T(8,128)}', space=vmem, size = 0x1e000, scoped, tag = 'scratch operand']
  #allocation3 [shape = 'f32[128,12]{1,0:T(8,128)}', space=vmem, size = 0x10000, scoped, tag = 'scratch operand']
  %s0 = inlined_call_operand.vmem [shape: f32[2,16,16,4], index: 0, kind: input, shape index: {}]
  %s1 = inlined_call_operand.vmem [shape: f32[3,12,8], index: 1, kind: input, shape index: {}]
  %s2 = inlined_call_operand.vmem [shape: f32[2,16,16,8], index: 2, kind: output, shape index: {0}]
  %s3 = inlined_call_operand.vmem [shape: f32[2,2,2,8], index: 3, kind: output, shape index: {1}]
  %4 = xla_tuple %s2, %s3
  %s5 = sld [smem:[#allocation0]]
  $region65: #{_double_conv_impl.3} parent=0
    _
  %s7 = ssub.s32 1, %s5
  %s8 = scalar_select 0, %s7, %s5
  loop: start=0, step=1, limit=6
  $region2: #{_double_conv_impl.3} parent=0 // loop_pre_header
    _
  $region3: #{_double_conv_impl.3} parent=0 // loop_header
    %s10 = sphi 0, %s14
    %p11 = scmp.ge.s32.totalorder %s10, 6
    %s17 = sphi 0, %s29
    %s18 = sphi 0, %s25
    %s19 = sphi 0, %s17
    %s20 = sphi 0, %s18
    %s21 = sphi 0, %s19
    %s22 = sphi 0, %s20
    %s32 = sphi 0, %s34
    %s35 = sphi 0, %s32
    %s36 = sphi 0, %s35
    %s52 = sphi 0, %s36
    %s56 = sphi 0, %s56
    %s58 = sphi 0, %s56
    %s59 = sphi 0, %s58
    %s73 = sphi 0, %s59
    %s81 = sphi 0, %s83
    %s84 = sphi 0, %s81
    %s85 = sphi 0, %s84
    %s101 = sphi 0, %s85
    %s109 = sphi 0, %s111
    %s112 = sphi 0, %s109
    %s113 = sphi 0, %s112
    %s129 = sphi 0, %s113
  $region4: #{_double_conv_impl.3} parent=0 // loop_header_branch
    %13 = sbr.rel (%p11) target = $region8
  $region5: #{_double_conv_impl.3} parent=0 // loop_body
    %s15 = ssub.s32 %s10, 1
    %s16 = ssub.s32 %s10, 2
    %s23 = sadd.s32 1, %s18
    %p24 = scmp.ge.s32.totalorder %s23, 2
    %s25 = scalar_select %p24, 0, %s23
    %s26 = sadd.s32 1, %s17
    %s27 = scalar_select %p24, %s26, %s17
    %p28 = scmp.ge.s32.totalorder %s27, 2
    %s29 = scalar_select %p28, 0, %s27
    %s30 = ssub.s32 %s17, %s29
    %p31 = scmp.eq.s32.totalorder %s30, 0
    %s33 = sadd.s32 %s32, 1
    %s34 = scalar_select %p31, %s32, %s33
    %p37 = pneg %p31
    %p38 = scmp.eq.s32.totalorder %s10, 3
    %p39 = por %p37, %p38
    %p40 = scmp.ne.s32.totalorder %s32, %s35
    %p41 = scmp.eq.s32.totalorder %s10, 0
    %p42 = por %p40, %p41
    %p43 = scmp.ne.s32.totalorder %s32, %s35
    %p44 = scmp.eq.s32.totalorder %s15, 3
    %p45 = por %p43, %p44
    %p46 = scmp.ne.s32.totalorder %s35, %s36
    %p47 = scmp.eq.s32.totalorder %s15, 0
    %p48 = por %p46, %p47
    %p49 = scmp.ne.s32.totalorder %s35, %s36
    %p50 = scmp.eq.s32.totalorder %s16, 3
    %p51 = por %p49, %p50
    %p53 = scmp.ne.s32.totalorder %s36, %s52
    %p54 = scmp.eq.s32.totalorder %s16, 0
    %p55 = por %p53, %p54
    %s57 = sadd.s32 %s56, 1
    %p60 = scmp.eq.s32.totalorder %s10, 3
    %p61 = scmp.ne.s32.totalorder %s56, %s58
    %p62 = scmp.eq.s32.totalorder %s10, 0
    %p63 = por %p61, %p62
    %p64 = scmp.ne.s32.totalorder %s56, %s58
    %p65 = scmp.eq.s32.totalorder %s15, 3
    %p66 = por %p64, %p65
    %p67 = scmp.ne.s32.totalorder %s58, %s59
    %p68 = scmp.eq.s32.totalorder %s15, 0
    %p69 = por %p67, %p68
    %p70 = scmp.ne.s32.totalorder %s58, %s59
    %p71 = scmp.eq.s32.totalorder %s16, 3
    %p72 = por %p70, %p71
    %p74 = scmp.ne.s32.totalorder %s59, %s73
    %p75 = scmp.eq.s32.totalorder %s16, 0
    %p76 = por %p74, %p75
    %s77 = ssub.s32 %s17, %s29
    %s78 = ssub.s32 %s18, %s25
    %s79 = sor.u32 %s77, %s78
    %p80 = scmp.eq.s32.totalorder %s79, 0
    %s82 = sadd.s32 %s81, 1
    %s83 = scalar_select %p80, %s81, %s82
    %p86 = pneg %p80
    %p87 = scmp.eq.s32.totalorder %s10, 3
    %p88 = por %p86, %p87
    %p89 = scmp.ne.s32.totalorder %s81, %s84
    %p90 = scmp.eq.s32.totalorder %s10, 0
    %p91 = por %p89, %p90
    %p92 = scmp.ne.s32.totalorder %s81, %s84
    %p93 = scmp.eq.s32.totalorder %s15, 3
    %p94 = por %p92, %p93
    %p95 = scmp.ne.s32.totalorder %s84, %s85
    %p96 = scmp.eq.s32.totalorder %s15, 0
    %p97 = por %p95, %p96
    %p98 = scmp.ne.s32.totalorder %s84, %s85
    %p99 = scmp.eq.s32.totalorder %s16, 3
    %p100 = por %p98, %p99
    %p102 = scmp.ne.s32.totalorder %s85, %s101
    %p103 = scmp.eq.s32.totalorder %s16, 0
    %p104 = por %p102, %p103
    %s105 = ssub.s32 %s17, %s29
    %s106 = ssub.s32 %s18, %s25
    %s107 = sor.u32 %s105, %s106
    %p108 = scmp.eq.s32.totalorder %s107, 0
    %s110 = sadd.s32 %s109, 1
    %s111 = scalar_select %p108, %s109, %s110
    %p114 = pneg %p108
    %p115 = scmp.eq.s32.totalorder %s10, 3
    %p116 = por %p114, %p115
    %p117 = scmp.ne.s32.totalorder %s109, %s112
    %p118 = scmp.eq.s32.totalorder %s10, 0
    %p119 = por %p117, %p118
    %p120 = scmp.ne.s32.totalorder %s109, %s112
    %p121 = scmp.eq.s32.totalorder %s15, 3
    %p122 = por %p120, %p121
    %p123 = scmp.ne.s32.totalorder %s112, %s113
    %p124 = scmp.eq.s32.totalorder %s15, 0
    %p125 = por %p123, %p124
    %p126 = scmp.ne.s32.totalorder %s112, %s113
    %p127 = scmp.eq.s32.totalorder %s16, 3
    %p128 = por %p126, %p127
    %p130 = scmp.ne.s32.totalorder %s113, %s129
    %p131 = scmp.eq.s32.totalorder %s16, 0
    %p132 = por %p130, %p131
    %p133 = scmp.le.s32.totalorder 1, %s10
    %p134 = scmp.lt.s32.totalorder %s10, 5
    %p135 = pnand %p133, %p134
    %p136 = pneg %p135
    // Predicated region
    $region9: #{_double_conv_impl.3} parent=5 // pred_check
      _
    $region10: #{_double_conv_impl.3} parent=5 // pred_check_branch
      %138 = sbr.rel (%p135) target = $region12
    $region11: #{_double_conv_impl.3} parent=5 // pred_region
      %s139 = ssub.s32 %s10, 1
      // Predicated region
      $region13: #{_double_conv_impl.3} parent=11 // pred_check
        %p140 = pneg %p69
      $region14: #{_double_conv_impl.3} parent=11 // pred_check_branch
        %142 = sbr.rel (%p140) target = $region16
      $region15: #{_double_conv_impl.3} parent=11 // pred_region
        _
      $region16: #{_double_conv_impl.3} parent=11 // pred_fallthru
        _
    $region12: #{_double_conv_impl.3} parent=5 // pred_fallthru
      _
    %p143 = scmp.lt.s32.totalorder %s10, 4
    // Predicated region
    $region17: #{_double_conv_impl.3} parent=5 // pred_check
      %p144 = pneg %p143
    $region18: #{_double_conv_impl.3} parent=5 // pred_check_branch
      %146 = sbr.rel (%p144) target = $region20
    $region19: #{_double_conv_impl.3} parent=5 // pred_region
      // Predicated region
      $region21: #{_double_conv_impl.3} parent=19 // pred_check
        %p147 = pneg %p42
      $region22: #{_double_conv_impl.3} parent=19 // pred_check_branch
        %149 = sbr.rel (%p147) target = $region24
      $region23: #{_double_conv_impl.3} parent=19 // pred_region
        %p150 = scmp.lt.s32.totalorder %s17, 1
        %s151 = scalar_select %p150, %s17, 1
        %s152 = smul.addr %s151, 32
        %s153 = smul.addr %s152, 8
        %s154 = scalar_lea.vmem %s0, %s153
      $region24: #{_double_conv_impl.3} parent=19 // pred_fallthru
        _
    $region20: #{_double_conv_impl.3} parent=5 // pred_fallthru
      _
    %p155 = scmp.le.s32.totalorder 1, %s10
    %p156 = scmp.lt.s32.totalorder %s10, 5
    %p157 = pnand %p155, %p156
    %p158 = pneg %p157
    // Predicated region
    $region25: #{_double_conv_impl.3} parent=5 // pred_check
      _
    $region26: #{_double_conv_impl.3} parent=5 // pred_check_branch
      %160 = sbr.rel (%p157) target = $region28
    $region27: #{_double_conv_impl.3} parent=5 // pred_region
      %s161 = ssub.s32 %s10, 1
      %p162 = scmp.lt.s32.totalorder %s19, 1
      %s163 = scalar_select %p162, %s19, 1
      %s164 = smul.addr %s163, 32
      %s165 = smul.addr %s164, 8
      %s166 = scalar_lea.vmem %s0, %s165
      %p167 = pneg %p48
      %p168 = pneg %p45
      %p169 = pneg %p69
      %p170 = pneg %p66
      %p171 = pneg %p97
      %p172 = pneg %p94
      %s173 = smul.u32 8, %s20
      %p174 = scmp.lt.s32.totalorder %s19, 1
      %s175 = scalar_select %p174, %s19, 1
      %p176 = scmp.lt.s32.totalorder %s173, 15
      %s177 = scalar_select %p176, %s173, 15
      %s178 = smul.addr %s177, 2
      %s179 = smul.addr %s175, 32
      %s180 = sadd.s32 %s178, %s179
      %s181 = smul.addr %s180, 8
      %s182 = scalar_lea.vmem %s2, %s181
      %p183 = pneg %p125
      %p184 = pneg %p122
      %p185 = scmp.lt.s32.totalorder %s19, 1
      %s186 = scalar_select %p185, %s19, 1
      %p187 = scmp.lt.s32.totalorder %s20, 1
      %s188 = scalar_select %p187, %s20, 1
      %s189 = smul.addr %s186, 2
      %s190 = sadd.s32 %s188, %s189
      %s191 = smul.addr %s190, 2
      %s192 = scalar_lea.vmem %s3, %s191
      %p193 = scmp.lt.s32.totalorder %s19, 1
      %s194 = scalar_select %p193, %s19, 1
      %s195 = smul.addr %s194, 32
      %s196 = smul.addr %s195, 8
      %s197 = scalar_lea.vmem %s0, %s196
      %s198 = smul.u32 8, %s20
      %p199 = scmp.lt.s32.totalorder %s19, 1
      %s200 = scalar_select %p199, %s19, 1
      %p201 = scmp.lt.s32.totalorder %s198, 15
      %s202 = scalar_select %p201, %s198, 15
      %s203 = smul.addr %s202, 2
      %s204 = smul.addr %s200, 32
      %s205 = sadd.s32 %s203, %s204
      %s206 = smul.addr %s205, 8
      %s207 = scalar_lea.vmem %s2, %s206
      %s208 = smul.u32 8, %s20
      %p209 = scmp.lt.s32.totalorder %s19, 1
      %s210 = scalar_select %p209, %s19, 1
      %p211 = scmp.lt.s32.totalorder %s20, 1
      %s212 = scalar_select %p211, %s20, 1
      %s213 = smul.addr %s210, 2
      %s214 = sadd.s32 %s212, %s213
      %s215 = smul.addr %s214, 2
      %s216 = scalar_lea.vmem %s3, %s215
      %s217 = smul.u32 %s20, 8
      %vm218 = vcmask 24576
      %219 = vst.msk [vmem:[#allocation2] sm:$0x1] %vm218, 0.0
      %220 = vst.msk [vmem:[#allocation2 + $0x18] sm:$0x1] %vm218, 0.0
      %221 = vst.msk [vmem:[#allocation2 + $0x30] sm:$0x1] %vm218, 0.0
      %222 = vst.msk [vmem:[#allocation2 + $0x48] sm:$0x1] %vm218, 0.0
      %223 = vst.msk [vmem:[#allocation2 + $0x60] sm:$0x1] %vm218, 0.0
      %224 = vst.msk [vmem:[#allocation2 + $0x78] sm:$0x1] %vm218, 0.0
      %225 = vst.msk [vmem:[#allocation2 + $0x90] sm:$0x1] %vm218, 0.0
      %226 = vst.msk [vmem:[#allocation2 + $0xa8] sm:$0x1] %vm218, 0.0
      %227 = vst.msk [vmem:[#allocation2 + $0xc0] sm:$0x1] %vm218, 0.0
      %228 = vst.msk [vmem:[#allocation2 + $0xd8] sm:$0x1] %vm218, 0.0
      %229 = vst.msk [vmem:[#allocation2 + $0x11] sm:$0x1] %vm218, 0.0
      %230 = vst.msk [vmem:[#allocation2 + $0x29] sm:$0x1] %vm218, 0.0
      %231 = vst.msk [vmem:[#allocation2 + $0x41] sm:$0x1] %vm218, 0.0
      %232 = vst.msk [vmem:[#allocation2 + $0x59] sm:$0x1] %vm218, 0.0
      %233 = vst.msk [vmem:[#allocation2 + $0x71] sm:$0x1] %vm218, 0.0
      %234 = vst.msk [vmem:[#allocation2 + $0x89] sm:$0x1] %vm218, 0.0
      %235 = vst.msk [vmem:[#allocation2 + $0xa1] sm:$0x1] %vm218, 0.0
      %236 = vst.msk [vmem:[#allocation2 + $0xb9] sm:$0x1] %vm218, 0.0
      %237 = vst.msk [vmem:[#allocation2 + $0xd1] sm:$0x1] %vm218, 0.0
      %238 = vst.msk [vmem:[#allocation2 + $0xe9] sm:$0x1] %vm218, 0.0
      %s239 = smul.u32 %s217, 16
      %s240 = scalar_lea.vmem %s197, %s239
      %v241 = vld [vmem:[%s240] sm:$0xff]
      %v242 = vld [vmem:[%s240 + $0x8] sm:$0xff]
      %v243 = vld [vmem:[%s240 + $0x10] sm:$0xff]
      %v244 = vld [vmem:[%s240 + $0x18] sm:$0xff]
      %v245 = vld [vmem:[%s240 + $0x20] sm:$0xff]
      %v246 = vld [vmem:[%s240 + $0x28] sm:$0xff]
      %v247 = vld [vmem:[%s240 + $0x30] sm:$0xff]
      %v248 = vld [vmem:[%s240 + $0x38] sm:$0xff]
      %v249 = vld [vmem:[%s240 + $0x40] sm:$0xff]
      %v250 = vld [vmem:[%s240 + $0x48] sm:$0xff]
      %v251 = vld [vmem:[%s240 + $0x50] sm:$0xff]
      %v252 = vld [vmem:[%s240 + $0x58] sm:$0xff]
      %v253 = vld [vmem:[%s240 + $0x60] sm:$0xff]
      %v254 = vld [vmem:[%s240 + $0x68] sm:$0xff]
      %v255 = vld [vmem:[%s240 + $0x70] sm:$0xff]
      %v256 = vld [vmem:[%s240 + $0x78] sm:$0xff]
      %s257 = scalar_lea.vmem [#allocation2], 24
      %vm258 = vcmask 31744
      %259 = vst.msk [vmem:[%s257 + $0x1] sm:$0xff] %vm258, %v241
      %260 = vst.msk [vmem:[%s257 + $0x9] sm:$0xff] %vm258, %v242
      %261 = vst.msk [vmem:[%s257 + $0x19] sm:$0xff] %vm258, %v243
      %262 = vst.msk [vmem:[%s257 + $0x21] sm:$0xff] %vm258, %v244
      %263 = vst.msk [vmem:[%s257 + $0x31] sm:$0xff] %vm258, %v245
      %264 = vst.msk [vmem:[%s257 + $0x39] sm:$0xff] %vm258, %v246
      %265 = vst.msk [vmem:[%s257 + $0x49] sm:$0xff] %vm258, %v247
      %266 = vst.msk [vmem:[%s257 + $0x51] sm:$0xff] %vm258, %v248
      %267 = vst.msk [vmem:[%s257 + $0x61] sm:$0xff] %vm258, %v249
      %268 = vst.msk [vmem:[%s257 + $0x69] sm:$0xff] %vm258, %v250
      %269 = vst.msk [vmem:[%s257 + $0x79] sm:$0xff] %vm258, %v251
      %270 = vst.msk [vmem:[%s257 + $0x81] sm:$0xff] %vm258, %v252
      %271 = vst.msk [vmem:[%s257 + $0x91] sm:$0xff] %vm258, %v253
      %272 = vst.msk [vmem:[%s257 + $0x99] sm:$0xff] %vm258, %v254
      %273 = vst.msk [vmem:[%s257 + $0xa9] sm:$0xff] %vm258, %v255
      %274 = vst.msk [vmem:[%s257 + $0xb1] sm:$0xff] %vm258, %v256
      %p275 = scmp.eq.s32.totalorder %s20, 0
      // Predicated region
      $region29: #{_double_conv_impl.3} parent=27 // pred_check
        %p276 = pneg %p275
      $region30: #{_double_conv_impl.3} parent=27 // pred_check_branch
        %278 = sbr.rel (%p276) target = $region32
      $region31: #{_double_conv_impl.3} parent=27 // pred_region
        %279 = vst.msk [vmem:[#allocation2 + $0x1] sm:$0xff] %vm258, 0.0
        %280 = vst.msk [vmem:[#allocation2 + $0x9] sm:$0xff] %vm258, 0.0
      $region32: #{_double_conv_impl.3} parent=27 // pred_fallthru
        _
      %p281 = scmp.gt.s32.totalorder %s20, 0
      // Predicated region
      $region33: #{_double_conv_impl.3} parent=27 // pred_check
        %p282 = pneg %p281
      $region34: #{_double_conv_impl.3} parent=27 // pred_check_branch
        %284 = sbr.rel (%p282) target = $region36
      $region35: #{_double_conv_impl.3} parent=27 // pred_region
        %s285 = ssub.s32 %s217, 1
        %s286 = smul.u32 %s285, 16
        %s287 = scalar_lea.vmem %s197, %s286
        %v288 = vld [vmem:[%s287] sm:$0xff]
        %v289 = vld [vmem:[%s287 + $0x8] sm:$0xff]
        %290 = vst.msk [vmem:[#allocation2 + $0x1] sm:$0xff] %vm258, %v288
        %291 = vst.msk [vmem:[#allocation2 + $0x9] sm:$0xff] %vm258, %v289
      $region36: #{_double_conv_impl.3} parent=27 // pred_fallthru
        _
      %p292 = scmp.eq.s32.totalorder %s20, 1
      // Predicated region
      $region37: #{_double_conv_impl.3} parent=27 // pred_check
        %p293 = pneg %p292
      $region38: #{_double_conv_impl.3} parent=27 // pred_check_branch
        %295 = sbr.rel (%p293) target = $region40
      $region39: #{_double_conv_impl.3} parent=27 // pred_region
        %s296 = scalar_lea.vmem [#allocation2], 216
        %297 = vst.msk [vmem:[%s296 + $0x1] sm:$0xff] %vm258, 0.0
        %298 = vst.msk [vmem:[%s296 + $0x9] sm:$0xff] %vm258, 0.0
      $region40: #{_double_conv_impl.3} parent=27 // pred_fallthru
        _
      %p299 = scmp.lt.s32.totalorder %s20, 1
      // Predicated region
      $region41: #{_double_conv_impl.3} parent=27 // pred_check
        %p300 = pneg %p299
      $region42: #{_double_conv_impl.3} parent=27 // pred_check_branch
        %302 = sbr.rel (%p300) target = $region44
      $region43: #{_double_conv_impl.3} parent=27 // pred_region
        %s303 = sadd.s32 %s217, 8
        %s304 = smul.u32 %s303, 16
        %s305 = scalar_lea.vmem %s197, %s304
        %v306 = vld [vmem:[%s305] sm:$0xff]
        %v307 = vld [vmem:[%s305 + $0x8] sm:$0xff]
        %s308 = scalar_lea.vmem [#allocation2], 216
        %309 = vst.msk [vmem:[%s308 + $0x1] sm:$0xff] %vm258, %v306
        %310 = vst.msk [vmem:[%s308 + $0x9] sm:$0xff] %vm258, %v307
      $region44: #{_double_conv_impl.3} parent=27 // pred_fallthru
        _
      %v311 = vld [vmem:[#allocation2] sm:$0xff]
      %v312 = vld [vmem:[#allocation2 + $0x8] sm:$0xff]
      %v313 = vld [vmem:[#allocation2 + $0x18] sm:$0xff]
      %v314 = vld [vmem:[#allocation2 + $0x20] sm:$0xff]
      %v315 = vld [vmem:[#allocation2 + $0x30] sm:$0xff]
      %v316 = vld [vmem:[#allocation2 + $0x38] sm:$0xff]
      %v317 = vld [vmem:[#allocation2 + $0x48] sm:$0xff]
      %v318 = vld [vmem:[#allocation2 + $0x50] sm:$0xff]
      %v319 = vld [vmem:[#allocation2 + $0x60] sm:$0xff]
      %v320 = vld [vmem:[#allocation2 + $0x68] sm:$0xff]
      %v321 = vld [vmem:[#allocation2 + $0x78] sm:$0xff]
      %v322 = vld [vmem:[#allocation2 + $0x80] sm:$0xff]
      %v323 = vld [vmem:[#allocation2 + $0x90] sm:$0xff]
      %v324 = vld [vmem:[#allocation2 + $0x98] sm:$0xff]
      %v325 = vld [vmem:[#allocation2 + $0xa8] sm:$0xff]
      %v326 = vld [vmem:[#allocation2 + $0xb0] sm:$0xff]
      %327 = vst.msk [vmem:[#allocation3] sm:$0xff] %vm258, %v311
      %328 = vst.msk [vmem:[#allocation3 + $0x8] sm:$0xff] %vm258, %v312
      %329 = vst.msk [vmem:[#allocation3 + $0x10] sm:$0xff] %vm258, %v313
      %330 = vst.msk [vmem:[#allocation3 + $0x18] sm:$0xff] %vm258, %v314
      %331 = vst.msk [vmem:[#allocation3 + $0x20] sm:$0xff] %vm258, %v315
      %332 = vst.msk [vmem:[#allocation3 + $0x28] sm:$0xff] %vm258, %v316
      %333 = vst.msk [vmem:[#allocation3 + $0x30] sm:$0xff] %vm258, %v317
      %334 = vst.msk [vmem:[#allocation3 + $0x38] sm:$0xff] %vm258, %v318
      %335 = vst.msk [vmem:[#allocation3 + $0x40] sm:$0xff] %vm258, %v319
      %336 = vst.msk [vmem:[#allocation3 + $0x48] sm:$0xff] %vm258, %v320
      %337 = vst.msk [vmem:[#allocation3 + $0x50] sm:$0xff] %vm258, %v321
      %338 = vst.msk [vmem:[#allocation3 + $0x58] sm:$0xff] %vm258, %v322
      %339 = vst.msk [vmem:[#allocation3 + $0x60] sm:$0xff] %vm258, %v323
      %340 = vst.msk [vmem:[#allocation3 + $0x68] sm:$0xff] %vm258, %v324
      %341 = vst.msk [vmem:[#allocation3 + $0x70] sm:$0xff] %vm258, %v325
      %342 = vst.msk [vmem:[#allocation3 + $0x78] sm:$0xff] %vm258, %v326
      %v343 = vld [vmem:[#allocation2 + $0x1] sm:$0xff]
      %v344 = vld [vmem:[#allocation2 + $0x9] sm:$0xff]
      %v345 = vld [vmem:[#allocation2 + $0x19] sm:$0xff]
      %v346 = vld [vmem:[#allocation2 + $0x21] sm:$0xff]
      %v347 = vld [vmem:[#allocation2 + $0x31] sm:$0xff]
      %v348 = vld [vmem:[#allocation2 + $0x39] sm:$0xff]
      %v349 = vld [vmem:[#allocation2 + $0x49] sm:$0xff]
      %v350 = vld [vmem:[#allocation2 + $0x51] sm:$0xff]
      %v351 = vld [vmem:[#allocation2 + $0x61] sm:$0xff]
      %v352 = vld [vmem:[#allocation2 + $0x69] sm:$0xff]
      %v353 = vld [vmem:[#allocation2 + $0x79] sm:$0xff]
      %v354 = vld [vmem:[#allocation2 + $0x81] sm:$0xff]
      %v355 = vld [vmem:[#allocation2 + $0x91] sm:$0xff]
      %v356 = vld [vmem:[#allocation2 + $0x99] sm:$0xff]
      %v357 = vld [vmem:[#allocation2 + $0xa9] sm:$0xff]
      %v358 = vld [vmem:[#allocation2 + $0xb1] sm:$0xff]
      %375 = vrot.lane.b32.xlu0 %v343, 4
      %v376 = vpop.permute.xlu0 %375
      %377 = vrot.lane.b32.xlu0 %v344, 4
      %v378 = vpop.permute.xlu0 %377
      %379 = vrot.lane.b32.xlu0 %v345, 4
      %v380 = vpop.permute.xlu0 %379
      %381 = vrot.lane.b32.xlu0 %v346, 4
      %v382 = vpop.permute.xlu0 %381
      %383 = vrot.lane.b32.xlu0 %v347, 4
      %v384 = vpop.permute.xlu0 %383
      %385 = vrot.lane.b32.xlu0 %v348, 4
      %v386 = vpop.permute.xlu0 %385
      %387 = vrot.lane.b32.xlu0 %v349, 4
      %v388 = vpop.permute.xlu0 %387
      %389 = vrot.lane.b32.xlu0 %v350, 4
      %v390 = vpop.permute.xlu0 %389
      %391 = vrot.lane.b32.xlu0 %v351, 4
      %v392 = vpop.permute.xlu0 %391
      %393 = vrot.lane.b32.xlu0 %v352, 4
      %v394 = vpop.permute.xlu0 %393
      %395 = vrot.lane.b32.xlu0 %v353, 4
      %v396 = vpop.permute.xlu0 %395
      %397 = vrot.lane.b32.xlu0 %v354, 4
      %v398 = vpop.permute.xlu0 %397
      %399 = vrot.lane.b32.xlu0 %v355, 4
      %v400 = vpop.permute.xlu0 %399
      %401 = vrot.lane.b32.xlu0 %v356, 4
      %v402 = vpop.permute.xlu0 %401
      %403 = vrot.lane.b32.xlu0 %v357, 4
      %v404 = vpop.permute.xlu0 %403
      %405 = vrot.lane.b32.xlu0 %v358, 4
      %v406 = vpop.permute.xlu0 %405
      %vm423 = vcmask 64544
      %424 = vst.msk [vmem:[#allocation3] sm:$0xff] %vm423, %v376
      %425 = vst.msk [vmem:[#allocation3 + $0x8] sm:$0xff] %vm423, %v378
      %426 = vst.msk [vmem:[#allocation3 + $0x10] sm:$0xff] %vm423, %v380
      %427 = vst.msk [vmem:[#allocation3 + $0x18] sm:$0xff] %vm423, %v382
      %428 = vst.msk [vmem:[#allocation3 + $0x20] sm:$0xff] %vm423, %v384
      %429 = vst.msk [vmem:[#allocation3 + $0x28] sm:$0xff] %vm423, %v386
      %430 = vst.msk [vmem:[#allocation3 + $0x30] sm:$0xff] %vm423, %v388
      %431 = vst.msk [vmem:[#allocation3 + $0x38] sm:$0xff] %vm423, %v390
      %432 = vst.msk [vmem:[#allocation3 + $0x40] sm:$0xff] %vm423, %v392
      %433 = vst.msk [vmem:[#allocation3 + $0x48] sm:$0xff] %vm423, %v394
      %434 = vst.msk [vmem:[#allocation3 + $0x50] sm:$0xff] %vm423, %v396
      %435 = vst.msk [vmem:[#allocation3 + $0x58] sm:$0xff] %vm423, %v398
      %436 = vst.msk [vmem:[#allocation3 + $0x60] sm:$0xff] %vm423, %v400
      %437 = vst.msk [vmem:[#allocation3 + $0x68] sm:$0xff] %vm423, %v402
      %438 = vst.msk [vmem:[#allocation3 + $0x70] sm:$0xff] %vm423, %v404
      %439 = vst.msk [vmem:[#allocation3 + $0x78] sm:$0xff] %vm423, %v406
      %v440 = vld [vmem:[#allocation2 + $0x2] sm:$0xff]
      %v441 = vld [vmem:[#allocation2 + $0xa] sm:$0xff]
      %v442 = vld [vmem:[#allocation2 + $0x1a] sm:$0xff]
      %v443 = vld [vmem:[#allocation2 + $0x22] sm:$0xff]
      %v444 = vld [vmem:[#allocation2 + $0x32] sm:$0xff]
      %v445 = vld [vmem:[#allocation2 + $0x3a] sm:$0xff]
      %v446 = vld [vmem:[#allocation2 + $0x4a] sm:$0xff]
      %v447 = vld [vmem:[#allocation2 + $0x52] sm:$0xff]
      %v448 = vld [vmem:[#allocation2 + $0x62] sm:$0xff]
      %v449 = vld [vmem:[#allocation2 + $0x6a] sm:$0xff]
      %v450 = vld [vmem:[#allocation2 + $0x7a] sm:$0xff]
      %v451 = vld [vmem:[#allocation2 + $0x82] sm:$0xff]
      %v452 = vld [vmem:[#allocation2 + $0x92] sm:$0xff]
      %v453 = vld [vmem:[#allocation2 + $0x9a] sm:$0xff]
      %v454 = vld [vmem:[#allocation2 + $0xaa] sm:$0xff]
      %v455 = vld [vmem:[#allocation2 + $0xb2] sm:$0xff]
      %472 = vrot.lane.b32.xlu0 %v440, 8
      %v473 = vpop.permute.xlu0 %472
      %474 = vrot.lane.b32.xlu0 %v441, 8
      %v475 = vpop.permute.xlu0 %474
      %476 = vrot.lane.b32.xlu0 %v442, 8
      %v477 = vpop.permute.xlu0 %476
      %478 = vrot.lane.b32.xlu0 %v443, 8
      %v479 = vpop.permute.xlu0 %478
      %480 = vrot.lane.b32.xlu0 %v444, 8
      %v481 = vpop.permute.xlu0 %480
      %482 = vrot.lane.b32.xlu0 %v445, 8
      %v483 = vpop.permute.xlu0 %482
      %484 = vrot.lane.b32.xlu0 %v446, 8
      %v485 = vpop.permute.xlu0 %484
      %486 = vrot.lane.b32.xlu0 %v447, 8
      %v487 = vpop.permute.xlu0 %486
      %488 = vrot.lane.b32.xlu0 %v448, 8
      %v489 = vpop.permute.xlu0 %488
      %490 = vrot.lane.b32.xlu0 %v449, 8
      %v491 = vpop.permute.xlu0 %490
      %492 = vrot.lane.b32.xlu0 %v450, 8
      %v493 = vpop.permute.xlu0 %492
      %494 = vrot.lane.b32.xlu0 %v451, 8
      %v495 = vpop.permute.xlu0 %494
      %496 = vrot.lane.b32.xlu0 %v452, 8
      %v497 = vpop.permute.xlu0 %496
      %498 = vrot.lane.b32.xlu0 %v453, 8
      %v499 = vpop.permute.xlu0 %498
      %500 = vrot.lane.b32.xlu0 %v454, 8
      %v501 = vpop.permute.xlu0 %500
      %502 = vrot.lane.b32.xlu0 %v455, 8
      %v503 = vpop.permute.xlu0 %502
      %vm520 = vcmask 97344
      %521 = vst.msk [vmem:[#allocation3] sm:$0xff] %vm520, %v473
      %522 = vst.msk [vmem:[#allocation3 + $0x8] sm:$0xff] %vm520, %v475
      %523 = vst.msk [vmem:[#allocation3 + $0x10] sm:$0xff] %vm520, %v477
      %524 = vst.msk [vmem:[#allocation3 + $0x18] sm:$0xff] %vm520, %v479
      %525 = vst.msk [vmem:[#allocation3 + $0x20] sm:$0xff] %vm520, %v481
      %526 = vst.msk [vmem:[#allocation3 + $0x28] sm:$0xff] %vm520, %v483
      %527 = vst.msk [vmem:[#allocation3 + $0x30] sm:$0xff] %vm520, %v485
      %528 = vst.msk [vmem:[#allocation3 + $0x38] sm:$0xff] %vm520, %v487
      %529 = vst.msk [vmem:[#allocation3 + $0x40] sm:$0xff] %vm520, %v489
      %530 = vst.msk [vmem:[#allocation3 + $0x48] sm:$0xff] %vm520, %v491
      %531 = vst.msk [vmem:[#allocation3 + $0x50] sm:$0xff] %vm520, %v493
      %532 = vst.msk [vmem:[#allocation3 + $0x58] sm:$0xff] %vm520, %v495
      %533 = vst.msk [vmem:[#allocation3 + $0x60] sm:$0xff] %vm520, %v497
      %534 = vst.msk [vmem:[#allocation3 + $0x68] sm:$0xff] %vm520, %v499
      %535 = vst.msk [vmem:[#allocation3 + $0x70] sm:$0xff] %vm520, %v501
      %536 = vst.msk [vmem:[#allocation3 + $0x78] sm:$0xff] %vm520, %v503
      %v537 = vld [vmem:[#allocation3] sm:$0xff]
      %v538 = vld [vmem:[#allocation3 + $0x8] sm:$0xff]
      %v539 = vld [vmem:[#allocation3 + $0x10] sm:$0xff]
      %v540 = vld [vmem:[#allocation3 + $0x18] sm:$0xff]
      %v541 = vld [vmem:[#allocation3 + $0x20] sm:$0xff]
      %v542 = vld [vmem:[#allocation3 + $0x28] sm:$0xff]
      %v543 = vld [vmem:[#allocation3 + $0x30] sm:$0xff]
      %v544 = vld [vmem:[#allocation3 + $0x38] sm:$0xff]
      %v545 = vld [vmem:[#allocation3 + $0x40] sm:$0xff]
      %v546 = vld [vmem:[#allocation3 + $0x48] sm:$0xff]
      %v547 = vld [vmem:[#allocation3 + $0x50] sm:$0xff]
      %v548 = vld [vmem:[#allocation3 + $0x58] sm:$0xff]
      %v549 = vld [vmem:[#allocation3 + $0x60] sm:$0xff]
      %v550 = vld [vmem:[#allocation3 + $0x68] sm:$0xff]
      %v551 = vld [vmem:[#allocation3 + $0x70] sm:$0xff]
      %v552 = vld [vmem:[#allocation3 + $0x78] sm:$0xff]
      %v553 = vld [vmem:[%s1] sm:$0xff]
      %v554 = vld [vmem:[%s1 + $0x8] sm:$0xf]
      %v555 = vld [vmem:[%s257] sm:$0xff]
      %v556 = vld [vmem:[%s257 + $0x8] sm:$0xff]
      %v557 = vld [vmem:[%s257 + $0x18] sm:$0xff]
      %v558 = vld [vmem:[%s257 + $0x20] sm:$0xff]
      %v559 = vld [vmem:[%s257 + $0x30] sm:$0xff]
      %v560 = vld [vmem:[%s257 + $0x38] sm:$0xff]
      %v561 = vld [vmem:[%s257 + $0x48] sm:$0xff]
      %v562 = vld [vmem:[%s257 + $0x50] sm:$0xff]
      %v563 = vld [vmem:[%s257 + $0x60] sm:$0xff]
      %v564 = vld [vmem:[%s257 + $0x68] sm:$0xff]
      %v565 = vld [vmem:[%s257 + $0x78] sm:$0xff]
      %v566 = vld [vmem:[%s257 + $0x80] sm:$0xff]
      %v567 = vld [vmem:[%s257 + $0x90] sm:$0xff]
      %v568 = vld [vmem:[%s257 + $0x98] sm:$0xff]
      %v569 = vld [vmem:[%s257 + $0xa8] sm:$0xff]
      %v570 = vld [vmem:[%s257 + $0xb0] sm:$0xff]
      %571 = vst.msk [vmem:[#allocation3] sm:$0xff] %vm258, %v555
      %572 = vst.msk [vmem:[#allocation3 + $0x8] sm:$0xff] %vm258, %v556
      %573 = vst.msk [vmem:[#allocation3 + $0x10] sm:$0xff] %vm258, %v557
      %574 = vst.msk [vmem:[#allocation3 + $0x18] sm:$0xff] %vm258, %v558
      %575 = vst.msk [vmem:[#allocation3 + $0x20] sm:$0xff] %vm258, %v559
      %576 = vst.msk [vmem:[#allocation3 + $0x28] sm:$0xff] %vm258, %v560
      %577 = vst.msk [vmem:[#allocation3 + $0x30] sm:$0xff] %vm258, %v561
      %578 = vst.msk [vmem:[#allocation3 + $0x38] sm:$0xff] %vm258, %v562
      %579 = vst.msk [vmem:[#allocation3 + $0x40] sm:$0xff] %vm258, %v563
      %580 = vst.msk [vmem:[#allocation3 + $0x48] sm:$0xff] %vm258, %v564
      %581 = vst.msk [vmem:[#allocation3 + $0x50] sm:$0xff] %vm258, %v565
      %582 = vst.msk [vmem:[#allocation3 + $0x58] sm:$0xff] %vm258, %v566
      %583 = vst.msk [vmem:[#allocation3 + $0x60] sm:$0xff] %vm258, %v567
      %584 = vst.msk [vmem:[#allocation3 + $0x68] sm:$0xff] %vm258, %v568
      %585 = vst.msk [vmem:[#allocation3 + $0x70] sm:$0xff] %vm258, %v569
      %586 = vst.msk [vmem:[#allocation3 + $0x78] sm:$0xff] %vm258, %v570
      %v587 = vld [vmem:[%s257 + $0x1] sm:$0xff]
      %v588 = vld [vmem:[%s257 + $0x9] sm:$0xff]
      %v589 = vld [vmem:[%s257 + $0x19] sm:$0xff]
      %v590 = vld [vmem:[%s257 + $0x21] sm:$0xff]
      %v591 = vld [vmem:[%s257 + $0x31] sm:$0xff]
      %v592 = vld [vmem:[%s257 + $0x39] sm:$0xff]
      %v593 = vld [vmem:[%s257 + $0x49] sm:$0xff]
      %v594 = vld [vmem:[%s257 + $0x51] sm:$0xff]
      %v595 = vld [vmem:[%s257 + $0x61] sm:$0xff]
      %v596 = vld [vmem:[%s257 + $0x69] sm:$0xff]
      %v597 = vld [vmem:[%s257 + $0x79] sm:$0xff]
      %v598 = vld [vmem:[%s257 + $0x81] sm:$0xff]
      %v599 = vld [vmem:[%s257 + $0x91] sm:$0xff]
      %v600 = vld [vmem:[%s257 + $0x99] sm:$0xff]
      %v601 = vld [vmem:[%s257 + $0xa9] sm:$0xff]
      %v602 = vld [vmem:[%s257 + $0xb1] sm:$0xff]
      %619 = vrot.lane.b32.xlu0 %v587, 4
      %v620 = vpop.permute.xlu0 %619
      %621 = vrot.lane.b32.xlu0 %v588, 4
      %v622 = vpop.permute.xlu0 %621
      %623 = vrot.lane.b32.xlu0 %v589, 4
      %v624 = vpop.permute.xlu0 %623
      %625 = vrot.lane.b32.xlu0 %v590, 4
      %v626 = vpop.permute.xlu0 %625
      %627 = vrot.lane.b32.xlu0 %v591, 4
      %v628 = vpop.permute.xlu0 %627
      %629 = vrot.lane.b32.xlu0 %v592, 4
      %v630 = vpop.permute.xlu0 %629
      %631 = vrot.lane.b32.xlu0 %v593, 4
      %v632 = vpop.permute.xlu0 %631
      %633 = vrot.lane.b32.xlu0 %v594, 4
      %v634 = vpop.permute.xlu0 %633
      %635 = vrot.lane.b32.xlu0 %v595, 4
      %v636 = vpop.permute.xlu0 %635
      %637 = vrot.lane.b32.xlu0 %v596, 4
      %v638 = vpop.permute.xlu0 %637
      %639 = vrot.lane.b32.xlu0 %v597, 4
      %v640 = vpop.permute.xlu0 %639
      %641 = vrot.lane.b32.xlu0 %v598, 4
      %v642 = vpop.permute.xlu0 %641
      %643 = vrot.lane.b32.xlu0 %v599, 4
      %v644 = vpop.permute.xlu0 %643
      %645 = vrot.lane.b32.xlu0 %v600, 4
      %v646 = vpop.permute.xlu0 %645
      %647 = vrot.lane.b32.xlu0 %v601, 4
      %v648 = vpop.permute.xlu0 %647
      %649 = vrot.lane.b32.xlu0 %v602, 4
      %v650 = vpop.permute.xlu0 %649
      %667 = vst.msk [vmem:[#allocation3] sm:$0xff] %vm423, %v620
      %668 = vst.msk [vmem:[#allocation3 + $0x8] sm:$0xff] %vm423, %v622
      %669 = vst.msk [vmem:[#allocation3 + $0x10] sm:$0xff] %vm423, %v624
      %670 = vst.msk [vmem:[#allocation3 + $0x18] sm:$0xff] %vm423, %v626
      %671 = vst.msk [vmem:[#allocation3 + $0x20] sm:$0xff] %vm423, %v628
      %672 = vst.msk [vmem:[#allocation3 + $0x28] sm:$0xff] %vm423, %v630
      %673 = vst.msk [vmem:[#allocation3 + $0x30] sm:$0xff] %vm423, %v632
      %674 = vst.msk [vmem:[#allocation3 + $0x38] sm:$0xff] %vm423, %v634
      %675 = vst.msk [vmem:[#allocation3 + $0x40] sm:$0xff] %vm423, %v636
      %676 = vst.msk [vmem:[#allocation3 + $0x48] sm:$0xff] %vm423, %v638
      %677 = vst.msk [vmem:[#allocation3 + $0x50] sm:$0xff] %vm423, %v640
      %678 = vst.msk [vmem:[#allocation3 + $0x58] sm:$0xff] %vm423, %v642
      %679 = vst.msk [vmem:[#allocation3 + $0x60] sm:$0xff] %vm423, %v644
      %680 = vst.msk [vmem:[#allocation3 + $0x68] sm:$0xff] %vm423, %v646
      %681 = vst.msk [vmem:[#allocation3 + $0x70] sm:$0xff] %vm423, %v648
      %682 = vst.msk [vmem:[#allocation3 + $0x78] sm:$0xff] %vm423, %v650
      %v683 = vld [vmem:[%s257 + $0x2] sm:$0xff]
      %v684 = vld [vmem:[%s257 + $0xa] sm:$0xff]
      %v685 = vld [vmem:[%s257 + $0x1a] sm:$0xff]
      %v686 = vld [vmem:[%s257 + $0x22] sm:$0xff]
      %v687 = vld [vmem:[%s257 + $0x32] sm:$0xff]
      %v688 = vld [vmem:[%s257 + $0x3a] sm:$0xff]
      %v689 = vld [vmem:[%s257 + $0x4a] sm:$0xff]
      %v690 = vld [vmem:[%s257 + $0x52] sm:$0xff]
      %v691 = vld [vmem:[%s257 + $0x62] sm:$0xff]
      %v692 = vld [vmem:[%s257 + $0x6a] sm:$0xff]
      %v693 = vld [vmem:[%s257 + $0x7a] sm:$0xff]
      %v694 = vld [vmem:[%s257 + $0x82] sm:$0xff]
      %v695 = vld [vmem:[%s257 + $0x92] sm:$0xff]
      %v696 = vld [vmem:[%s257 + $0x9a] sm:$0xff]
      %v697 = vld [vmem:[%s257 + $0xaa] sm:$0xff]
      %v698 = vld [vmem:[%s257 + $0xb2] sm:$0xff]
      %715 = vrot.lane.b32.xlu0 %v683, 8
      %v716 = vpop.permute.xlu0 %715
      %717 = vrot.lane.b32.xlu0 %v684, 8
      %v718 = vpop.permute.xlu0 %717
      %719 = vrot.lane.b32.xlu0 %v685, 8
      %v720 = vpop.permute.xlu0 %719
      %721 = vrot.lane.b32.xlu0 %v686, 8
      %v722 = vpop.permute.xlu0 %721
      %723 = vrot.lane.b32.xlu0 %v687, 8
      %v724 = vpop.permute.xlu0 %723
      %725 = vrot.lane.b32.xlu0 %v688, 8
      %v726 = vpop.permute.xlu0 %725
      %727 = vrot.lane.b32.xlu0 %v689, 8
      %v728 = vpop.permute.xlu0 %727
      %729 = vrot.lane.b32.xlu0 %v690, 8
      %v730 = vpop.permute.xlu0 %729
      %731 = vrot.lane.b32.xlu0 %v691, 8
      %v732 = vpop.permute.xlu0 %731
      %733 = vrot.lane.b32.xlu0 %v692, 8
      %v734 = vpop.permute.xlu0 %733
      %735 = vrot.lane.b32.xlu0 %v693, 8
      %v736 = vpop.permute.xlu0 %735
      %737 = vrot.lane.b32.xlu0 %v694, 8
      %v738 = vpop.permute.xlu0 %737
      %739 = vrot.lane.b32.xlu0 %v695, 8
      %v740 = vpop.permute.xlu0 %739
      %741 = vrot.lane.b32.xlu0 %v696, 8
      %v742 = vpop.permute.xlu0 %741
      %743 = vrot.lane.b32.xlu0 %v697, 8
      %v744 = vpop.permute.xlu0 %743
      %745 = vrot.lane.b32.xlu0 %v698, 8
      %v746 = vpop.permute.xlu0 %745
      %763 = vst.msk [vmem:[#allocation3] sm:$0xff] %vm520, %v716
      %764 = vst.msk [vmem:[#allocation3 + $0x8] sm:$0xff] %vm520, %v718
      %765 = vst.msk [vmem:[#allocation3 + $0x10] sm:$0xff] %vm520, %v720
      %766 = vst.msk [vmem:[#allocation3 + $0x18] sm:$0xff] %vm520, %v722
      %767 = vst.msk [vmem:[#allocation3 + $0x20] sm:$0xff] %vm520, %v724
      %768 = vst.msk [vmem:[#allocation3 + $0x28] sm:$0xff] %vm520, %v726
      %769 = vst.msk [vmem:[#allocation3 + $0x30] sm:$0xff] %vm520, %v728
      %770 = vst.msk [vmem:[#allocation3 + $0x38] sm:$0xff] %vm520, %v730
      %771 = vst.msk [vmem:[#allocation3 + $0x40] sm:$0xff] %vm520, %v732
      %772 = vst.msk [vmem:[#allocation3 + $0x48] sm:$0xff] %vm520, %v734
      %773 = vst.msk [vmem:[#allocation3 + $0x50] sm:$0xff] %vm520, %v736
      %774 = vst.msk [vmem:[#allocation3 + $0x58] sm:$0xff] %vm520, %v738
      %775 = vst.msk [vmem:[#allocation3 + $0x60] sm:$0xff] %vm520, %v740
      %776 = vst.msk [vmem:[#allocation3 + $0x68] sm:$0xff] %vm520, %v742
      %777 = vst.msk [vmem:[#allocation3 + $0x70] sm:$0xff] %vm520, %v744
      %778 = vst.msk [vmem:[#allocation3 + $0x78] sm:$0xff] %vm520, %v746
      %v779 = vld [vmem:[#allocation3] sm:$0xff]
      %v780 = vld [vmem:[#allocation3 + $0x8] sm:$0xff]
      %v781 = vld [vmem:[#allocation3 + $0x10] sm:$0xff]
      %v782 = vld [vmem:[#allocation3 + $0x18] sm:$0xff]
      %v783 = vld [vmem:[#allocation3 + $0x20] sm:$0xff]
      %v784 = vld [vmem:[#allocation3 + $0x28] sm:$0xff]
      %v785 = vld [vmem:[#allocation3 + $0x30] sm:$0xff]
      %v786 = vld [vmem:[#allocation3 + $0x38] sm:$0xff]
      %v787 = vld [vmem:[#allocation3 + $0x40] sm:$0xff]
      %v788 = vld [vmem:[#allocation3 + $0x48] sm:$0xff]
      %v789 = vld [vmem:[#allocation3 + $0x50] sm:$0xff]
      %v790 = vld [vmem:[#allocation3 + $0x58] sm:$0xff]
      %v791 = vld [vmem:[#allocation3 + $0x60] sm:$0xff]
      %v792 = vld [vmem:[#allocation3 + $0x68] sm:$0xff]
      %v793 = vld [vmem:[#allocation3 + $0x70] sm:$0xff]
      %v794 = vld [vmem:[#allocation3 + $0x78] sm:$0xff]
      %s795 = scalar_lea.vmem %s1, 16
      %v796 = vld [vmem:[%s795] sm:$0xff]
      %v797 = vld [vmem:[%s795 + $0x8] sm:$0xf]
      %vm798 = vcmask 97280
      %v800 = vsel %vm798, %v779, 0
      %v803 = vsel %vm798, %v780, 0
      %v806 = vsel %vm798, %v781, 0
      %v809 = vsel %vm798, %v782, 0
      %v812 = vsel %vm798, %v783, 0
      %v815 = vsel %vm798, %v784, 0
      %v818 = vsel %vm798, %v785, 0
      %v821 = vsel %vm798, %v786, 0
      %v824 = vsel %vm798, %v787, 0
      %v827 = vsel %vm798, %v788, 0
      %v830 = vsel %vm798, %v789, 0
      %v833 = vsel %vm798, %v790, 0
      %v836 = vsel %vm798, %v791, 0
      %v839 = vsel %vm798, %v792, 0
      %v842 = vsel %vm798, %v793, 0
      %v845 = vsel %vm798, %v794, 0
      %vm847 = vcmask 1043456
      %v849 = vsel %vm847, %v797, 0
      %851 = vmatpush.msra.mxu0 0.0
      %852 = vmatpush.msra.mxu0 0.0
      %853 = vmatpush.msra.mxu0 0.0
      %854 = vmatpush.msra.mxu0 0.0
      %855 = vmatpush.msra.mxu0 0.0
      %856 = vmatpush.msra.mxu0 0.0
      %857 = vmatpush.msra.mxu0 0.0
      %858 = vmatpush.msra.mxu0 0.0
      %859 = vmatpush.msra.mxu0 0.0
      %860 = vmatpush.msra.mxu0 0.0
      %861 = vmatpush.msra.mxu0 0.0
      %862 = vmatpush.msra.mxu0 0.0
      %863 = vmatpush.msra.mxu0 0.0
      %864 = vmatpush.msra.mxu0 0.0
      %865 = vmatpush.msra.mxu0 %v849
      %866 = vmatpush.msra.mxu0 %v796
      %867 = vmatmul.f32.gmra.mxu0 %v800
      %v868 = vpop.f32.mrf.mxu0
      %v869 = vadd.f32 0.0, %v868
      %870 = vmatmul.f32.gmra.mxu0 %v803
      %v871 = vpop.f32.mrf.mxu0
      %v872 = vadd.f32 0.0, %v871
      %873 = vmatmul.f32.gmra.mxu0 %v806
      %v874 = vpop.f32.mrf.mxu0
      %v875 = vadd.f32 0.0, %v874
      %876 = vmatmul.f32.gmra.mxu0 %v809
      %v877 = vpop.f32.mrf.mxu0
      %v878 = vadd.f32 0.0, %v877
      %879 = vmatmul.f32.gmra.mxu0 %v812
      %v880 = vpop.f32.mrf.mxu0
      %v881 = vadd.f32 0.0, %v880
      %882 = vmatmul.f32.gmra.mxu0 %v815
      %v883 = vpop.f32.mrf.mxu0
      %v884 = vadd.f32 0.0, %v883
      %885 = vmatmul.f32.gmra.mxu0 %v818
      %v886 = vpop.f32.mrf.mxu0
      %v887 = vadd.f32 0.0, %v886
      %888 = vmatmul.f32.gmra.mxu0 %v821
      %v889 = vpop.f32.mrf.mxu0
      %v890 = vadd.f32 0.0, %v889
      %891 = vmatmul.f32.gmra.mxu0 %v824
      %v892 = vpop.f32.mrf.mxu0
      %v893 = vadd.f32 0.0, %v892
      %894 = vmatmul.f32.gmra.mxu0 %v827
      %v895 = vpop.f32.mrf.mxu0
      %v896 = vadd.f32 0.0, %v895
      %897 = vmatmul.f32.gmra.mxu0 %v830
      %v898 = vpop.f32.mrf.mxu0
      %v899 = vadd.f32 0.0, %v898
      %900 = vmatmul.f32.gmra.mxu0 %v833
      %v901 = vpop.f32.mrf.mxu0
      %v902 = vadd.f32 0.0, %v901
      %903 = vmatmul.f32.gmra.mxu0 %v836
      %v904 = vpop.f32.mrf.mxu0
      %v905 = vadd.f32 0.0, %v904
      %906 = vmatmul.f32.gmra.mxu0 %v839
      %v907 = vpop.f32.mrf.mxu0
      %v908 = vadd.f32 0.0, %v907
      %909 = vmatmul.f32.gmra.mxu0 %v842
      %v910 = vpop.f32.mrf.mxu0
      %v911 = vadd.f32 0.0, %v910
      %912 = vmatmul.f32.gmra.mxu0 %v845
      %v913 = vpop.f32.mrf.mxu0
      %v914 = vadd.f32 0.0, %v913
      %915 = vdwg.mxu0
      %v917 = vsel %vm798, %v537, 0
      %v920 = vsel %vm798, %v538, 0
      %v923 = vsel %vm798, %v539, 0
      %v926 = vsel %vm798, %v540, 0
      %v929 = vsel %vm798, %v541, 0
      %v932 = vsel %vm798, %v542, 0
      %v935 = vsel %vm798, %v543, 0
      %v938 = vsel %vm798, %v544, 0
      %v941 = vsel %vm798, %v545, 0
      %v944 = vsel %vm798, %v546, 0
      %v947 = vsel %vm798, %v547, 0
      %v950 = vsel %vm798, %v548, 0
      %v953 = vsel %vm798, %v549, 0
      %v956 = vsel %vm798, %v550, 0
      %v959 = vsel %vm798, %v551, 0
      %v962 = vsel %vm798, %v552, 0
      %v965 = vsel %vm847, %v554, 0
      %967 = vmatpush.msra.mxu0 0.0
      %968 = vmatpush.msra.mxu0 0.0
      %969 = vmatpush.msra.mxu0 0.0
      %970 = vmatpush.msra.mxu0 0.0
      %971 = vmatpush.msra.mxu0 0.0
      %972 = vmatpush.msra.mxu0 0.0
      %973 = vmatpush.msra.mxu0 0.0
      %974 = vmatpush.msra.mxu0 0.0
      %975 = vmatpush.msra.mxu0 0.0
      %976 = vmatpush.msra.mxu0 0.0
      %977 = vmatpush.msra.mxu0 0.0
      %978 = vmatpush.msra.mxu0 0.0
      %979 = vmatpush.msra.mxu0 0.0
      %980 = vmatpush.msra.mxu0 0.0
      %981 = vmatpush.msra.mxu0 %v965
      %982 = vmatpush.msra.mxu0 %v553
      %983 = vmatmul.f32.gmra.mxu0 %v917
      %v984 = vpop.f32.mrf.mxu0
      %v985 = vadd.f32 %v869, %v984
      %986 = vmatmul.f32.gmra.mxu0 %v920
      %v987 = vpop.f32.mrf.mxu0
      %v988 = vadd.f32 %v872, %v987
      %989 = vmatmul.f32.gmra.mxu0 %v923
      %v990 = vpop.f32.mrf.mxu0
      %v991 = vadd.f32 %v875, %v990
      %992 = vmatmul.f32.gmra.mxu0 %v926
      %v993 = vpop.f32.mrf.mxu0
      %v994 = vadd.f32 %v878, %v993
      %995 = vmatmul.f32.gmra.mxu0 %v929
      %v996 = vpop.f32.mrf.mxu0
      %v997 = vadd.f32 %v881, %v996
      %998 = vmatmul.f32.gmra.mxu0 %v932
      %v999 = vpop.f32.mrf.mxu0
      %v1000 = vadd.f32 %v884, %v999
      %1001 = vmatmul.f32.gmra.mxu0 %v935
      %v1002 = vpop.f32.mrf.mxu0
      %v1003 = vadd.f32 %v887, %v1002
      %1004 = vmatmul.f32.gmra.mxu0 %v938
      %v1005 = vpop.f32.mrf.mxu0
      %v1006 = vadd.f32 %v890, %v1005
      %1007 = vmatmul.f32.gmra.mxu0 %v941
      %v1008 = vpop.f32.mrf.mxu0
      %v1009 = vadd.f32 %v893, %v1008
      %1010 = vmatmul.f32.gmra.mxu0 %v944
      %v1011 = vpop.f32.mrf.mxu0
      %v1012 = vadd.f32 %v896, %v1011
      %1013 = vmatmul.f32.gmra.mxu0 %v947
      %v1014 = vpop.f32.mrf.mxu0
      %v1015 = vadd.f32 %v899, %v1014
      %1016 = vmatmul.f32.gmra.mxu0 %v950
      %v1017 = vpop.f32.mrf.mxu0
      %v1018 = vadd.f32 %v902, %v1017
      %1019 = vmatmul.f32.gmra.mxu0 %v953
      %v1020 = vpop.f32.mrf.mxu0
      %v1021 = vadd.f32 %v905, %v1020
      %1022 = vmatmul.f32.gmra.mxu0 %v956
      %v1023 = vpop.f32.mrf.mxu0
      %v1024 = vadd.f32 %v908, %v1023
      %1025 = vmatmul.f32.gmra.mxu0 %v959
      %v1026 = vpop.f32.mrf.mxu0
      %v1027 = vadd.f32 %v911, %v1026
      %1028 = vmatmul.f32.gmra.mxu0 %v962
      %v1029 = vpop.f32.mrf.mxu0
      %v1030 = vadd.f32 %v914, %v1029
      %1031 = vdwg.mxu0
      %s1032 = scalar_lea.vmem [#allocation2], 48
      %v1033 = vld [vmem:[%s1032] sm:$0xff]
      %v1034 = vld [vmem:[%s1032 + $0x8] sm:$0xff]
      %v1035 = vld [vmem:[%s1032 + $0x18] sm:$0xff]
      %v1036 = vld [vmem:[%s1032 + $0x20] sm:$0xff]
      %v1037 = vld [vmem:[%s1032 + $0x30] sm:$0xff]
      %v1038 = vld [vmem:[%s1032 + $0x38] sm:$0xff]
      %v1039 = vld [vmem:[%s1032 + $0x48] sm:$0xff]
      %v1040 = vld [vmem:[%s1032 + $0x50] sm:$0xff]
      %v1041 = vld [vmem:[%s1032 + $0x60] sm:$0xff]
      %v1042 = vld [vmem:[%s1032 + $0x68] sm:$0xff]
      %v1043 = vld [vmem:[%s1032 + $0x78] sm:$0xff]
      %v1044 = vld [vmem:[%s1032 + $0x80] sm:$0xff]
      %v1045 = vld [vmem:[%s1032 + $0x90] sm:$0xff]
      %v1046 = vld [vmem:[%s1032 + $0x98] sm:$0xff]
      %v1047 = vld [vmem:[%s1032 + $0xa8] sm:$0xff]
      %v1048 = vld [vmem:[%s1032 + $0xb0] sm:$0xff]
      %1049 = vst.msk [vmem:[#allocation3] sm:$0xff] %vm258, %v1033
      %1050 = vst.msk [vmem:[#allocation3 + $0x8] sm:$0xff] %vm258, %v1034
      %1051 = vst.msk [vmem:[#allocation3 + $0x10] sm:$0xff] %vm258, %v1035
      %1052 = vst.msk [vmem:[#allocation3 + $0x18] sm:$0xff] %vm258, %v1036
      %1053 = vst.msk [vmem:[#allocation3 + $0x20] sm:$0xff] %vm258, %v1037
      %1054 = vst.msk [vmem:[#allocation3 + $0x28] sm:$0xff] %vm258, %v1038
      %1055 = vst.msk [vmem:[#allocation3 + $0x30] sm:$0xff] %vm258, %v1039
      %1056 = vst.msk [vmem:[#allocation3 + $0x38] sm:$0xff] %vm258, %v1040
      %1057 = vst.msk [vmem:[#allocation3 + $0x40] sm:$0xff] %vm258, %v1041
      %1058 = vst.msk [vmem:[#allocation3 + $0x48] sm:$0xff] %vm258, %v1042
      %1059 = vst.msk [vmem:[#allocation3 + $0x50] sm:$0xff] %vm258, %v1043
      %1060 = vst.msk [vmem:[#allocation3 + $0x58] sm:$0xff] %vm258, %v1044
      %1061 = vst.msk [vmem:[#allocation3 + $0x60] sm:$0xff] %vm258, %v1045
      %1062 = vst.msk [vmem:[#allocation3 + $0x68] sm:$0xff] %vm258, %v1046
      %1063 = vst.msk [vmem:[#allocation3 + $0x70] sm:$0xff] %vm258, %v1047
      %1064 = vst.msk [vmem:[#allocation3 + $0x78] sm:$0xff] %vm258, %v1048
      %v1065 = vld [vmem:[%s1032 + $0x1] sm:$0xff]
      %v1066 = vld [vmem:[%s1032 + $0x9] sm:$0xff]
      %v1067 = vld [vmem:[%s1032 + $0x19] sm:$0xff]
      %v1068 = vld [vmem:[%s1032 + $0x21] sm:$0xff]
      %v1069 = vld [vmem:[%s1032 + $0x31] sm:$0xff]
      %v1070 = vld [vmem:[%s1032 + $0x39] sm:$0xff]
      %v1071 = vld [vmem:[%s1032 + $0x49] sm:$0xff]
      %v1072 = vld [vmem:[%s1032 + $0x51] sm:$0xff]
      %v1073 = vld [vmem:[%s1032 + $0x61] sm:$0xff]
      %v1074 = vld [vmem:[%s1032 + $0x69] sm:$0xff]
      %v1075 = vld [vmem:[%s1032 + $0x79] sm:$0xff]
      %v1076 = vld [vmem:[%s1032 + $0x81] sm:$0xff]
      %v1077 = vld [vmem:[%s1032 + $0x91] sm:$0xff]
      %v1078 = vld [vmem:[%s1032 + $0x99] sm:$0xff]
      %v1079 = vld [vmem:[%s1032 + $0xa9] sm:$0xff]
      %v1080 = vld [vmem:[%s1032 + $0xb1] sm:$0xff]
      %1097 = vrot.lane.b32.xlu0 %v1065, 4
      %v1098 = vpop.permute.xlu0 %1097
      %1099 = vrot.lane.b32.xlu0 %v1066, 4
      %v1100 = vpop.permute.xlu0 %1099
      %1101 = vrot.lane.b32.xlu0 %v1067, 4
      %v1102 = vpop.permute.xlu0 %1101
      %1103 = vrot.lane.b32.xlu0 %v1068, 4
      %v1104 = vpop.permute.xlu0 %1103
      %1105 = vrot.lane.b32.xlu0 %v1069, 4
      %v1106 = vpop.permute.xlu0 %1105
      %1107 = vrot.lane.b32.xlu0 %v1070, 4
      %v1108 = vpop.permute.xlu0 %1107
      %1109 = vrot.lane.b32.xlu0 %v1071, 4
      %v1110 = vpop.permute.xlu0 %1109
      %1111 = vrot.lane.b32.xlu0 %v1072, 4
      %v1112 = vpop.permute.xlu0 %1111
      %1113 = vrot.lane.b32.xlu0 %v1073, 4
      %v1114 = vpop.permute.xlu0 %1113
      %1115 = vrot.lane.b32.xlu0 %v1074, 4
      %v1116 = vpop.permute.xlu0 %1115
      %1117 = vrot.lane.b32.xlu0 %v1075, 4
      %v1118 = vpop.permute.xlu0 %1117
      %1119 = vrot.lane.b32.xlu0 %v1076, 4
      %v1120 = vpop.permute.xlu0 %1119
      %1121 = vrot.lane.b32.xlu0 %v1077, 4
      %v1122 = vpop.permute.xlu0 %1121
      %1123 = vrot.lane.b32.xlu0 %v1078, 4
      %v1124 = vpop.permute.xlu0 %1123
      %1125 = vrot.lane.b32.xlu0 %v1079, 4
      %v1126 = vpop.permute.xlu0 %1125
      %1127 = vrot.lane.b32.xlu0 %v1080, 4
      %v1128 = vpop.permute.xlu0 %1127
      %1145 = vst.msk [vmem:[#allocation3] sm:$0xff] %vm423, %v1098
      %1146 = vst.msk [vmem:[#allocation3 + $0x8] sm:$0xff] %vm423, %v1100
      %1147 = vst.msk [vmem:[#allocation3 + $0x10] sm:$0xff] %vm423, %v1102
      %1148 = vst.msk [vmem:[#allocation3 + $0x18] sm:$0xff] %vm423, %v1104
      %1149 = vst.msk [vmem:[#allocation3 + $0x20] sm:$0xff] %vm423, %v1106
      %1150 = vst.msk [vmem:[#allocation3 + $0x28] sm:$0xff] %vm423, %v1108
      %1151 = vst.msk [vmem:[#allocation3 + $0x30] sm:$0xff] %vm423, %v1110
      %1152 = vst.msk [vmem:[#allocation3 + $0x38] sm:$0xff] %vm423, %v1112
      %1153 = vst.msk [vmem:[#allocation3 + $0x40] sm:$0xff] %vm423, %v1114
      %1154 = vst.msk [vmem:[#allocation3 + $0x48] sm:$0xff] %vm423, %v1116
      %1155 = vst.msk [vmem:[#allocation3 + $0x50] sm:$0xff] %vm423, %v1118
      %1156 = vst.msk [vmem:[#allocation3 + $0x58] sm:$0xff] %vm423, %v1120
      %1157 = vst.msk [vmem:[#allocation3 + $0x60] sm:$0xff] %vm423, %v1122
      %1158 = vst.msk [vmem:[#allocation3 + $0x68] sm:$0xff] %vm423, %v1124
      %1159 = vst.msk [vmem:[#allocation3 + $0x70] sm:$0xff] %vm423, %v1126
      %1160 = vst.msk [vmem:[#allocation3 + $0x78] sm:$0xff] %vm423, %v1128
      %v1161 = vld [vmem:[%s1032 + $0x2] sm:$0xff]
      %v1162 = vld [vmem:[%s1032 + $0xa] sm:$0xff]
      %v1163 = vld [vmem:[%s1032 + $0x1a] sm:$0xff]
      %v1164 = vld [vmem:[%s1032 + $0x22] sm:$0xff]
      %v1165 = vld [vmem:[%s1032 + $0x32] sm:$0xff]
      %v1166 = vld [vmem:[%s1032 + $0x3a] sm:$0xff]
      %v1167 = vld [vmem:[%s1032 + $0x4a] sm:$0xff]
      %v1168 = vld [vmem:[%s1032 + $0x52] sm:$0xff]
      %v1169 = vld [vmem:[%s1032 + $0x62] sm:$0xff]
      %v1170 = vld [vmem:[%s1032 + $0x6a] sm:$0xff]
      %v1171 = vld [vmem:[%s1032 + $0x7a] sm:$0xff]
      %v1172 = vld [vmem:[%s1032 + $0x82] sm:$0xff]
      %v1173 = vld [vmem:[%s1032 + $0x92] sm:$0xff]
      %v1174 = vld [vmem:[%s1032 + $0x9a] sm:$0xff]
      %v1175 = vld [vmem:[%s1032 + $0xaa] sm:$0xff]
      %v1176 = vld [vmem:[%s1032 + $0xb2] sm:$0xff]
      %1193 = vrot.lane.b32.xlu0 %v1161, 8
      %v1194 = vpop.permute.xlu0 %1193
      %1195 = vrot.lane.b32.xlu0 %v1162, 8
      %v1196 = vpop.permute.xlu0 %1195
      %1197 = vrot.lane.b32.xlu0 %v1163, 8
      %v1198 = vpop.permute.xlu0 %1197
      %1199 = vrot.lane.b32.xlu0 %v1164, 8
      %v1200 = vpop.permute.xlu0 %1199
      %1201 = vrot.lane.b32.xlu0 %v1165, 8
      %v1202 = vpop.permute.xlu0 %1201
      %1203 = vrot.lane.b32.xlu0 %v1166, 8
      %v1204 = vpop.permute.xlu0 %1203
      %1205 = vrot.lane.b32.xlu0 %v1167, 8
      %v1206 = vpop.permute.xlu0 %1205
      %1207 = vrot.lane.b32.xlu0 %v1168, 8
      %v1208 = vpop.permute.xlu0 %1207
      %1209 = vrot.lane.b32.xlu0 %v1169, 8
      %v1210 = vpop.permute.xlu0 %1209
      %1211 = vrot.lane.b32.xlu0 %v1170, 8
      %v1212 = vpop.permute.xlu0 %1211
      %1213 = vrot.lane.b32.xlu0 %v1171, 8
      %v1214 = vpop.permute.xlu0 %1213
      %1215 = vrot.lane.b32.xlu0 %v1172, 8
      %v1216 = vpop.permute.xlu0 %1215
      %1217 = vrot.lane.b32.xlu0 %v1173, 8
      %v1218 = vpop.permute.xlu0 %1217
      %1219 = vrot.lane.b32.xlu0 %v1174, 8
      %v1220 = vpop.permute.xlu0 %1219
      %1221 = vrot.lane.b32.xlu0 %v1175, 8
      %v1222 = vpop.permute.xlu0 %1221
      %1223 = vrot.lane.b32.xlu0 %v1176, 8
      %v1224 = vpop.permute.xlu0 %1223
      %1241 = vst.msk [vmem:[#allocation3] sm:$0xff] %vm520, %v1194
      %1242 = vst.msk [vmem:[#allocation3 + $0x8] sm:$0xff] %vm520, %v1196
      %1243 = vst.msk [vmem:[#allocation3 + $0x10] sm:$0xff] %vm520, %v1198
      %1244 = vst.msk [vmem:[#allocation3 + $0x18] sm:$0xff] %vm520, %v1200
      %1245 = vst.msk [vmem:[#allocation3 + $0x20] sm:$0xff] %vm520, %v1202
      %1246 = vst.msk [vmem:[#allocation3 + $0x28] sm:$0xff] %vm520, %v1204
      %1247 = vst.msk [vmem:[#allocation3 + $0x30] sm:$0xff] %vm520, %v1206
      %1248 = vst.msk [vmem:[#allocation3 + $0x38] sm:$0xff] %vm520, %v1208
      %1249 = vst.msk [vmem:[#allocation3 + $0x40] sm:$0xff] %vm520, %v1210
      %1250 = vst.msk [vmem:[#allocation3 + $0x48] sm:$0xff] %vm520, %v1212
      %1251 = vst.msk [vmem:[#allocation3 + $0x50] sm:$0xff] %vm520, %v1214
      %1252 = vst.msk [vmem:[#allocation3 + $0x58] sm:$0xff] %vm520, %v1216
      %1253 = vst.msk [vmem:[#allocation3 + $0x60] sm:$0xff] %vm520, %v1218
      %1254 = vst.msk [vmem:[#allocation3 + $0x68] sm:$0xff] %vm520, %v1220
      %1255 = vst.msk [vmem:[#allocation3 + $0x70] sm:$0xff] %vm520, %v1222
      %1256 = vst.msk [vmem:[#allocation3 + $0x78] sm:$0xff] %vm520, %v1224
      %v1257 = vld [vmem:[#allocation3] sm:$0xff]
      %v1258 = vld [vmem:[#allocation3 + $0x8] sm:$0xff]
      %v1259 = vld [vmem:[#allocation3 + $0x10] sm:$0xff]
      %v1260 = vld [vmem:[#allocation3 + $0x18] sm:$0xff]
      %v1261 = vld [vmem:[#allocation3 + $0x20] sm:$0xff]
      %v1262 = vld [vmem:[#allocation3 + $0x28] sm:$0xff]
      %v1263 = vld [vmem:[#allocation3 + $0x30] sm:$0xff]
      %v1264 = vld [vmem:[#allocation3 + $0x38] sm:$0xff]
      %v1265 = vld [vmem:[#allocation3 + $0x40] sm:$0xff]
      %v1266 = vld [vmem:[#allocation3 + $0x48] sm:$0xff]
      %v1267 = vld [vmem:[#allocation3 + $0x50] sm:$0xff]
      %v1268 = vld [vmem:[#allocation3 + $0x58] sm:$0xff]
      %v1269 = vld [vmem:[#allocation3 + $0x60] sm:$0xff]
      %v1270 = vld [vmem:[#allocation3 + $0x68] sm:$0xff]
      %v1271 = vld [vmem:[#allocation3 + $0x70] sm:$0xff]
      %v1272 = vld [vmem:[#allocation3 + $0x78] sm:$0xff]
      %s1273 = scalar_lea.vmem %s1, 32
      %v1274 = vld [vmem:[%s1273] sm:$0xff]
      %v1275 = vld [vmem:[%s1273 + $0x8] sm:$0xf]
      %v1277 = vsel %vm798, %v1257, 0
      %v1280 = vsel %vm798, %v1258, 0
      %v1283 = vsel %vm798, %v1259, 0
      %v1286 = vsel %vm798, %v1260, 0
      %v1289 = vsel %vm798, %v1261, 0
      %v1292 = vsel %vm798, %v1262, 0
      %v1295 = vsel %vm798, %v1263, 0
      %v1298 = vsel %vm798, %v1264, 0
      %v1301 = vsel %vm798, %v1265, 0
      %v1304 = vsel %vm798, %v1266, 0
      %v1307 = vsel %vm798, %v1267, 0
      %v1310 = vsel %vm798, %v1268, 0
      %v1313 = vsel %vm798, %v1269, 0
      %v1316 = vsel %vm798, %v1270, 0
      %v1319 = vsel %vm798, %v1271, 0
      %v1322 = vsel %vm798, %v1272, 0
      %v1325 = vsel %vm847, %v1275, 0
      %1327 = vmatpush.msra.mxu0 0.0
      %1328 = vmatpush.msra.mxu0 0.0
      %1329 = vmatpush.msra.mxu0 0.0
      %1330 = vmatpush.msra.mxu0 0.0
      %1331 = vmatpush.msra.mxu0 0.0
      %1332 = vmatpush.msra.mxu0 0.0
      %1333 = vmatpush.msra.mxu0 0.0
      %1334 = vmatpush.msra.mxu0 0.0
      %1335 = vmatpush.msra.mxu0 0.0
      %1336 = vmatpush.msra.mxu0 0.0
      %1337 = vmatpush.msra.mxu0 0.0
      %1338 = vmatpush.msra.mxu0 0.0
      %1339 = vmatpush.msra.mxu0 0.0
      %1340 = vmatpush.msra.mxu0 0.0
      %1341 = vmatpush.msra.mxu0 %v1325
      %1342 = vmatpush.msra.mxu0 %v1274
      %1343 = vmatmul.f32.gmra.mxu0 %v1277
      %v1344 = vpop.f32.mrf.mxu0
      %v1345 = vadd.f32 0.0, %v1344
      %1346 = vmatmul.f32.gmra.mxu0 %v1280
      %v1347 = vpop.f32.mrf.mxu0
      %v1348 = vadd.f32 0.0, %v1347
      %1349 = vmatmul.f32.gmra.mxu0 %v1283
      %v1350 = vpop.f32.mrf.mxu0
      %v1351 = vadd.f32 0.0, %v1350
      %1352 = vmatmul.f32.gmra.mxu0 %v1286
      %v1353 = vpop.f32.mrf.mxu0
      %v1354 = vadd.f32 0.0, %v1353
      %1355 = vmatmul.f32.gmra.mxu0 %v1289
      %v1356 = vpop.f32.mrf.mxu0
      %v1357 = vadd.f32 0.0, %v1356
      %1358 = vmatmul.f32.gmra.mxu0 %v1292
      %v1359 = vpop.f32.mrf.mxu0
      %v1360 = vadd.f32 0.0, %v1359
      %1361 = vmatmul.f32.gmra.mxu0 %v1295
      %v1362 = vpop.f32.mrf.mxu0
      %v1363 = vadd.f32 0.0, %v1362
      %1364 = vmatmul.f32.gmra.mxu0 %v1298
      %v1365 = vpop.f32.mrf.mxu0
      %v1366 = vadd.f32 0.0, %v1365
      %1367 = vmatmul.f32.gmra.mxu0 %v1301
      %v1368 = vpop.f32.mrf.mxu0
      %v1369 = vadd.f32 0.0, %v1368
      %1370 = vmatmul.f32.gmra.mxu0 %v1304
      %v1371 = vpop.f32.mrf.mxu0
      %v1372 = vadd.f32 0.0, %v1371
      %1373 = vmatmul.f32.gmra.mxu0 %v1307
      %v1374 = vpop.f32.mrf.mxu0
      %v1375 = vadd.f32 0.0, %v1374
      %1376 = vmatmul.f32.gmra.mxu0 %v1310
      %v1377 = vpop.f32.mrf.mxu0
      %v1378 = vadd.f32 0.0, %v1377
      %1379 = vmatmul.f32.gmra.mxu0 %v1313
      %v1380 = vpop.f32.mrf.mxu0
      %v1381 = vadd.f32 0.0, %v1380
      %1382 = vmatmul.f32.gmra.mxu0 %v1316
      %v1383 = vpop.f32.mrf.mxu0
      %v1384 = vadd.f32 0.0, %v1383
      %1385 = vmatmul.f32.gmra.mxu0 %v1319
      %v1386 = vpop.f32.mrf.mxu0
      %v1387 = vadd.f32 0.0, %v1386
      %1388 = vmatmul.f32.gmra.mxu0 %v1322
      %v1389 = vpop.f32.mrf.mxu0
      %v1390 = vadd.f32 0.0, %v1389
      %1391 = vdwg.mxu0
      %v1392 = vadd.f32 %v985, %v1345
      %v1393 = vadd.f32 %v988, %v1348
      %v1394 = vadd.f32 %v991, %v1351
      %v1395 = vadd.f32 %v994, %v1354
      %v1396 = vadd.f32 %v997, %v1357
      %v1397 = vadd.f32 %v1000, %v1360
      %v1398 = vadd.f32 %v1003, %v1363
      %v1399 = vadd.f32 %v1006, %v1366
      %v1400 = vadd.f32 %v1009, %v1369
      %v1401 = vadd.f32 %v1012, %v1372
      %v1402 = vadd.f32 %v1015, %v1375
      %v1403 = vadd.f32 %v1018, %v1378
      %v1404 = vadd.f32 %v1021, %v1381
      %v1405 = vadd.f32 %v1024, %v1384
      %v1406 = vadd.f32 %v1027, %v1387
      %v1407 = vadd.f32 %v1030, %v1390
      %vm1408 = vcmask 64512
      %v1409 = vsel %vm1408, %v1392, 0.0
      %v1410 = vsel %vm1408, %v1393, 0.0
      %v1411 = vadd.f32 %v1409, %v1410
      %v1412 = vsel %vm1408, %v1394, 0.0
      %v1413 = vadd.f32 %v1411, %v1412
      %v1414 = vsel %vm1408, %v1395, 0.0
      %v1415 = vadd.f32 %v1413, %v1414
      %v1416 = vsel %vm1408, %v1396, 0.0
      %v1417 = vadd.f32 %v1415, %v1416
      %v1418 = vsel %vm1408, %v1397, 0.0
      %v1419 = vadd.f32 %v1417, %v1418
      %v1420 = vsel %vm1408, %v1398, 0.0
      %v1421 = vadd.f32 %v1419, %v1420
      %v1422 = vsel %vm1408, %v1399, 0.0
      %v1423 = vadd.f32 %v1421, %v1422
      %v1424 = vsel %vm1408, %v1400, 0.0
      %v1425 = vadd.f32 %v1423, %v1424
      %v1426 = vsel %vm1408, %v1401, 0.0
      %v1427 = vadd.f32 %v1425, %v1426
      %v1428 = vsel %vm1408, %v1402, 0.0
      %v1429 = vadd.f32 %v1427, %v1428
      %v1430 = vsel %vm1408, %v1403, 0.0
      %v1431 = vadd.f32 %v1429, %v1430
      %v1432 = vsel %vm1408, %v1404, 0.0
      %v1433 = vadd.f32 %v1431, %v1432
      %v1434 = vsel %vm1408, %v1405, 0.0
      %v1435 = vadd.f32 %v1433, %v1434
      %v1436 = vsel %vm1408, %v1406, 0.0
      %v1437 = vadd.f32 %v1435, %v1436
      %v1438 = vsel %vm1408, %v1407, 0.0
      %v1439 = vadd.f32 %v1437, %v1438
      %v1440 = vrot.slane %v1439, 4
      %v1441 = vadd.f32 %v1439, %v1440
      %v1442 = vrot.slane %v1441, 2
      %v1443 = vadd.f32 %v1441, %v1442
      %v1444 = vrot.slane %v1443, 1
      %v1445 = vadd.f32 %v1443, %v1444
      %vm1446 = vcmask 57344
      %1447 = vst.msk [vmem:[%s216] sm:$0x1] %vm1446, %v1445
      %v1448 = vmul.f32 %v1392, %v1392
      %v1449 = vmul.f32 %v1393, %v1393
      %v1450 = vmul.f32 %v1394, %v1394
      %v1451 = vmul.f32 %v1395, %v1395
      %v1452 = vmul.f32 %v1396, %v1396
      %v1453 = vmul.f32 %v1397, %v1397
      %v1454 = vmul.f32 %v1398, %v1398
      %v1455 = vmul.f32 %v1399, %v1399
      %v1456 = vmul.f32 %v1400, %v1400
      %v1457 = vmul.f32 %v1401, %v1401
      %v1458 = vmul.f32 %v1402, %v1402
      %v1459 = vmul.f32 %v1403, %v1403
      %v1460 = vmul.f32 %v1404, %v1404
      %v1461 = vmul.f32 %v1405, %v1405
      %v1462 = vmul.f32 %v1406, %v1406
      %v1463 = vmul.f32 %v1407, %v1407
      %v1464 = vsel %vm1408, %v1448, 0.0
      %v1465 = vsel %vm1408, %v1449, 0.0
      %v1466 = vadd.f32 %v1464, %v1465
      %v1467 = vsel %vm1408, %v1450, 0.0
      %v1468 = vadd.f32 %v1466, %v1467
      %v1469 = vsel %vm1408, %v1451, 0.0
      %v1470 = vadd.f32 %v1468, %v1469
      %v1471 = vsel %vm1408, %v1452, 0.0
      %v1472 = vadd.f32 %v1470, %v1471
      %v1473 = vsel %vm1408, %v1453, 0.0
      %v1474 = vadd.f32 %v1472, %v1473
      %v1475 = vsel %vm1408, %v1454, 0.0
      %v1476 = vadd.f32 %v1474, %v1475
      %v1477 = vsel %vm1408, %v1455, 0.0
      %v1478 = vadd.f32 %v1476, %v1477
      %v1479 = vsel %vm1408, %v1456, 0.0
      %v1480 = vadd.f32 %v1478, %v1479
      %v1481 = vsel %vm1408, %v1457, 0.0
      %v1482 = vadd.f32 %v1480, %v1481
      %v1483 = vsel %vm1408, %v1458, 0.0
      %v1484 = vadd.f32 %v1482, %v1483
      %v1485 = vsel %vm1408, %v1459, 0.0
      %v1486 = vadd.f32 %v1484, %v1485
      %v1487 = vsel %vm1408, %v1460, 0.0
      %v1488 = vadd.f32 %v1486, %v1487
      %v1489 = vsel %vm1408, %v1461, 0.0
      %v1490 = vadd.f32 %v1488, %v1489
      %v1491 = vsel %vm1408, %v1462, 0.0
      %v1492 = vadd.f32 %v1490, %v1491
      %v1493 = vsel %vm1408, %v1463, 0.0
      %v1494 = vadd.f32 %v1492, %v1493
      %v1495 = vrot.slane %v1494, 4
      %v1496 = vadd.f32 %v1494, %v1495
      %v1497 = vrot.slane %v1496, 2
      %v1498 = vadd.f32 %v1496, %v1497
      %v1499 = vrot.slane %v1498, 1
      %v1500 = vadd.f32 %v1498, %v1499
      %1501 = vst.msk [vmem:[%s216 + $0x1] sm:$0x1] %vm1446, %v1500
      %1502 = vst.msk [vmem:[%s207] sm:$0xff] %vm1408, %v1392
      %1503 = vst.msk [vmem:[%s207 + $0x8] sm:$0xff] %vm1408, %v1393
      %1504 = vst.msk [vmem:[%s207 + $0x10] sm:$0xff] %vm1408, %v1394
      %1505 = vst.msk [vmem:[%s207 + $0x18] sm:$0xff] %vm1408, %v1395
      %1506 = vst.msk [vmem:[%s207 + $0x20] sm:$0xff] %vm1408, %v1396
      %1507 = vst.msk [vmem:[%s207 + $0x28] sm:$0xff] %vm1408, %v1397
      %1508 = vst.msk [vmem:[%s207 + $0x30] sm:$0xff] %vm1408, %v1398
      %1509 = vst.msk [vmem:[%s207 + $0x38] sm:$0xff] %vm1408, %v1399
      %1510 = vst.msk [vmem:[%s207 + $0x40] sm:$0xff] %vm1408, %v1400
      %1511 = vst.msk [vmem:[%s207 + $0x48] sm:$0xff] %vm1408, %v1401
      %1512 = vst.msk [vmem:[%s207 + $0x50] sm:$0xff] %vm1408, %v1402
      %1513 = vst.msk [vmem:[%s207 + $0x58] sm:$0xff] %vm1408, %v1403
      %1514 = vst.msk [vmem:[%s207 + $0x60] sm:$0xff] %vm1408, %v1404
      %1515 = vst.msk [vmem:[%s207 + $0x68] sm:$0xff] %vm1408, %v1405
      %1516 = vst.msk [vmem:[%s207 + $0x70] sm:$0xff] %vm1408, %v1406
      %1517 = vst.msk [vmem:[%s207 + $0x78] sm:$0xff] %vm1408, %v1407
      %s1518 = smul.u32 8, %s20
      %p1519 = scmp.lt.s32.totalorder %s19, 1
      %s1520 = scalar_select %p1519, %s19, 1
      %p1521 = scmp.lt.s32.totalorder %s1518, 15
      %s1522 = scalar_select %p1521, %s1518, 15
      %s1523 = smul.addr %s1522, 2
      %s1524 = smul.addr %s1520, 32
      %s1525 = sadd.s32 %s1523, %s1524
      %s1526 = smul.addr %s1525, 8
      %s1527 = scalar_lea.vmem %s2, %s1526
      %p1528 = scmp.lt.s32.totalorder %s19, 1
      %s1529 = scalar_select %p1528, %s19, 1
      %p1530 = scmp.lt.s32.totalorder %s20, 1
      %s1531 = scalar_select %p1530, %s20, 1
      %s1532 = smul.addr %s1529, 2
      %s1533 = sadd.s32 %s1531, %s1532
      %s1534 = smul.addr %s1533, 2
      %s1535 = scalar_lea.vmem %s3, %s1534
      // Predicated region
      $region45: #{_double_conv_impl.3} parent=27 // pred_check
        %p1536 = pneg %p94
      $region46: #{_double_conv_impl.3} parent=27 // pred_check_branch
        %1538 = sbr.rel (%p1536) target = $region48
      $region47: #{_double_conv_impl.3} parent=27 // pred_region
        %s1539 = smul.u32 8, %s20
      $region48: #{_double_conv_impl.3} parent=27 // pred_fallthru
        _
      // Predicated region
      $region49: #{_double_conv_impl.3} parent=27 // pred_check
        %p1540 = pneg %p122
      $region50: #{_double_conv_impl.3} parent=27 // pred_check_branch
        %1542 = sbr.rel (%p1540) target = $region52
      $region51: #{_double_conv_impl.3} parent=27 // pred_region
        _
      $region52: #{_double_conv_impl.3} parent=27 // pred_fallthru
        _
    $region28: #{_double_conv_impl.3} parent=5 // pred_fallthru
      _
    %p1543 = scmp.le.s32.totalorder 2, %s10
    // Predicated region
    $region53: #{_double_conv_impl.3} parent=5 // pred_check
      %p1544 = pneg %p1543
    $region54: #{_double_conv_impl.3} parent=5 // pred_check_branch
      %1546 = sbr.rel (%p1544) target = $region56
    $region55: #{_double_conv_impl.3} parent=5 // pred_region
      %s1547 = ssub.s32 %s10, 2
      // Predicated region
      $region57: #{_double_conv_impl.3} parent=55 // pred_check
        %p1548 = pneg %p100
      $region58: #{_double_conv_impl.3} parent=55 // pred_check_branch
        %1550 = sbr.rel (%p1548) target = $region60
      $region59: #{_double_conv_impl.3} parent=55 // pred_region
        %s1551 = smul.u32 8, %s22
        %p1552 = scmp.lt.s32.totalorder %s21, 1
        %s1553 = scalar_select %p1552, %s21, 1
        %p1554 = scmp.lt.s32.totalorder %s1551, 15
        %s1555 = scalar_select %p1554, %s1551, 15
        %s1556 = smul.addr %s1555, 2
        %s1557 = smul.addr %s1553, 32
        %s1558 = sadd.s32 %s1556, %s1557
        %s1559 = smul.addr %s1558, 8
        %s1560 = scalar_lea.vmem %s2, %s1559
      $region60: #{_double_conv_impl.3} parent=55 // pred_fallthru
        _
      // Predicated region
      $region61: #{_double_conv_impl.3} parent=55 // pred_check
        %p1561 = pneg %p128
      $region62: #{_double_conv_impl.3} parent=55 // pred_check_branch
        %1563 = sbr.rel (%p1561) target = $region64
      $region63: #{_double_conv_impl.3} parent=55 // pred_region
        %p1564 = scmp.lt.s32.totalorder %s21, 1
        %s1565 = scalar_select %p1564, %s21, 1
        %p1566 = scmp.lt.s32.totalorder %s22, 1
        %s1567 = scalar_select %p1566, %s22, 1
        %s1568 = smul.addr %s1565, 2
        %s1569 = sadd.s32 %s1567, %s1568
        %s1570 = smul.addr %s1569, 2
        %s1571 = scalar_lea.vmem %s3, %s1570
      $region64: #{_double_conv_impl.3} parent=55 // pred_fallthru
        _
    $region56: #{_double_conv_impl.3} parent=5 // pred_fallthru
      _
  $region6: #{_double_conv_impl.3} parent=0 // loop_footer
    %s14 = sadd.s32 1, %s10
  $region7: #{_double_conv_impl.3} parent=0 // loop_footer_branch
    %9 = sbr.rel target = $region3
  $region8: #{_double_conv_impl.3} parent=0 // loop_exit
    _

</llo_original>
